<compile_context>
chip_gen: v7x
topology: tpu7x:2x2x1
jax: 0.10.0
libtpu: 0.0.40
codegen_flags: <defaults>
</compile_context>

<pallas_src>
import jax
import jax.numpy as jnp
from jax.experimental import pallas as pl
from jax.experimental.pallas import tpu as pltpu


def _convlstm_kernel(xh_ref, w_ref, b_ref, c_prev_ref, hc_ref):
    """One batch element: 3x3 circular conv (as 9 tap GEMMs) + LSTM gate update.

    xh_ref:     (1, H+2, W+2, C)   bf16   circularly padded [x, h_prev], NHWC
    w_ref:      (9, C, 4*hidden)   bf16   per-tap weight matrices
    b_ref:      (1, 4*hidden)      f32
    c_prev_ref: (1, H*W, hidden)   f32
    hc_ref:     (1, H*W, 2*hidden) f32    output: [h | c] along lanes
    """
    _, hp2, wp2, _ = xh_ref.shape
    H, W = hp2 - 2, wp2 - 2
    HW = H * W
    hs = c_prev_ref.shape[-1]

    # ---- conv as 9 accumulated MXU GEMMs (f32 accumulation) ------------------
    acc = jnp.zeros((HW, 4 * hs), jnp.float32)
    for ky in range(3):
        for kx in range(3):
            tap = xh_ref[0, ky:ky + H, kx:kx + W, :]          # (H, W, C) bf16
            tap = tap.reshape(HW, tap.shape[-1])              # (HW, C)
            acc = acc + jnp.dot(tap, w_ref[ky * 3 + kx],
                                preferred_element_type=jnp.float32)
    conv = acc + b_ref[...]                                   # (HW, 4*hs) f32

    # ---- gates + state update (f32) ------------------------------------------
    netin = conv[:, 0 * hs:1 * hs]
    igate = conv[:, 1 * hs:2 * hs]
    fgate = conv[:, 2 * hs:3 * hs]
    ogate = conv[:, 3 * hs:4 * hs]

    act_input = jnp.tanh(netin)
    act_igate = jax.nn.sigmoid(igate)
    act_fgate = jax.nn.sigmoid(fgate)
    act_ogate = jax.nn.sigmoid(ogate)

    c_prev = c_prev_ref[0]                                    # (HW, hs) f32
    c_curr = act_fgate * c_prev + act_igate * act_input
    h_curr = act_ogate * jnp.tanh(c_curr)

    # single lane-denser store: [h | c]  -> (HW, 2*hs)
    hc_ref[0] = jnp.concatenate([h_curr, c_curr], axis=-1)


def convlstm_cell_forward(x, h_prev, c_prev, weight, bias):
    """One ConvLSTMCell step (semantics of the PyTorch module's forward).

    x:      (B, Cin, H, W)                 f32 (NCHW, like PyTorch)
    h_prev: (B, hidden, H, W)              f32
    c_prev: (B, hidden, H, W)              f32
    weight: (4*hidden, Cin+hidden, 3, 3)   f32 (PyTorch Conv2d OIHW layout)
    bias:   (4*hidden,)                    f32
    returns (h_curr, c_curr), both (B, hidden, H, W) f32
    """
    B, Cin, H, W = x.shape
    hidden = h_prev.shape[1]
    C = Cin + hidden
    HW = H * W

    # ---- glue (once per step; hoist across timesteps for sequences) ----------
    xh = jnp.concatenate([x, h_prev], axis=1)                    # (B, C, H, W)
    xh = jnp.transpose(xh, (0, 2, 3, 1))                         # (B, H, W, C)
    xh = jnp.pad(xh, ((0, 0), (1, 1), (1, 1), (0, 0)), mode="wrap")
    xh = xh.astype(jnp.bfloat16)                                 # bf16 GEMM operand

    # (out, in, ky, kx) -> (ky, kx, in, out) -> (9, C, 4*hidden)
    w_taps = jnp.transpose(weight, (2, 3, 1, 0)).reshape(9, C, 4 * hidden)
    w_taps = w_taps.astype(jnp.bfloat16)
    b_row = bias.reshape(1, 4 * hidden).astype(jnp.float32)

    c_flat = jnp.transpose(c_prev, (0, 2, 3, 1)).reshape(B, HW, hidden)
    c_flat = c_flat.astype(jnp.float32)

    bytes_accessed = (xh.size * 2 + w_taps.size * 2 + b_row.size * 4
                      + c_flat.size * 4 + B * HW * 2 * hidden * 4)
    cost = pl.CostEstimate(
        flops=2 * B * HW * (9 * C) * (4 * hidden),
        transcendentals=5 * B * HW * hidden,
        bytes_accessed=bytes_accessed,
    )

    hc = pl.pallas_call(
        _convlstm_kernel,
        out_shape=jax.ShapeDtypeStruct((B, HW, 2 * hidden), jnp.float32),
        grid=(B,),
        in_specs=[
            pl.BlockSpec((1, H + 2, W + 2, C), lambda b: (b, 0, 0, 0)),  # xh (per batch)
            pl.BlockSpec((9, C, 4 * hidden), lambda b: (0, 0, 0)),       # weights (resident)
            pl.BlockSpec((1, 4 * hidden), lambda b: (0, 0)),             # bias
            pl.BlockSpec((1, HW, hidden), lambda b: (b, 0, 0)),          # c_prev (per batch)
        ],
        out_specs=pl.BlockSpec((1, HW, 2 * hidden), lambda b: (b, 0, 0)),
        compiler_params=pltpu.CompilerParams(
            dimension_semantics=("parallel",),      # 2x on v7x megacore; no-op v5e/v6e
            vmem_limit_bytes=32 * 1024 * 1024,      # safe on v5e/v6e/v7x scoped limits
        ),
        cost_estimate=cost,
    )(xh, w_taps, b_row, c_flat)

    h_flat = hc[..., :hidden]
    c_flat_out = hc[..., hidden:]
    h_curr = jnp.transpose(h_flat.reshape(B, H, W, hidden), (0, 3, 1, 2))
    c_curr = jnp.transpose(c_flat_out.reshape(B, H, W, hidden), (0, 3, 1, 2))
    return h_curr, c_curr


def _reference(x, h_prev, c_prev, weight, bias):
    """Pure-JAX f32 reference matching the PyTorch module exactly."""
    xh = jnp.concatenate([x, h_prev], axis=1)
    xh_pad = jnp.pad(xh, ((0, 0), (0, 0), (1, 1), (1, 1)), mode="wrap")
    conv = jax.lax.conv_general_dilated(
        xh_pad, weight, window_strides=(1, 1), padding="VALID",
        dimension_numbers=("NCHW", "OIHW", "NCHW"),
    ) + bias[None, :, None, None]
    netin, igate, fgate, ogate = jnp.split(conv, 4, axis=1)
    g = jnp.tanh(netin)
    i = jax.nn.sigmoid(igate)
    f = jax.nn.sigmoid(fgate)
    o = jax.nn.sigmoid(ogate)
    c = f * c_prev + i * g
    h = o * jnp.tanh(c)
    return h, c


if __name__ == "__main__":
    # Module hyperparameters (small, consistent with the PyTorch __init__)
    batch_size = 2
    input_size = 4
    hidden_size = 32
    height = 16
    width = 16

    key = jax.random.PRNGKey(0)
    k_x, k_w, k_b = jax.random.split(key, 3)

    # Deterministic init matching reset_parameters(): U(-std, std), std = 1/sqrt(hidden)
    std = 1.0 / jnp.sqrt(jnp.float32(hidden_size))
    w_shape = (4 * hidden_size, input_size + hidden_size, 3, 3)
    weight = jax.random.uniform(k_w, w_shape, jnp.float32, minval=-std, maxval=std)
    bias = jax.random.uniform(k_b, (4 * hidden_size,), jnp.float32, minval=-std, maxval=std)

    # Inputs; initial states h, c are zeros as in __init__
    x = jax.random.normal(k_x, (batch_size, input_size, height, width), jnp.float32)
    h0 = jnp.zeros((batch_size, hidden_size, height, width), jnp.float32)
    c0 = jnp.zeros((batch_size, hidden_size, height, width), jnp.float32)

    step = jax.jit(convlstm_cell_forward)
    h1, c1 = step(x, h0, c0, weight, bias)
    jax.block_until_ready((h1, c1))

    assert h1.shape == (batch_size, hidden_size, height, width)
    assert c1.shape == (batch_size, hidden_size, height, width)

    # Numerical check vs f32 reference (bf16 GEMM operands -> small drift allowed)
    h_ref, c_ref = _reference(x, h0, c0, weight, bias)
    assert jnp.max(jnp.abs(h1 - h_ref)) < 5e-2
    assert jnp.max(jnp.abs(c1 - c_ref)) < 5e-2

    print("KERNEL_OK")
</pallas_src>

<mosaic_0001>
module attributes {stable_mosaic.version = 11 : i64} {
  func.func @_convlstm_kernel(%arg0: i32, %arg1: memref<1x18x18x36xbf16, #tpu.memory_space<vmem>>, %arg2: memref<9x36x128xbf16, #tpu.memory_space<vmem>>, %arg3: memref<1x128xf32, #tpu.memory_space<vmem>>, %arg4: memref<1x256x32xf32, #tpu.memory_space<vmem>>, %arg5: memref<1x256x64xf32, #tpu.memory_space<vmem>>) attributes {dimension_semantics = [#tpu.dimension_semantics<parallel>], iteration_bounds = array<i64: 2>, scalar_prefetch = 0 : i64, scratch_operands = 0 : i64, tpu.core_type = #tpu.core_type<tc>, window_params = [{transform_indices = @transform_0, window_bounds = array<i64: 1, 18, 18, 36>}, {pipeline_mode = #tpu.pipeline_mode<synchronous>, transform_indices = @transform_1, window_bounds = array<i64: 9, 36, 128>}, {pipeline_mode = #tpu.pipeline_mode<synchronous>, transform_indices = @transform_2, window_bounds = array<i64: 1, 128>}, {transform_indices = @transform_3, window_bounds = array<i64: 1, 256, 32>}, {transform_indices = @transform_4, window_bounds = array<i64: 1, 256, 64>}]} {
    %cst = arith.constant 0.000000e+00 : f32
    %0 = vector.broadcast %cst : f32 to vector<256x128xf32>
    %c0 = arith.constant 0 : index
    %c0_0 = arith.constant 0 : index
    %c0_1 = arith.constant 0 : index
    %c0_2 = arith.constant 0 : index
    %1 = vector.load %arg1[%c0, %c0_0, %c0_1, %c0_2] : memref<1x18x18x36xbf16, #tpu.memory_space<vmem>>, vector<1x16x16x36xbf16>
    %2 = vector.shape_cast %1 : vector<1x16x16x36xbf16> to vector<16x16x36xbf16>
    %3 = vector.shape_cast %2 : vector<16x16x36xbf16> to vector<256x36xbf16>
    %c0_3 = arith.constant 0 : index
    %c0_4 = arith.constant 0 : index
    %c0_5 = arith.constant 0 : index
    %4 = vector.load %arg2[%c0_3, %c0_4, %c0_5] : memref<9x36x128xbf16, #tpu.memory_space<vmem>>, vector<1x36x128xbf16>
    %5 = vector.shape_cast %4 : vector<1x36x128xbf16> to vector<36x128xbf16>
    %cst_6 = arith.constant dense<0.000000e+00> : vector<256x128xf32>
    %6 = tpu.matmul %3, %5, %cst_6 {dimension_numbers = #tpu.dot_dimension_numbers<[1], [0], [0], [1], [0, 0, 1, 1], [], []>} : vector<256x36xbf16>, vector<36x128xbf16>, vector<256x128xf32> -> vector<256x128xf32>
    %7 = arith.addf %0, %6 : vector<256x128xf32>
    %c0_7 = arith.constant 0 : index
    %c0_8 = arith.constant 0 : index
    %c1 = arith.constant 1 : index
    %c0_9 = arith.constant 0 : index
    %8 = vector.load %arg1[%c0_7, %c0_8, %c1, %c0_9] : memref<1x18x18x36xbf16, #tpu.memory_space<vmem>>, vector<1x16x16x36xbf16>
    %9 = vector.shape_cast %8 : vector<1x16x16x36xbf16> to vector<16x16x36xbf16>
    %10 = vector.shape_cast %9 : vector<16x16x36xbf16> to vector<256x36xbf16>
    %c1_10 = arith.constant 1 : index
    %c0_11 = arith.constant 0 : index
    %c0_12 = arith.constant 0 : index
    %11 = vector.load %arg2[%c1_10, %c0_11, %c0_12] : memref<9x36x128xbf16, #tpu.memory_space<vmem>>, vector<1x36x128xbf16>
    %12 = vector.shape_cast %11 : vector<1x36x128xbf16> to vector<36x128xbf16>
    %cst_13 = arith.constant dense<0.000000e+00> : vector<256x128xf32>
    %13 = tpu.matmul %10, %12, %cst_13 {dimension_numbers = #tpu.dot_dimension_numbers<[1], [0], [0], [1], [0, 0, 1, 1], [], []>} : vector<256x36xbf16>, vector<36x128xbf16>, vector<256x128xf32> -> vector<256x128xf32>
    %14 = arith.addf %7, %13 : vector<256x128xf32>
    %c0_14 = arith.constant 0 : index
    %c0_15 = arith.constant 0 : index
    %c2 = arith.constant 2 : index
    %c0_16 = arith.constant 0 : index
    %15 = vector.load %arg1[%c0_14, %c0_15, %c2, %c0_16] : memref<1x18x18x36xbf16, #tpu.memory_space<vmem>>, vector<1x16x16x36xbf16>
    %16 = vector.shape_cast %15 : vector<1x16x16x36xbf16> to vector<16x16x36xbf16>
    %17 = vector.shape_cast %16 : vector<16x16x36xbf16> to vector<256x36xbf16>
    %c2_17 = arith.constant 2 : index
    %c0_18 = arith.constant 0 : index
    %c0_19 = arith.constant 0 : index
    %18 = vector.load %arg2[%c2_17, %c0_18, %c0_19] : memref<9x36x128xbf16, #tpu.memory_space<vmem>>, vector<1x36x128xbf16>
    %19 = vector.shape_cast %18 : vector<1x36x128xbf16> to vector<36x128xbf16>
    %cst_20 = arith.constant dense<0.000000e+00> : vector<256x128xf32>
    %20 = tpu.matmul %17, %19, %cst_20 {dimension_numbers = #tpu.dot_dimension_numbers<[1], [0], [0], [1], [0, 0, 1, 1], [], []>} : vector<256x36xbf16>, vector<36x128xbf16>, vector<256x128xf32> -> vector<256x128xf32>
    %21 = arith.addf %14, %20 : vector<256x128xf32>
    %c0_21 = arith.constant 0 : index
    %c1_22 = arith.constant 1 : index
    %c0_23 = arith.constant 0 : index
    %c0_24 = arith.constant 0 : index
    %22 = vector.load %arg1[%c0_21, %c1_22, %c0_23, %c0_24] : memref<1x18x18x36xbf16, #tpu.memory_space<vmem>>, vector<1x16x16x36xbf16>
    %23 = vector.shape_cast %22 : vector<1x16x16x36xbf16> to vector<16x16x36xbf16>
    %24 = vector.shape_cast %23 : vector<16x16x36xbf16> to vector<256x36xbf16>
    %c3 = arith.constant 3 : index
    %c0_25 = arith.constant 0 : index
    %c0_26 = arith.constant 0 : index
    %25 = vector.load %arg2[%c3, %c0_25, %c0_26] : memref<9x36x128xbf16, #tpu.memory_space<vmem>>, vector<1x36x128xbf16>
    %26 = vector.shape_cast %25 : vector<1x36x128xbf16> to vector<36x128xbf16>
    %cst_27 = arith.constant dense<0.000000e+00> : vector<256x128xf32>
    %27 = tpu.matmul %24, %26, %cst_27 {dimension_numbers = #tpu.dot_dimension_numbers<[1], [0], [0], [1], [0, 0, 1, 1], [], []>} : vector<256x36xbf16>, vector<36x128xbf16>, vector<256x128xf32> -> vector<256x128xf32>
    %28 = arith.addf %21, %27 : vector<256x128xf32>
    %c0_28 = arith.constant 0 : index
    %c1_29 = arith.constant 1 : index
    %c1_30 = arith.constant 1 : index
    %c0_31 = arith.constant 0 : index
    %29 = vector.load %arg1[%c0_28, %c1_29, %c1_30, %c0_31] : memref<1x18x18x36xbf16, #tpu.memory_space<vmem>>, vector<1x16x16x36xbf16>
    %30 = vector.shape_cast %29 : vector<1x16x16x36xbf16> to vector<16x16x36xbf16>
    %31 = vector.shape_cast %30 : vector<16x16x36xbf16> to vector<256x36xbf16>
    %c4 = arith.constant 4 : index
    %c0_32 = arith.constant 0 : index
    %c0_33 = arith.constant 0 : index
    %32 = vector.load %arg2[%c4, %c0_32, %c0_33] : memref<9x36x128xbf16, #tpu.memory_space<vmem>>, vector<1x36x128xbf16>
    %33 = vector.shape_cast %32 : vector<1x36x128xbf16> to vector<36x128xbf16>
    %cst_34 = arith.constant dense<0.000000e+00> : vector<256x128xf32>
    %34 = tpu.matmul %31, %33, %cst_34 {dimension_numbers = #tpu.dot_dimension_numbers<[1], [0], [0], [1], [0, 0, 1, 1], [], []>} : vector<256x36xbf16>, vector<36x128xbf16>, vector<256x128xf32> -> vector<256x128xf32>
    %35 = arith.addf %28, %34 : vector<256x128xf32>
    %c0_35 = arith.constant 0 : index
    %c1_36 = arith.constant 1 : index
    %c2_37 = arith.constant 2 : index
    %c0_38 = arith.constant 0 : index
    %36 = vector.load %arg1[%c0_35, %c1_36, %c2_37, %c0_38] : memref<1x18x18x36xbf16, #tpu.memory_space<vmem>>, vector<1x16x16x36xbf16>
    %37 = vector.shape_cast %36 : vector<1x16x16x36xbf16> to vector<16x16x36xbf16>
    %38 = vector.shape_cast %37 : vector<16x16x36xbf16> to vector<256x36xbf16>
    %c5 = arith.constant 5 : index
    %c0_39 = arith.constant 0 : index
    %c0_40 = arith.constant 0 : index
    %39 = vector.load %arg2[%c5, %c0_39, %c0_40] : memref<9x36x128xbf16, #tpu.memory_space<vmem>>, vector<1x36x128xbf16>
    %40 = vector.shape_cast %39 : vector<1x36x128xbf16> to vector<36x128xbf16>
    %cst_41 = arith.constant dense<0.000000e+00> : vector<256x128xf32>
    %41 = tpu.matmul %38, %40, %cst_41 {dimension_numbers = #tpu.dot_dimension_numbers<[1], [0], [0], [1], [0, 0, 1, 1], [], []>} : vector<256x36xbf16>, vector<36x128xbf16>, vector<256x128xf32> -> vector<256x128xf32>
    %42 = arith.addf %35, %41 : vector<256x128xf32>
    %c0_42 = arith.constant 0 : index
    %c2_43 = arith.constant 2 : index
    %c0_44 = arith.constant 0 : index
    %c0_45 = arith.constant 0 : index
    %43 = vector.load %arg1[%c0_42, %c2_43, %c0_44, %c0_45] : memref<1x18x18x36xbf16, #tpu.memory_space<vmem>>, vector<1x16x16x36xbf16>
    %44 = vector.shape_cast %43 : vector<1x16x16x36xbf16> to vector<16x16x36xbf16>
    %45 = vector.shape_cast %44 : vector<16x16x36xbf16> to vector<256x36xbf16>
    %c6 = arith.constant 6 : index
    %c0_46 = arith.constant 0 : index
    %c0_47 = arith.constant 0 : index
    %46 = vector.load %arg2[%c6, %c0_46, %c0_47] : memref<9x36x128xbf16, #tpu.memory_space<vmem>>, vector<1x36x128xbf16>
    %47 = vector.shape_cast %46 : vector<1x36x128xbf16> to vector<36x128xbf16>
    %cst_48 = arith.constant dense<0.000000e+00> : vector<256x128xf32>
    %48 = tpu.matmul %45, %47, %cst_48 {dimension_numbers = #tpu.dot_dimension_numbers<[1], [0], [0], [1], [0, 0, 1, 1], [], []>} : vector<256x36xbf16>, vector<36x128xbf16>, vector<256x128xf32> -> vector<256x128xf32>
    %49 = arith.addf %42, %48 : vector<256x128xf32>
    %c0_49 = arith.constant 0 : index
    %c2_50 = arith.constant 2 : index
    %c1_51 = arith.constant 1 : index
    %c0_52 = arith.constant 0 : index
    %50 = vector.load %arg1[%c0_49, %c2_50, %c1_51, %c0_52] : memref<1x18x18x36xbf16, #tpu.memory_space<vmem>>, vector<1x16x16x36xbf16>
    %51 = vector.shape_cast %50 : vector<1x16x16x36xbf16> to vector<16x16x36xbf16>
    %52 = vector.shape_cast %51 : vector<16x16x36xbf16> to vector<256x36xbf16>
    %c7 = arith.constant 7 : index
    %c0_53 = arith.constant 0 : index
    %c0_54 = arith.constant 0 : index
    %53 = vector.load %arg2[%c7, %c0_53, %c0_54] : memref<9x36x128xbf16, #tpu.memory_space<vmem>>, vector<1x36x128xbf16>
    %54 = vector.shape_cast %53 : vector<1x36x128xbf16> to vector<36x128xbf16>
    %cst_55 = arith.constant dense<0.000000e+00> : vector<256x128xf32>
    %55 = tpu.matmul %52, %54, %cst_55 {dimension_numbers = #tpu.dot_dimension_numbers<[1], [0], [0], [1], [0, 0, 1, 1], [], []>} : vector<256x36xbf16>, vector<36x128xbf16>, vector<256x128xf32> -> vector<256x128xf32>
    %56 = arith.addf %49, %55 : vector<256x128xf32>
    %c0_56 = arith.constant 0 : index
    %c2_57 = arith.constant 2 : index
    %c2_58 = arith.constant 2 : index
    %c0_59 = arith.constant 0 : index
    %57 = vector.load %arg1[%c0_56, %c2_57, %c2_58, %c0_59] : memref<1x18x18x36xbf16, #tpu.memory_space<vmem>>, vector<1x16x16x36xbf16>
    %58 = vector.shape_cast %57 : vector<1x16x16x36xbf16> to vector<16x16x36xbf16>
    %59 = vector.shape_cast %58 : vector<16x16x36xbf16> to vector<256x36xbf16>
    %c8 = arith.constant 8 : index
    %c0_60 = arith.constant 0 : index
    %c0_61 = arith.constant 0 : index
    %60 = vector.load %arg2[%c8, %c0_60, %c0_61] : memref<9x36x128xbf16, #tpu.memory_space<vmem>>, vector<1x36x128xbf16>
    %61 = vector.shape_cast %60 : vector<1x36x128xbf16> to vector<36x128xbf16>
    %cst_62 = arith.constant dense<0.000000e+00> : vector<256x128xf32>
    %62 = tpu.matmul %59, %61, %cst_62 {dimension_numbers = #tpu.dot_dimension_numbers<[1], [0], [0], [1], [0, 0, 1, 1], [], []>} : vector<256x36xbf16>, vector<36x128xbf16>, vector<256x128xf32> -> vector<256x128xf32>
    %63 = arith.addf %56, %62 : vector<256x128xf32>
    %c0_63 = arith.constant 0 : index
    %c0_64 = arith.constant 0 : index
    %64 = vector.load %arg3[%c0_63, %c0_64] : memref<1x128xf32, #tpu.memory_space<vmem>>, vector<1x128xf32>
    %65 = vector.broadcast %64 : vector<1x128xf32> to vector<256x128xf32>
    %66 = arith.addf %63, %65 : vector<256x128xf32>
    %67 = vector.extract_strided_slice %66 {offsets = [0, 0], sizes = [256, 32], strides = [1, 1]} : vector<256x128xf32> to vector<256x32xf32>
    %68 = vector.extract_strided_slice %66 {offsets = [0, 32], sizes = [256, 32], strides = [1, 1]} : vector<256x128xf32> to vector<256x32xf32>
    %69 = vector.extract_strided_slice %66 {offsets = [0, 64], sizes = [256, 32], strides = [1, 1]} : vector<256x128xf32> to vector<256x32xf32>
    %70 = vector.extract_strided_slice %66 {offsets = [0, 96], sizes = [256, 32], strides = [1, 1]} : vector<256x128xf32> to vector<256x32xf32>
    %71 = math.tanh %67 : vector<256x32xf32>
    %72 = arith.negf %68 : vector<256x32xf32>
    %73 = math.exp %72 : vector<256x32xf32>
    %cst_65 = arith.constant 1.000000e+00 : f32
    %74 = vector.broadcast %cst_65 : f32 to vector<256x32xf32>
    %75 = arith.addf %74, %73 : vector<256x32xf32>
    %76 = arith.divf %74, %75 : vector<256x32xf32>
    %77 = arith.negf %69 : vector<256x32xf32>
    %78 = math.exp %77 : vector<256x32xf32>
    %cst_66 = arith.constant 1.000000e+00 : f32
    %79 = vector.broadcast %cst_66 : f32 to vector<256x32xf32>
    %80 = arith.addf %79, %78 : vector<256x32xf32>
    %81 = arith.divf %79, %80 : vector<256x32xf32>
    %82 = arith.negf %70 : vector<256x32xf32>
    %83 = math.exp %82 : vector<256x32xf32>
    %cst_67 = arith.constant 1.000000e+00 : f32
    %84 = vector.broadcast %cst_67 : f32 to vector<256x32xf32>
    %85 = arith.addf %84, %83 : vector<256x32xf32>
    %86 = arith.divf %84, %85 : vector<256x32xf32>
    %c0_68 = arith.constant 0 : index
    %c0_69 = arith.constant 0 : index
    %c0_70 = arith.constant 0 : index
    %87 = vector.load %arg4[%c0_68, %c0_69, %c0_70] : memref<1x256x32xf32, #tpu.memory_space<vmem>>, vector<1x256x32xf32>
    %88 = vector.shape_cast %87 : vector<1x256x32xf32> to vector<256x32xf32>
    %89 = arith.mulf %81, %88 : vector<256x32xf32>
    %90 = arith.mulf %76, %71 : vector<256x32xf32>
    %91 = arith.addf %89, %90 : vector<256x32xf32>
    %92 = math.tanh %91 : vector<256x32xf32>
    %93 = arith.mulf %86, %92 : vector<256x32xf32>
    %94 = tpu.concatenate %93, %91 in 1 : vector<256x32xf32>, vector<256x32xf32> -> vector<256x64xf32>
    %c0_71 = arith.constant 0 : index
    %c0_72 = arith.constant 0 : index
    %c0_73 = arith.constant 0 : index
    %95 = vector.load %arg5[%c0_71, %c0_72, %c0_73] : memref<1x256x64xf32, #tpu.memory_space<vmem>>, vector<1x256x64xf32>
    %96 = vector.shape_cast %95 : vector<1x256x64xf32> to vector<256x64xf32>
    %97 = vector.shape_cast %94 : vector<256x64xf32> to vector<1x256x64xf32>
    tpu.vector_store %arg5[%c0_71, %c0_72, %c0_73], %97 {strides = array<i32>} : memref<1x256x64xf32, #tpu.memory_space<vmem>>, vector<1x256x64xf32>,
    return
  }
  func.func @transform_0(%arg0: i32) -> (i32, i32, i32, i32) {
    %c0_i32 = arith.constant 0 : i32
    %c0_i32_0 = arith.constant 0 : i32
    %c0_i32_1 = arith.constant 0 : i32
    %c0_i32_2 = arith.constant 0 : i32
    return %arg0, %c0_i32, %c0_i32_0, %c0_i32_1 : i32, i32, i32, i32
  }
  func.func @transform_1(%arg0: i32) -> (i32, i32, i32) {
    %c0_i32 = arith.constant 0 : i32
    %c0_i32_0 = arith.constant 0 : i32
    %c0_i32_1 = arith.constant 0 : i32
    %c0_i32_2 = arith.constant 0 : i32
    return %c0_i32, %c0_i32_0, %c0_i32_1 : i32, i32, i32
  }
  func.func @transform_2(%arg0: i32) -> (i32, i32) {
    %c0_i32 = arith.constant 0 : i32
    %c0_i32_0 = arith.constant 0 : i32
    %c0_i32_1 = arith.constant 0 : i32
    return %c0_i32, %c0_i32_0 : i32, i32
  }
  func.func @transform_3(%arg0: i32) -> (i32, i32, i32) {
    %c0_i32 = arith.constant 0 : i32
    %c0_i32_0 = arith.constant 0 : i32
    %c0_i32_1 = arith.constant 0 : i32
    return %arg0, %c0_i32, %c0_i32_0 : i32, i32, i32
  }
  func.func @transform_4(%arg0: i32) -> (i32, i32, i32) {
    %c0_i32 = arith.constant 0 : i32
    %c0_i32_0 = arith.constant 0 : i32
    %c0_i32_1 = arith.constant 0 : i32
    return %arg0, %c0_i32, %c0_i32_0 : i32, i32, i32
  }
}

</mosaic_0001>

<llo_original>
// kernel: convlstm_cell_forward.1
$region0: #{convlstm_cell_forward.1}
  #allocation0 [shape = 'u32[]', space=smem, size = 0x4, offset = 0x4, fixed_abs, tag = 'smem constant byte address 0x4 - core index']
  #allocation1 [shape = 'u32[144,128]{1,0:T(1,128)}', space=vmem, size = 0x12000, scoped, tag = 'internal scratch']
  %s0 = inlined_call_operand.vmem [shape: bf16[2,18,18,36], index: 0, kind: input, shape index: {}]
  %s1 = inlined_call_operand.vmem [shape: bf16[9,36,128], index: 1, kind: input, shape index: {}]
  %s2 = inlined_call_operand.vmem [shape: f32[1,128], index: 2, kind: input, shape index: {}]
  %s3 = inlined_call_operand.vmem [shape: f32[2,256,32], index: 3, kind: input, shape index: {}]
  %s4 = inlined_call_operand.vmem [shape: f32[2,256,64], index: 4, kind: output, shape index: {}]
  %s5 = sld [smem:[#allocation0]]
  $region49: #{convlstm_cell_forward.1} parent=0
    _
  %s7 = ssub.s32 1, %s5
  %s8 = scalar_select 0, %s7, %s5
  loop: start=0, step=1, limit=4
  $region2: #{convlstm_cell_forward.1} parent=0 // loop_pre_header
    _
  $region3: #{convlstm_cell_forward.1} parent=0 // loop_header
    %s10 = sphi 0, %s14
    %p11 = scmp.ge.s32.totalorder %s10, 4
    %s20 = sphi 0, %s22
    %s23 = sphi 0, %s20
    %s24 = sphi 0, %s23
    %s40 = sphi 0, %s24
    %s44 = sphi 0, %s44
    %s46 = sphi 0, %s44
    %s47 = sphi 0, %s46
    %s61 = sphi 0, %s47
    %s65 = sphi 0, %s65
    %s67 = sphi 0, %s65
    %s68 = sphi 0, %s67
    %s82 = sphi 0, %s68
    %s88 = sphi 0, %s90
    %s91 = sphi 0, %s88
    %s92 = sphi 0, %s91
    %s108 = sphi 0, %s92
    %s114 = sphi 0, %s116
    %s117 = sphi 0, %s114
    %s118 = sphi 0, %s117
    %s134 = sphi 0, %s118
  $region4: #{convlstm_cell_forward.1} parent=0 // loop_header_branch
    %13 = sbr.rel (%p11) target = $region8
  $region5: #{convlstm_cell_forward.1} parent=0 // loop_body
    %s15 = ssub.s32 %s10, 1
    %s16 = ssub.s32 %s10, 2
    %s17 = sadd.s32 %s10, 1
    %s18 = ssub.s32 %s10, %s17
    %p19 = scmp.eq.s32.totalorder %s18, 0
    %s21 = sadd.s32 %s20, 1
    %s22 = scalar_select %p19, %s20, %s21
    %p25 = pneg %p19
    %p26 = scmp.eq.s32.totalorder %s10, 1
    %p27 = por %p25, %p26
    %p28 = scmp.ne.s32.totalorder %s20, %s23
    %p29 = scmp.eq.s32.totalorder %s10, 0
    %p30 = por %p28, %p29
    %p31 = scmp.ne.s32.totalorder %s20, %s23
    %p32 = scmp.eq.s32.totalorder %s15, 1
    %p33 = por %p31, %p32
    %p34 = scmp.ne.s32.totalorder %s23, %s24
    %p35 = scmp.eq.s32.totalorder %s15, 0
    %p36 = por %p34, %p35
    %p37 = scmp.ne.s32.totalorder %s23, %s24
    %p38 = scmp.eq.s32.totalorder %s16, 1
    %p39 = por %p37, %p38
    %p41 = scmp.ne.s32.totalorder %s24, %s40
    %p42 = scmp.eq.s32.totalorder %s16, 0
    %p43 = por %p41, %p42
    %s45 = sadd.s32 %s44, 1
    %p48 = scmp.eq.s32.totalorder %s10, 1
    %p49 = scmp.ne.s32.totalorder %s44, %s46
    %p50 = scmp.eq.s32.totalorder %s10, 0
    %p51 = por %p49, %p50
    %p52 = scmp.ne.s32.totalorder %s44, %s46
    %p53 = scmp.eq.s32.totalorder %s15, 1
    %p54 = por %p52, %p53
    %p55 = scmp.ne.s32.totalorder %s46, %s47
    %p56 = scmp.eq.s32.totalorder %s15, 0
    %p57 = por %p55, %p56
    %p58 = scmp.ne.s32.totalorder %s46, %s47
    %p59 = scmp.eq.s32.totalorder %s16, 1
    %p60 = por %p58, %p59
    %p62 = scmp.ne.s32.totalorder %s47, %s61
    %p63 = scmp.eq.s32.totalorder %s16, 0
    %p64 = por %p62, %p63
    %s66 = sadd.s32 %s65, 1
    %p69 = scmp.eq.s32.totalorder %s10, 1
    %p70 = scmp.ne.s32.totalorder %s65, %s67
    %p71 = scmp.eq.s32.totalorder %s10, 0
    %p72 = por %p70, %p71
    %p73 = scmp.ne.s32.totalorder %s65, %s67
    %p74 = scmp.eq.s32.totalorder %s15, 1
    %p75 = por %p73, %p74
    %p76 = scmp.ne.s32.totalorder %s67, %s68
    %p77 = scmp.eq.s32.totalorder %s15, 0
    %p78 = por %p76, %p77
    %p79 = scmp.ne.s32.totalorder %s67, %s68
    %p80 = scmp.eq.s32.totalorder %s16, 1
    %p81 = por %p79, %p80
    %p83 = scmp.ne.s32.totalorder %s68, %s82
    %p84 = scmp.eq.s32.totalorder %s16, 0
    %p85 = por %p83, %p84
    %s86 = ssub.s32 %s10, %s17
    %p87 = scmp.eq.s32.totalorder %s86, 0
    %s89 = sadd.s32 %s88, 1
    %s90 = scalar_select %p87, %s88, %s89
    %p93 = pneg %p87
    %p94 = scmp.eq.s32.totalorder %s10, 1
    %p95 = por %p93, %p94
    %p96 = scmp.ne.s32.totalorder %s88, %s91
    %p97 = scmp.eq.s32.totalorder %s10, 0
    %p98 = por %p96, %p97
    %p99 = scmp.ne.s32.totalorder %s88, %s91
    %p100 = scmp.eq.s32.totalorder %s15, 1
    %p101 = por %p99, %p100
    %p102 = scmp.ne.s32.totalorder %s91, %s92
    %p103 = scmp.eq.s32.totalorder %s15, 0
    %p104 = por %p102, %p103
    %p105 = scmp.ne.s32.totalorder %s91, %s92
    %p106 = scmp.eq.s32.totalorder %s16, 1
    %p107 = por %p105, %p106
    %p109 = scmp.ne.s32.totalorder %s92, %s108
    %p110 = scmp.eq.s32.totalorder %s16, 0
    %p111 = por %p109, %p110
    %s112 = ssub.s32 %s10, %s17
    %p113 = scmp.eq.s32.totalorder %s112, 0
    %s115 = sadd.s32 %s114, 1
    %s116 = scalar_select %p113, %s114, %s115
    %p119 = pneg %p113
    %p120 = scmp.eq.s32.totalorder %s10, 1
    %p121 = por %p119, %p120
    %p122 = scmp.ne.s32.totalorder %s114, %s117
    %p123 = scmp.eq.s32.totalorder %s10, 0
    %p124 = por %p122, %p123
    %p125 = scmp.ne.s32.totalorder %s114, %s117
    %p126 = scmp.eq.s32.totalorder %s15, 1
    %p127 = por %p125, %p126
    %p128 = scmp.ne.s32.totalorder %s117, %s118
    %p129 = scmp.eq.s32.totalorder %s15, 0
    %p130 = por %p128, %p129
    %p131 = scmp.ne.s32.totalorder %s117, %s118
    %p132 = scmp.eq.s32.totalorder %s16, 1
    %p133 = por %p131, %p132
    %p135 = scmp.ne.s32.totalorder %s118, %s134
    %p136 = scmp.eq.s32.totalorder %s16, 0
    %p137 = por %p135, %p136
    %p138 = scmp.le.s32.totalorder 1, %s10
    %p139 = scmp.lt.s32.totalorder %s10, 3
    %p140 = pnand %p138, %p139
    %p141 = pneg %p140
    // Predicated region
    $region9: #{convlstm_cell_forward.1} parent=5 // pred_check
      _
    $region10: #{convlstm_cell_forward.1} parent=5 // pred_check_branch
      %143 = sbr.rel (%p140) target = $region12
    $region11: #{convlstm_cell_forward.1} parent=5 // pred_region
      %s144 = ssub.s32 %s10, 1
      // Predicated region
      $region13: #{convlstm_cell_forward.1} parent=11 // pred_check
        %p145 = pneg %p57
      $region14: #{convlstm_cell_forward.1} parent=11 // pred_check_branch
        %147 = sbr.rel (%p145) target = $region16
      $region15: #{convlstm_cell_forward.1} parent=11 // pred_region
        _
      $region16: #{convlstm_cell_forward.1} parent=11 // pred_fallthru
        _
      // Predicated region
      $region17: #{convlstm_cell_forward.1} parent=11 // pred_check
        %p148 = pneg %p78
      $region18: #{convlstm_cell_forward.1} parent=11 // pred_check_branch
        %150 = sbr.rel (%p148) target = $region20
      $region19: #{convlstm_cell_forward.1} parent=11 // pred_region
        _
      $region20: #{convlstm_cell_forward.1} parent=11 // pred_fallthru
        _
    $region12: #{convlstm_cell_forward.1} parent=5 // pred_fallthru
      _
    %p151 = scmp.lt.s32.totalorder %s10, 2
    // Predicated region
    $region21: #{convlstm_cell_forward.1} parent=5 // pred_check
      %p152 = pneg %p151
    $region22: #{convlstm_cell_forward.1} parent=5 // pred_check_branch
      %154 = sbr.rel (%p152) target = $region24
    $region23: #{convlstm_cell_forward.1} parent=5 // pred_region
      // Predicated region
      $region25: #{convlstm_cell_forward.1} parent=23 // pred_check
        %p155 = pneg %p30
      $region26: #{convlstm_cell_forward.1} parent=23 // pred_check_branch
        %157 = sbr.rel (%p155) target = $region28
      $region27: #{convlstm_cell_forward.1} parent=23 // pred_region
        %p158 = scmp.lt.s32.totalorder %s10, 1
        %s159 = scalar_select %p158, %s10, 1
        %s160 = smul.addr %s159, 54
        %s161 = smul.addr %s160, 4
        %s162 = scalar_lea.vmem %s0, %s161
      $region28: #{convlstm_cell_forward.1} parent=23 // pred_fallthru
        _
      // Predicated region
      $region29: #{convlstm_cell_forward.1} parent=23 // pred_check
        %p163 = pneg %p98
      $region30: #{convlstm_cell_forward.1} parent=23 // pred_check_branch
        %165 = sbr.rel (%p163) target = $region32
      $region31: #{convlstm_cell_forward.1} parent=23 // pred_region
        %p166 = scmp.lt.s32.totalorder %s10, 1
        %s167 = scalar_select %p166, %s10, 1
        %s168 = smul.addr %s167, 32
        %s169 = smul.addr %s168, 8
        %s170 = scalar_lea.vmem %s3, %s169
      $region32: #{convlstm_cell_forward.1} parent=23 // pred_fallthru
        _
    $region24: #{convlstm_cell_forward.1} parent=5 // pred_fallthru
      _
    %p171 = scmp.le.s32.totalorder 1, %s10
    %p172 = scmp.lt.s32.totalorder %s10, 3
    %p173 = pnand %p171, %p172
    %p174 = pneg %p173
    // Predicated region
    $region33: #{convlstm_cell_forward.1} parent=5 // pred_check
      _
    $region34: #{convlstm_cell_forward.1} parent=5 // pred_check_branch
      %176 = sbr.rel (%p173) target = $region36
    $region35: #{convlstm_cell_forward.1} parent=5 // pred_region
      %s177 = ssub.s32 %s10, 1
      %p178 = scmp.lt.s32.totalorder %s15, 1
      %s179 = scalar_select %p178, %s15, 1
      %s180 = smul.addr %s179, 54
      %s181 = smul.addr %s180, 4
      %s182 = scalar_lea.vmem %s0, %s181
      %p183 = pneg %p36
      %p184 = pneg %p33
      %p185 = pneg %p57
      %p186 = pneg %p54
      %p187 = pneg %p78
      %p188 = pneg %p75
      %p189 = scmp.lt.s32.totalorder %s15, 1
      %s190 = scalar_select %p189, %s15, 1
      %s191 = smul.addr %s190, 32
      %s192 = smul.addr %s191, 8
      %s193 = scalar_lea.vmem %s3, %s192
      %p194 = pneg %p104
      %p195 = pneg %p101
      %p196 = pneg %p130
      %p197 = pneg %p127
      %p198 = scmp.lt.s32.totalorder %s15, 1
      %s199 = scalar_select %p198, %s15, 1
      %s200 = smul.addr %s199, 32
      %s201 = smul.addr %s200, 8
      %s202 = scalar_lea.vmem %s4, %s201
      %p203 = scmp.lt.s32.totalorder %s15, 1
      %s204 = scalar_select %p203, %s15, 1
      %s205 = smul.addr %s204, 54
      %s206 = smul.addr %s205, 4
      %s207 = scalar_lea.vmem %s0, %s206
      %p208 = scmp.lt.s32.totalorder %s15, 1
      %s209 = scalar_select %p208, %s15, 1
      %s210 = smul.addr %s209, 32
      %s211 = smul.addr %s210, 8
      %s212 = scalar_lea.vmem %s3, %s211
      %p213 = scmp.lt.s32.totalorder %s15, 1
      %s214 = scalar_select %p213, %s15, 1
      %s215 = smul.addr %s214, 32
      %s216 = smul.addr %s215, 8
      %s217 = scalar_lea.vmem %s4, %s216
      %v219 = vld [vmem:[%s207] sm:$0xf]
      %v220 = vld [vmem:[%s207 + $0x4] sm:$0xf]
      %v221 = vld [vmem:[%s207 + $0xc] sm:$0xf]
      %v222 = vld [vmem:[%s207 + $0x10] sm:$0xf]
      %v223 = vld [vmem:[%s207 + $0x18] sm:$0xf]
      %v224 = vld [vmem:[%s207 + $0x1c] sm:$0xf]
      %v225 = vld [vmem:[%s207 + $0x24] sm:$0xf]
      %v226 = vld [vmem:[%s207 + $0x28] sm:$0xf]
      %v227 = vld [vmem:[%s207 + $0x30] sm:$0xf]
      %v228 = vld [vmem:[%s207 + $0x34] sm:$0xf]
      %v229 = vld [vmem:[%s207 + $0x3c] sm:$0xf]
      %v230 = vld [vmem:[%s207 + $0x40] sm:$0xf]
      %v231 = vld [vmem:[%s207 + $0x48] sm:$0xf]
      %v232 = vld [vmem:[%s207 + $0x4c] sm:$0xf]
      %v233 = vld [vmem:[%s207 + $0x54] sm:$0xf]
      %v234 = vld [vmem:[%s207 + $0x58] sm:$0xf]
      %v235 = vld [vmem:[%s207 + $0x60] sm:$0xf]
      %v236 = vld [vmem:[%s207 + $0x64] sm:$0xf]
      %v237 = vld [vmem:[%s207 + $0x6c] sm:$0xf]
      %v238 = vld [vmem:[%s207 + $0x70] sm:$0xf]
      %v239 = vld [vmem:[%s207 + $0x78] sm:$0xf]
      %v240 = vld [vmem:[%s207 + $0x7c] sm:$0xf]
      %v241 = vld [vmem:[%s207 + $0x84] sm:$0xf]
      %v242 = vld [vmem:[%s207 + $0x88] sm:$0xf]
      %v243 = vld [vmem:[%s207 + $0x90] sm:$0xf]
      %v244 = vld [vmem:[%s207 + $0x94] sm:$0xf]
      %v245 = vld [vmem:[%s207 + $0x9c] sm:$0xf]
      %v246 = vld [vmem:[%s207 + $0xa0] sm:$0xf]
      %v247 = vld [vmem:[%s207 + $0xa8] sm:$0xf]
      %v248 = vld [vmem:[%s207 + $0xac] sm:$0xf]
      %v249 = vld [vmem:[%s207 + $0xb4] sm:$0xf]
      %v250 = vld [vmem:[%s207 + $0xb8] sm:$0xf]
      %v251 = vld [vmem:[%s1] sm:$0xf]
      %v252 = vld [vmem:[%s1 + $0x4] sm:$0xf]
      %v253 = vld [vmem:[%s1 + $0x8] sm:$0xf]
      %v254 = vld [vmem:[%s1 + $0xc] sm:$0xf]
      %v255 = vld [vmem:[%s1 + $0x10] sm:$0x3]
      %v256 = vld [vmem:[%s207 + $0x8] sm:$0x1]
      %v257 = vld [vmem:[%s207 + $0x14] sm:$0x1]
      %v258 = vld [vmem:[%s207 + $0x20] sm:$0x1]
      %v259 = vld [vmem:[%s207 + $0x2c] sm:$0x1]
      %v260 = vld [vmem:[%s207 + $0x38] sm:$0x1]
      %v261 = vld [vmem:[%s207 + $0x44] sm:$0x1]
      %v262 = vld [vmem:[%s207 + $0x50] sm:$0x1]
      %v263 = vld [vmem:[%s207 + $0x5c] sm:$0x1]
      %v264 = vld [vmem:[%s207 + $0x68] sm:$0x1]
      %v265 = vld [vmem:[%s207 + $0x74] sm:$0x1]
      %v266 = vld [vmem:[%s207 + $0x80] sm:$0x1]
      %v267 = vld [vmem:[%s207 + $0x8c] sm:$0x1]
      %v268 = vld [vmem:[%s207 + $0x98] sm:$0x1]
      %v269 = vld [vmem:[%s207 + $0xa4] sm:$0x1]
      %v270 = vld [vmem:[%s207 + $0xb0] sm:$0x1]
      %v271 = vld [vmem:[%s207 + $0xbc] sm:$0x1]
      %vm272 = vsmask.f32 3328
      %vm273 = vsmask.f32 7440
      %vm274 = vmor %vm272, %vm273
      %v276 = vshrl.u32 %v219, 16
      %v278 = vrot.slane %v276, 4
      %v279 = vshll.u32 %v219, 16
      %v281 = vrot.slane %v279, 5
      %v282 = vor.u32 %v278, %v281
      %v283 = vrot.slane %v282, 4
      %v285 = vshll.u32 %v220, 16
      %v287 = vrot.slane %v285, 5
      %v288 = vsel %vm274, %v283, %v287
      %v289 = vshrl.u32 %v220, 16
      %v291 = vrot.slane %v289, 4
      %v292 = vor.u32 %v291, %v287
      %v293 = vrot.slane %v292, 4
      %v295 = vshll.u32 %v256, 16
      %v297 = vrot.slane %v295, 5
      %v298 = vsel %vm274, %v293, %v297
      %v300 = vshrl.u32 %v221, 16
      %v302 = vrot.slane %v300, 4
      %v303 = vshll.u32 %v221, 16
      %v305 = vrot.slane %v303, 5
      %v306 = vor.u32 %v302, %v305
      %v307 = vrot.slane %v306, 4
      %v309 = vshll.u32 %v222, 16
      %v311 = vrot.slane %v309, 5
      %v312 = vsel %vm274, %v307, %v311
      %v313 = vshrl.u32 %v222, 16
      %v315 = vrot.slane %v313, 4
      %v316 = vor.u32 %v315, %v311
      %v317 = vrot.slane %v316, 4
      %v319 = vshll.u32 %v257, 16
      %v321 = vrot.slane %v319, 5
      %v322 = vsel %vm274, %v317, %v321
      %v324 = vshrl.u32 %v223, 16
      %v326 = vrot.slane %v324, 4
      %v327 = vshll.u32 %v223, 16
      %v329 = vrot.slane %v327, 5
      %v330 = vor.u32 %v326, %v329
      %v331 = vrot.slane %v330, 4
      %v333 = vshll.u32 %v224, 16
      %v335 = vrot.slane %v333, 5
      %v336 = vsel %vm274, %v331, %v335
      %v337 = vshrl.u32 %v224, 16
      %v339 = vrot.slane %v337, 4
      %v340 = vor.u32 %v339, %v335
      %v341 = vrot.slane %v340, 4
      %v343 = vshll.u32 %v258, 16
      %v345 = vrot.slane %v343, 5
      %v346 = vsel %vm274, %v341, %v345
      %v348 = vshrl.u32 %v225, 16
      %v350 = vrot.slane %v348, 4
      %v351 = vshll.u32 %v225, 16
      %v353 = vrot.slane %v351, 5
      %v354 = vor.u32 %v350, %v353
      %v355 = vrot.slane %v354, 4
      %v357 = vshll.u32 %v226, 16
      %v359 = vrot.slane %v357, 5
      %v360 = vsel %vm274, %v355, %v359
      %v361 = vshrl.u32 %v226, 16
      %v363 = vrot.slane %v361, 4
      %v364 = vor.u32 %v363, %v359
      %v365 = vrot.slane %v364, 4
      %v367 = vshll.u32 %v259, 16
      %v369 = vrot.slane %v367, 5
      %v370 = vsel %vm274, %v365, %v369
      %v372 = vshrl.u32 %v227, 16
      %v374 = vrot.slane %v372, 4
      %v375 = vshll.u32 %v227, 16
      %v377 = vrot.slane %v375, 5
      %v378 = vor.u32 %v374, %v377
      %v379 = vrot.slane %v378, 4
      %v381 = vshll.u32 %v228, 16
      %v383 = vrot.slane %v381, 5
      %v384 = vsel %vm274, %v379, %v383
      %v385 = vshrl.u32 %v228, 16
      %v387 = vrot.slane %v385, 4
      %v388 = vor.u32 %v387, %v383
      %v389 = vrot.slane %v388, 4
      %v391 = vshll.u32 %v260, 16
      %v393 = vrot.slane %v391, 5
      %v394 = vsel %vm274, %v389, %v393
      %v396 = vshrl.u32 %v229, 16
      %v398 = vrot.slane %v396, 4
      %v399 = vshll.u32 %v229, 16
      %v401 = vrot.slane %v399, 5
      %v402 = vor.u32 %v398, %v401
      %v403 = vrot.slane %v402, 4
      %v405 = vshll.u32 %v230, 16
      %v407 = vrot.slane %v405, 5
      %v408 = vsel %vm274, %v403, %v407
      %v409 = vshrl.u32 %v230, 16
      %v411 = vrot.slane %v409, 4
      %v412 = vor.u32 %v411, %v407
      %v413 = vrot.slane %v412, 4
      %v415 = vshll.u32 %v261, 16
      %v417 = vrot.slane %v415, 5
      %v418 = vsel %vm274, %v413, %v417
      %v420 = vshrl.u32 %v231, 16
      %v422 = vrot.slane %v420, 4
      %v423 = vshll.u32 %v231, 16
      %v425 = vrot.slane %v423, 5
      %v426 = vor.u32 %v422, %v425
      %v427 = vrot.slane %v426, 4
      %v429 = vshll.u32 %v232, 16
      %v431 = vrot.slane %v429, 5
      %v432 = vsel %vm274, %v427, %v431
      %v433 = vshrl.u32 %v232, 16
      %v435 = vrot.slane %v433, 4
      %v436 = vor.u32 %v435, %v431
      %v437 = vrot.slane %v436, 4
      %v439 = vshll.u32 %v262, 16
      %v441 = vrot.slane %v439, 5
      %v442 = vsel %vm274, %v437, %v441
      %v444 = vshrl.u32 %v233, 16
      %v446 = vrot.slane %v444, 4
      %v447 = vshll.u32 %v233, 16
      %v449 = vrot.slane %v447, 5
      %v450 = vor.u32 %v446, %v449
      %v451 = vrot.slane %v450, 4
      %v453 = vshll.u32 %v234, 16
      %v455 = vrot.slane %v453, 5
      %v456 = vsel %vm274, %v451, %v455
      %v457 = vshrl.u32 %v234, 16
      %v459 = vrot.slane %v457, 4
      %v460 = vor.u32 %v459, %v455
      %v461 = vrot.slane %v460, 4
      %v463 = vshll.u32 %v263, 16
      %v465 = vrot.slane %v463, 5
      %v466 = vsel %vm274, %v461, %v465
      %v468 = vshrl.u32 %v235, 16
      %v470 = vrot.slane %v468, 4
      %v471 = vshll.u32 %v235, 16
      %v473 = vrot.slane %v471, 5
      %v474 = vor.u32 %v470, %v473
      %v475 = vrot.slane %v474, 4
      %v477 = vshll.u32 %v236, 16
      %v479 = vrot.slane %v477, 5
      %v480 = vsel %vm274, %v475, %v479
      %v481 = vshrl.u32 %v236, 16
      %v483 = vrot.slane %v481, 4
      %v484 = vor.u32 %v483, %v479
      %v485 = vrot.slane %v484, 4
      %v487 = vshll.u32 %v264, 16
      %v489 = vrot.slane %v487, 5
      %v490 = vsel %vm274, %v485, %v489
      %v492 = vshrl.u32 %v237, 16
      %v494 = vrot.slane %v492, 4
      %v495 = vshll.u32 %v237, 16
      %v497 = vrot.slane %v495, 5
      %v498 = vor.u32 %v494, %v497
      %v499 = vrot.slane %v498, 4
      %v501 = vshll.u32 %v238, 16
      %v503 = vrot.slane %v501, 5
      %v504 = vsel %vm274, %v499, %v503
      %v505 = vshrl.u32 %v238, 16
      %v507 = vrot.slane %v505, 4
      %v508 = vor.u32 %v507, %v503
      %v509 = vrot.slane %v508, 4
      %v511 = vshll.u32 %v265, 16
      %v513 = vrot.slane %v511, 5
      %v514 = vsel %vm274, %v509, %v513
      %v516 = vshrl.u32 %v239, 16
      %v518 = vrot.slane %v516, 4
      %v519 = vshll.u32 %v239, 16
      %v521 = vrot.slane %v519, 5
      %v522 = vor.u32 %v518, %v521
      %v523 = vrot.slane %v522, 4
      %v525 = vshll.u32 %v240, 16
      %v527 = vrot.slane %v525, 5
      %v528 = vsel %vm274, %v523, %v527
      %v529 = vshrl.u32 %v240, 16
      %v531 = vrot.slane %v529, 4
      %v532 = vor.u32 %v531, %v527
      %v533 = vrot.slane %v532, 4
      %v535 = vshll.u32 %v266, 16
      %v537 = vrot.slane %v535, 5
      %v538 = vsel %vm274, %v533, %v537
      %v540 = vshrl.u32 %v241, 16
      %v542 = vrot.slane %v540, 4
      %v543 = vshll.u32 %v241, 16
      %v545 = vrot.slane %v543, 5
      %v546 = vor.u32 %v542, %v545
      %v547 = vrot.slane %v546, 4
      %v549 = vshll.u32 %v242, 16
      %v551 = vrot.slane %v549, 5
      %v552 = vsel %vm274, %v547, %v551
      %v553 = vshrl.u32 %v242, 16
      %v555 = vrot.slane %v553, 4
      %v556 = vor.u32 %v555, %v551
      %v557 = vrot.slane %v556, 4
      %v559 = vshll.u32 %v267, 16
      %v561 = vrot.slane %v559, 5
      %v562 = vsel %vm274, %v557, %v561
      %v564 = vshrl.u32 %v243, 16
      %v566 = vrot.slane %v564, 4
      %v567 = vshll.u32 %v243, 16
      %v569 = vrot.slane %v567, 5
      %v570 = vor.u32 %v566, %v569
      %v571 = vrot.slane %v570, 4
      %v573 = vshll.u32 %v244, 16
      %v575 = vrot.slane %v573, 5
      %v576 = vsel %vm274, %v571, %v575
      %v577 = vshrl.u32 %v244, 16
      %v579 = vrot.slane %v577, 4
      %v580 = vor.u32 %v579, %v575
      %v581 = vrot.slane %v580, 4
      %v583 = vshll.u32 %v268, 16
      %v585 = vrot.slane %v583, 5
      %v586 = vsel %vm274, %v581, %v585
      %v588 = vshrl.u32 %v245, 16
      %v590 = vrot.slane %v588, 4
      %v591 = vshll.u32 %v245, 16
      %v593 = vrot.slane %v591, 5
      %v594 = vor.u32 %v590, %v593
      %v595 = vrot.slane %v594, 4
      %v597 = vshll.u32 %v246, 16
      %v599 = vrot.slane %v597, 5
      %v600 = vsel %vm274, %v595, %v599
      %v601 = vshrl.u32 %v246, 16
      %v603 = vrot.slane %v601, 4
      %v604 = vor.u32 %v603, %v599
      %v605 = vrot.slane %v604, 4
      %v607 = vshll.u32 %v269, 16
      %v609 = vrot.slane %v607, 5
      %v610 = vsel %vm274, %v605, %v609
      %v612 = vshrl.u32 %v247, 16
      %v614 = vrot.slane %v612, 4
      %v615 = vshll.u32 %v247, 16
      %v617 = vrot.slane %v615, 5
      %v618 = vor.u32 %v614, %v617
      %v619 = vrot.slane %v618, 4
      %v621 = vshll.u32 %v248, 16
      %v623 = vrot.slane %v621, 5
      %v624 = vsel %vm274, %v619, %v623
      %v625 = vshrl.u32 %v248, 16
      %v627 = vrot.slane %v625, 4
      %v628 = vor.u32 %v627, %v623
      %v629 = vrot.slane %v628, 4
      %v631 = vshll.u32 %v270, 16
      %v633 = vrot.slane %v631, 5
      %v634 = vsel %vm274, %v629, %v633
      %v636 = vshrl.u32 %v249, 16
      %v638 = vrot.slane %v636, 4
      %v639 = vshll.u32 %v249, 16
      %v641 = vrot.slane %v639, 5
      %v642 = vor.u32 %v638, %v641
      %v643 = vrot.slane %v642, 4
      %v645 = vshll.u32 %v250, 16
      %v647 = vrot.slane %v645, 5
      %v648 = vsel %vm274, %v643, %v647
      %v649 = vshrl.u32 %v250, 16
      %v651 = vrot.slane %v649, 4
      %v652 = vor.u32 %v651, %v647
      %v653 = vrot.slane %v652, 4
      %v655 = vshll.u32 %v271, 16
      %v657 = vrot.slane %v655, 5
      %v658 = vsel %vm274, %v653, %v657
      %s659 = scalar_lea.vmem %s1, 20
      %v660 = vld [vmem:[%s659] sm:$0xf]
      %v661 = vld [vmem:[%s659 + $0x4] sm:$0xf]
      %v662 = vld [vmem:[%s659 + $0x8] sm:$0xf]
      %v663 = vld [vmem:[%s659 + $0xc] sm:$0xf]
      %v664 = vld [vmem:[%s659 + $0x10] sm:$0x3]
      %v665 = vunpack.c.l.b16 %v288
      %v666 = vunpack.c.l.b16 %v298
      %v667 = vunpack.c.l.b16 %v312
      %v668 = vunpack.c.l.b16 %v322
      %v669 = vunpack.c.l.b16 %v336
      %v670 = vunpack.c.l.b16 %v346
      %v671 = vunpack.c.l.b16 %v360
      %v672 = vunpack.c.l.b16 %v370
      %v673 = vunpack.c.l.b16 %v384
      %v674 = vunpack.c.l.b16 %v394
      %v675 = vunpack.c.l.b16 %v408
      %v676 = vunpack.c.l.b16 %v418
      %v677 = vunpack.c.l.b16 %v432
      %v678 = vunpack.c.l.b16 %v442
      %v679 = vunpack.c.l.b16 %v456
      %v680 = vunpack.c.l.b16 %v466
      %v681 = vunpack.c.l.b16 %v480
      %v682 = vunpack.c.l.b16 %v490
      %v683 = vunpack.c.l.b16 %v504
      %v684 = vunpack.c.l.b16 %v514
      %v685 = vunpack.c.l.b16 %v528
      %v686 = vunpack.c.l.b16 %v538
      %v687 = vunpack.c.l.b16 %v552
      %v688 = vunpack.c.l.b16 %v562
      %v689 = vunpack.c.l.b16 %v576
      %v690 = vunpack.c.l.b16 %v586
      %v691 = vunpack.c.l.b16 %v600
      %v692 = vunpack.c.l.b16 %v610
      %v693 = vunpack.c.l.b16 %v624
      %v694 = vunpack.c.l.b16 %v634
      %v695 = vunpack.c.l.b16 %v648
      %v696 = vunpack.c.l.b16 %v658
      %v697 = vpack.c.b16 %v666, %v665
      %v698 = vpack.c.b16 %v668, %v667
      %v699 = vpack.c.b16 %v670, %v669
      %v700 = vpack.c.b16 %v672, %v671
      %v701 = vpack.c.b16 %v674, %v673
      %v702 = vpack.c.b16 %v676, %v675
      %v703 = vpack.c.b16 %v678, %v677
      %v704 = vpack.c.b16 %v680, %v679
      %v705 = vpack.c.b16 %v682, %v681
      %v706 = vpack.c.b16 %v684, %v683
      %v707 = vpack.c.b16 %v686, %v685
      %v708 = vpack.c.b16 %v688, %v687
      %v709 = vpack.c.b16 %v690, %v689
      %v710 = vpack.c.b16 %v692, %v691
      %v711 = vpack.c.b16 %v694, %v693
      %v712 = vpack.c.b16 %v696, %v695
      %v718 = vunpack.c.l.b16 %v660
      %v719 = vunpack.c.l.b16 %v661
      %v720 = vunpack.c.l.b16 %v662
      %v721 = vunpack.c.l.b16 %v663
      %v722 = vunpack.c.l.b16 %v664
      %v723 = vpack.c.b16 %v719, %v718
      %v724 = vpack.c.b16 %v721, %v720
      %v725 = vpack.c.b16 %v722, %v722
      %vm728 = vcmask 293888
      %v730 = vsel %vm728, %v697, 0
      %v733 = vsel %vm728, %v698, 0
      %v736 = vsel %vm728, %v699, 0
      %v739 = vsel %vm728, %v700, 0
      %v742 = vsel %vm728, %v701, 0
      %v745 = vsel %vm728, %v702, 0
      %v748 = vsel %vm728, %v703, 0
      %v751 = vsel %vm728, %v704, 0
      %v754 = vsel %vm728, %v705, 0
      %v757 = vsel %vm728, %v706, 0
      %v760 = vsel %vm728, %v707, 0
      %v763 = vsel %vm728, %v708, 0
      %v766 = vsel %vm728, %v709, 0
      %v769 = vsel %vm728, %v710, 0
      %v772 = vsel %vm728, %v711, 0
      %v775 = vsel %vm728, %v712, 0
      %vm777 = vcmask 1041408
      %v779 = vsel %vm777, %v725, 0
      %781 = vmatprep.subr.bf16.mxu0 0
      %782 = vmatpush1.bf16.msra.mxu0 %v723
      %783 = vmatprep.subr.bf16.mxu0 0
      %784 = vmatpush1.bf16.msra.mxu0 %v724
      %785 = vmatprep.subr.bf16.mxu0 0
      %786 = vmatpush1.bf16.msra.mxu0 %v779
      %787 = vmatprep.subr.bf16.mxu0 0
      %788 = vmatpush1.bf16.msra.mxu0 0
      %789 = vmatprep.subr.bf16.mxu0 0
      %790 = vmatpush1.bf16.msra.mxu0 0
      %791 = vmatprep.subr.bf16.mxu0 0
      %792 = vmatpush1.bf16.msra.mxu0 0
      %793 = vmatprep.subr.bf16.mxu0 0
      %794 = vmatpush1.bf16.msra.mxu0 0
      %795 = vmatprep.subr.bf16.mxu0 0
      %796 = vmatpush1.bf16.msra.mxu0 0
      %797 = vmatprep.subr.bf16.mxu0 0
      %798 = vmatpush1.bf16.msra.mxu0 0
      %799 = vmatprep.subr.bf16.mxu0 0
      %800 = vmatpush1.bf16.msra.mxu0 0
      %801 = vmatprep.subr.bf16.mxu0 0
      %802 = vmatpush1.bf16.msra.mxu0 0
      %803 = vmatprep.subr.bf16.mxu0 0
      %804 = vmatpush1.bf16.msra.mxu0 0
      %805 = vmatprep.subr.bf16.mxu0 0
      %806 = vmatpush1.bf16.msra.mxu0 0
      %807 = vmatprep.subr.bf16.mxu0 0
      %808 = vmatpush1.bf16.msra.mxu0 0
      %809 = vmatprep.subr.bf16.mxu0 0
      %810 = vmatpush1.bf16.msra.mxu0 0
      %811 = vmatprep.subr.bf16.mxu0 0
      %812 = vmatpush1.bf16.msra.mxu0 0
      %813 = vmatprep.mubr.bf16.mxu0 0
      %814 = vmatmul.mubr.bf16.gmra.mrb[0].mxu0 %v730
      %v815 = vpop.f32.mrb[0].mxu0
      %v816 = vadd.f32 0.0, %v815
      %v817 = vpop.f32.mrb[0].mxu0
      %v818 = vpop.f32.mrb[0].mxu0
      %v819 = vadd.f32 0.0, %v818
      %v820 = vpop.f32.mrb[0].mxu0
      %821 = vmatprep.mubr.bf16.mxu0 0
      %822 = vmatmul.mubr.bf16.gmra.mrb[0].mxu0 %v733
      %v823 = vpop.f32.mrb[0].mxu0
      %v824 = vadd.f32 0.0, %v823
      %v825 = vpop.f32.mrb[0].mxu0
      %v826 = vpop.f32.mrb[0].mxu0
      %v827 = vadd.f32 0.0, %v826
      %v828 = vpop.f32.mrb[0].mxu0
      %829 = vmatprep.mubr.bf16.mxu0 0
      %830 = vmatmul.mubr.bf16.gmra.mrb[0].mxu0 %v736
      %v831 = vpop.f32.mrb[0].mxu0
      %v832 = vadd.f32 0.0, %v831
      %v833 = vpop.f32.mrb[0].mxu0
      %v834 = vpop.f32.mrb[0].mxu0
      %v835 = vadd.f32 0.0, %v834
      %v836 = vpop.f32.mrb[0].mxu0
      %837 = vmatprep.mubr.bf16.mxu0 0
      %838 = vmatmul.mubr.bf16.gmra.mrb[0].mxu0 %v739
      %v839 = vpop.f32.mrb[0].mxu0
      %v840 = vadd.f32 0.0, %v839
      %v841 = vpop.f32.mrb[0].mxu0
      %v842 = vpop.f32.mrb[0].mxu0
      %v843 = vadd.f32 0.0, %v842
      %v844 = vpop.f32.mrb[0].mxu0
      %845 = vmatprep.mubr.bf16.mxu0 0
      %846 = vmatmul.mubr.bf16.gmra.mrb[0].mxu0 %v742
      %v847 = vpop.f32.mrb[0].mxu0
      %v848 = vadd.f32 0.0, %v847
      %v849 = vpop.f32.mrb[0].mxu0
      %v850 = vpop.f32.mrb[0].mxu0
      %v851 = vadd.f32 0.0, %v850
      %v852 = vpop.f32.mrb[0].mxu0
      %853 = vmatprep.mubr.bf16.mxu0 0
      %854 = vmatmul.mubr.bf16.gmra.mrb[0].mxu0 %v745
      %v855 = vpop.f32.mrb[0].mxu0
      %v856 = vadd.f32 0.0, %v855
      %v857 = vpop.f32.mrb[0].mxu0
      %v858 = vpop.f32.mrb[0].mxu0
      %v859 = vadd.f32 0.0, %v858
      %v860 = vpop.f32.mrb[0].mxu0
      %861 = vmatprep.mubr.bf16.mxu0 0
      %862 = vmatmul.mubr.bf16.gmra.mrb[0].mxu0 %v748
      %v863 = vpop.f32.mrb[0].mxu0
      %v864 = vadd.f32 0.0, %v863
      %v865 = vpop.f32.mrb[0].mxu0
      %v866 = vpop.f32.mrb[0].mxu0
      %v867 = vadd.f32 0.0, %v866
      %v868 = vpop.f32.mrb[0].mxu0
      %869 = vmatprep.mubr.bf16.mxu0 0
      %870 = vmatmul.mubr.bf16.gmra.mrb[0].mxu0 %v751
      %v871 = vpop.f32.mrb[0].mxu0
      %v872 = vadd.f32 0.0, %v871
      %v873 = vpop.f32.mrb[0].mxu0
      %v874 = vpop.f32.mrb[0].mxu0
      %v875 = vadd.f32 0.0, %v874
      %v876 = vpop.f32.mrb[0].mxu0
      %877 = vmatprep.mubr.bf16.mxu0 0
      %878 = vmatmul.mubr.bf16.gmra.mrb[0].mxu0 %v754
      %v879 = vpop.f32.mrb[0].mxu0
      %v880 = vadd.f32 0.0, %v879
      %v881 = vpop.f32.mrb[0].mxu0
      %v882 = vpop.f32.mrb[0].mxu0
      %v883 = vadd.f32 0.0, %v882
      %v884 = vpop.f32.mrb[0].mxu0
      %885 = vmatprep.mubr.bf16.mxu0 0
      %886 = vmatmul.mubr.bf16.gmra.mrb[0].mxu0 %v757
      %v887 = vpop.f32.mrb[0].mxu0
      %v888 = vadd.f32 0.0, %v887
      %v889 = vpop.f32.mrb[0].mxu0
      %v890 = vpop.f32.mrb[0].mxu0
      %v891 = vadd.f32 0.0, %v890
      %v892 = vpop.f32.mrb[0].mxu0
      %893 = vmatprep.mubr.bf16.mxu0 0
      %894 = vmatmul.mubr.bf16.gmra.mrb[0].mxu0 %v760
      %v895 = vpop.f32.mrb[0].mxu0
      %v896 = vadd.f32 0.0, %v895
      %v897 = vpop.f32.mrb[0].mxu0
      %v898 = vpop.f32.mrb[0].mxu0
      %v899 = vadd.f32 0.0, %v898
      %v900 = vpop.f32.mrb[0].mxu0
      %901 = vmatprep.mubr.bf16.mxu0 0
      %902 = vmatmul.mubr.bf16.gmra.mrb[0].mxu0 %v763
      %v903 = vpop.f32.mrb[0].mxu0
      %v904 = vadd.f32 0.0, %v903
      %v905 = vpop.f32.mrb[0].mxu0
      %v906 = vpop.f32.mrb[0].mxu0
      %v907 = vadd.f32 0.0, %v906
      %v908 = vpop.f32.mrb[0].mxu0
      %909 = vmatprep.mubr.bf16.mxu0 0
      %910 = vmatmul.mubr.bf16.gmra.mrb[0].mxu0 %v766
      %v911 = vpop.f32.mrb[0].mxu0
      %v912 = vadd.f32 0.0, %v911
      %v913 = vpop.f32.mrb[0].mxu0
      %v914 = vpop.f32.mrb[0].mxu0
      %v915 = vadd.f32 0.0, %v914
      %v916 = vpop.f32.mrb[0].mxu0
      %917 = vmatprep.mubr.bf16.mxu0 0
      %918 = vmatmul.mubr.bf16.gmra.mrb[0].mxu0 %v769
      %v919 = vpop.f32.mrb[0].mxu0
      %v920 = vadd.f32 0.0, %v919
      %v921 = vpop.f32.mrb[0].mxu0
      %v922 = vpop.f32.mrb[0].mxu0
      %v923 = vadd.f32 0.0, %v922
      %v924 = vpop.f32.mrb[0].mxu0
      %925 = vmatprep.mubr.bf16.mxu0 0
      %926 = vmatmul.mubr.bf16.gmra.mrb[0].mxu0 %v772
      %v927 = vpop.f32.mrb[0].mxu0
      %v928 = vadd.f32 0.0, %v927
      %v929 = vpop.f32.mrb[0].mxu0
      %v930 = vpop.f32.mrb[0].mxu0
      %v931 = vadd.f32 0.0, %v930
      %v932 = vpop.f32.mrb[0].mxu0
      %933 = vmatprep.mubr.bf16.mxu0 0
      %934 = vmatmul.mubr.bf16.gmra.mrb[0].mxu0 %v775
      %v935 = vpop.f32.mrb[0].mxu0
      %v936 = vadd.f32 0.0, %v935
      %v937 = vpop.f32.mrb[0].mxu0
      %v938 = vpop.f32.mrb[0].mxu0
      %v939 = vadd.f32 0.0, %v938
      %v940 = vpop.f32.mrb[0].mxu0
      %941 = vdwg.mxu0
      %v974 = vunpack.c.l.b16 %v219
      %v975 = vunpack.c.l.b16 %v220
      %v976 = vunpack.c.l.b16 %v221
      %v977 = vunpack.c.l.b16 %v222
      %v978 = vunpack.c.l.b16 %v223
      %v979 = vunpack.c.l.b16 %v224
      %v980 = vunpack.c.l.b16 %v225
      %v981 = vunpack.c.l.b16 %v226
      %v982 = vunpack.c.l.b16 %v227
      %v983 = vunpack.c.l.b16 %v228
      %v984 = vunpack.c.l.b16 %v229
      %v985 = vunpack.c.l.b16 %v230
      %v986 = vunpack.c.l.b16 %v231
      %v987 = vunpack.c.l.b16 %v232
      %v988 = vunpack.c.l.b16 %v233
      %v989 = vunpack.c.l.b16 %v234
      %v990 = vunpack.c.l.b16 %v235
      %v991 = vunpack.c.l.b16 %v236
      %v992 = vunpack.c.l.b16 %v237
      %v993 = vunpack.c.l.b16 %v238
      %v994 = vunpack.c.l.b16 %v239
      %v995 = vunpack.c.l.b16 %v240
      %v996 = vunpack.c.l.b16 %v241
      %v997 = vunpack.c.l.b16 %v242
      %v998 = vunpack.c.l.b16 %v243
      %v999 = vunpack.c.l.b16 %v244
      %v1000 = vunpack.c.l.b16 %v245
      %v1001 = vunpack.c.l.b16 %v246
      %v1002 = vunpack.c.l.b16 %v247
      %v1003 = vunpack.c.l.b16 %v248
      %v1004 = vunpack.c.l.b16 %v249
      %v1005 = vunpack.c.l.b16 %v250
      %v1006 = vpack.c.b16 %v975, %v974
      %v1007 = vpack.c.b16 %v977, %v976
      %v1008 = vpack.c.b16 %v979, %v978
      %v1009 = vpack.c.b16 %v981, %v980
      %v1010 = vpack.c.b16 %v983, %v982
      %v1011 = vpack.c.b16 %v985, %v984
      %v1012 = vpack.c.b16 %v987, %v986
      %v1013 = vpack.c.b16 %v989, %v988
      %v1014 = vpack.c.b16 %v991, %v990
      %v1015 = vpack.c.b16 %v993, %v992
      %v1016 = vpack.c.b16 %v995, %v994
      %v1017 = vpack.c.b16 %v997, %v996
      %v1018 = vpack.c.b16 %v999, %v998
      %v1019 = vpack.c.b16 %v1001, %v1000
      %v1020 = vpack.c.b16 %v1003, %v1002
      %v1021 = vpack.c.b16 %v1005, %v1004
      %v1027 = vunpack.c.l.b16 %v251
      %v1028 = vunpack.c.l.b16 %v252
      %v1029 = vunpack.c.l.b16 %v253
      %v1030 = vunpack.c.l.b16 %v254
      %v1031 = vunpack.c.l.b16 %v255
      %v1032 = vpack.c.b16 %v1028, %v1027
      %v1033 = vpack.c.b16 %v1030, %v1029
      %v1034 = vpack.c.b16 %v1031, %v1031
      %v1038 = vsel %vm728, %v1006, 0
      %v1041 = vsel %vm728, %v1007, 0
      %v1044 = vsel %vm728, %v1008, 0
      %v1047 = vsel %vm728, %v1009, 0
      %v1050 = vsel %vm728, %v1010, 0
      %v1053 = vsel %vm728, %v1011, 0
      %v1056 = vsel %vm728, %v1012, 0
      %v1059 = vsel %vm728, %v1013, 0
      %v1062 = vsel %vm728, %v1014, 0
      %v1065 = vsel %vm728, %v1015, 0
      %v1068 = vsel %vm728, %v1016, 0
      %v1071 = vsel %vm728, %v1017, 0
      %v1074 = vsel %vm728, %v1018, 0
      %v1077 = vsel %vm728, %v1019, 0
      %v1080 = vsel %vm728, %v1020, 0
      %v1083 = vsel %vm728, %v1021, 0
      %v1086 = vsel %vm777, %v1034, 0
      %1088 = vmatprep.subr.bf16.mxu0 0
      %1089 = vmatpush1.bf16.msra.mxu0 %v1032
      %1090 = vmatprep.subr.bf16.mxu0 0
      %1091 = vmatpush1.bf16.msra.mxu0 %v1033
      %1092 = vmatprep.subr.bf16.mxu0 0
      %1093 = vmatpush1.bf16.msra.mxu0 %v1086
      %1094 = vmatprep.subr.bf16.mxu0 0
      %1095 = vmatpush1.bf16.msra.mxu0 0
      %1096 = vmatprep.subr.bf16.mxu0 0
      %1097 = vmatpush1.bf16.msra.mxu0 0
      %1098 = vmatprep.subr.bf16.mxu0 0
      %1099 = vmatpush1.bf16.msra.mxu0 0
      %1100 = vmatprep.subr.bf16.mxu0 0
      %1101 = vmatpush1.bf16.msra.mxu0 0
      %1102 = vmatprep.subr.bf16.mxu0 0
      %1103 = vmatpush1.bf16.msra.mxu0 0
      %1104 = vmatprep.subr.bf16.mxu0 0
      %1105 = vmatpush1.bf16.msra.mxu0 0
      %1106 = vmatprep.subr.bf16.mxu0 0
      %1107 = vmatpush1.bf16.msra.mxu0 0
      %1108 = vmatprep.subr.bf16.mxu0 0
      %1109 = vmatpush1.bf16.msra.mxu0 0
      %1110 = vmatprep.subr.bf16.mxu0 0
      %1111 = vmatpush1.bf16.msra.mxu0 0
      %1112 = vmatprep.subr.bf16.mxu0 0
      %1113 = vmatpush1.bf16.msra.mxu0 0
      %1114 = vmatprep.subr.bf16.mxu0 0
      %1115 = vmatpush1.bf16.msra.mxu0 0
      %1116 = vmatprep.subr.bf16.mxu0 0
      %1117 = vmatpush1.bf16.msra.mxu0 0
      %1118 = vmatprep.subr.bf16.mxu0 0
      %1119 = vmatpush1.bf16.msra.mxu0 0
      %1120 = vmatprep.mubr.bf16.mxu0 0
      %1121 = vmatmul.mubr.bf16.gmra.mrb[0].mxu0 %v1038
      %v1122 = vpop.f32.mrb[0].mxu0
      %v1123 = vadd.f32 %v816, %v1122
      %v1124 = vpop.f32.mrb[0].mxu0
      %v1125 = vpop.f32.mrb[0].mxu0
      %v1126 = vadd.f32 %v819, %v1125
      %v1127 = vpop.f32.mrb[0].mxu0
      %1128 = vmatprep.mubr.bf16.mxu0 0
      %1129 = vmatmul.mubr.bf16.gmra.mrb[0].mxu0 %v1041
      %v1130 = vpop.f32.mrb[0].mxu0
      %v1131 = vadd.f32 %v824, %v1130
      %v1132 = vpop.f32.mrb[0].mxu0
      %v1133 = vpop.f32.mrb[0].mxu0
      %v1134 = vadd.f32 %v827, %v1133
      %v1135 = vpop.f32.mrb[0].mxu0
      %1136 = vmatprep.mubr.bf16.mxu0 0
      %1137 = vmatmul.mubr.bf16.gmra.mrb[0].mxu0 %v1044
      %v1138 = vpop.f32.mrb[0].mxu0
      %v1139 = vadd.f32 %v832, %v1138
      %v1140 = vpop.f32.mrb[0].mxu0
      %v1141 = vpop.f32.mrb[0].mxu0
      %v1142 = vadd.f32 %v835, %v1141
      %v1143 = vpop.f32.mrb[0].mxu0
      %1144 = vmatprep.mubr.bf16.mxu0 0
      %1145 = vmatmul.mubr.bf16.gmra.mrb[0].mxu0 %v1047
      %v1146 = vpop.f32.mrb[0].mxu0
      %v1147 = vadd.f32 %v840, %v1146
      %v1148 = vpop.f32.mrb[0].mxu0
      %v1149 = vpop.f32.mrb[0].mxu0
      %v1150 = vadd.f32 %v843, %v1149
      %v1151 = vpop.f32.mrb[0].mxu0
      %1152 = vmatprep.mubr.bf16.mxu0 0
      %1153 = vmatmul.mubr.bf16.gmra.mrb[0].mxu0 %v1050
      %v1154 = vpop.f32.mrb[0].mxu0
      %v1155 = vadd.f32 %v848, %v1154
      %v1156 = vpop.f32.mrb[0].mxu0
      %v1157 = vpop.f32.mrb[0].mxu0
      %v1158 = vadd.f32 %v851, %v1157
      %v1159 = vpop.f32.mrb[0].mxu0
      %1160 = vmatprep.mubr.bf16.mxu0 0
      %1161 = vmatmul.mubr.bf16.gmra.mrb[0].mxu0 %v1053
      %v1162 = vpop.f32.mrb[0].mxu0
      %v1163 = vadd.f32 %v856, %v1162
      %v1164 = vpop.f32.mrb[0].mxu0
      %v1165 = vpop.f32.mrb[0].mxu0
      %v1166 = vadd.f32 %v859, %v1165
      %v1167 = vpop.f32.mrb[0].mxu0
      %1168 = vmatprep.mubr.bf16.mxu0 0
      %1169 = vmatmul.mubr.bf16.gmra.mrb[0].mxu0 %v1056
      %v1170 = vpop.f32.mrb[0].mxu0
      %v1171 = vadd.f32 %v864, %v1170
      %v1172 = vpop.f32.mrb[0].mxu0
      %v1173 = vpop.f32.mrb[0].mxu0
      %v1174 = vadd.f32 %v867, %v1173
      %v1175 = vpop.f32.mrb[0].mxu0
      %1176 = vmatprep.mubr.bf16.mxu0 0
      %1177 = vmatmul.mubr.bf16.gmra.mrb[0].mxu0 %v1059
      %v1178 = vpop.f32.mrb[0].mxu0
      %v1179 = vadd.f32 %v872, %v1178
      %v1180 = vpop.f32.mrb[0].mxu0
      %v1181 = vpop.f32.mrb[0].mxu0
      %v1182 = vadd.f32 %v875, %v1181
      %v1183 = vpop.f32.mrb[0].mxu0
      %1184 = vmatprep.mubr.bf16.mxu0 0
      %1185 = vmatmul.mubr.bf16.gmra.mrb[0].mxu0 %v1062
      %v1186 = vpop.f32.mrb[0].mxu0
      %v1187 = vadd.f32 %v880, %v1186
      %v1188 = vpop.f32.mrb[0].mxu0
      %v1189 = vpop.f32.mrb[0].mxu0
      %v1190 = vadd.f32 %v883, %v1189
      %v1191 = vpop.f32.mrb[0].mxu0
      %1192 = vmatprep.mubr.bf16.mxu0 0
      %1193 = vmatmul.mubr.bf16.gmra.mrb[0].mxu0 %v1065
      %v1194 = vpop.f32.mrb[0].mxu0
      %v1195 = vadd.f32 %v888, %v1194
      %v1196 = vpop.f32.mrb[0].mxu0
      %v1197 = vpop.f32.mrb[0].mxu0
      %v1198 = vadd.f32 %v891, %v1197
      %v1199 = vpop.f32.mrb[0].mxu0
      %1200 = vmatprep.mubr.bf16.mxu0 0
      %1201 = vmatmul.mubr.bf16.gmra.mrb[0].mxu0 %v1068
      %v1202 = vpop.f32.mrb[0].mxu0
      %v1203 = vadd.f32 %v896, %v1202
      %v1204 = vpop.f32.mrb[0].mxu0
      %v1205 = vpop.f32.mrb[0].mxu0
      %v1206 = vadd.f32 %v899, %v1205
      %v1207 = vpop.f32.mrb[0].mxu0
      %1208 = vmatprep.mubr.bf16.mxu0 0
      %1209 = vmatmul.mubr.bf16.gmra.mrb[0].mxu0 %v1071
      %v1210 = vpop.f32.mrb[0].mxu0
      %v1211 = vadd.f32 %v904, %v1210
      %v1212 = vpop.f32.mrb[0].mxu0
      %v1213 = vpop.f32.mrb[0].mxu0
      %v1214 = vadd.f32 %v907, %v1213
      %v1215 = vpop.f32.mrb[0].mxu0
      %1216 = vmatprep.mubr.bf16.mxu0 0
      %1217 = vmatmul.mubr.bf16.gmra.mrb[0].mxu0 %v1074
      %v1218 = vpop.f32.mrb[0].mxu0
      %v1219 = vadd.f32 %v912, %v1218
      %v1220 = vpop.f32.mrb[0].mxu0
      %v1221 = vpop.f32.mrb[0].mxu0
      %v1222 = vadd.f32 %v915, %v1221
      %v1223 = vpop.f32.mrb[0].mxu0
      %1224 = vmatprep.mubr.bf16.mxu0 0
      %1225 = vmatmul.mubr.bf16.gmra.mrb[0].mxu0 %v1077
      %v1226 = vpop.f32.mrb[0].mxu0
      %v1227 = vadd.f32 %v920, %v1226
      %v1228 = vpop.f32.mrb[0].mxu0
      %v1229 = vpop.f32.mrb[0].mxu0
      %v1230 = vadd.f32 %v923, %v1229
      %v1231 = vpop.f32.mrb[0].mxu0
      %1232 = vmatprep.mubr.bf16.mxu0 0
      %1233 = vmatmul.mubr.bf16.gmra.mrb[0].mxu0 %v1080
      %v1234 = vpop.f32.mrb[0].mxu0
      %v1235 = vadd.f32 %v928, %v1234
      %v1236 = vpop.f32.mrb[0].mxu0
      %v1237 = vpop.f32.mrb[0].mxu0
      %v1238 = vadd.f32 %v931, %v1237
      %v1239 = vpop.f32.mrb[0].mxu0
      %1240 = vmatprep.mubr.bf16.mxu0 0
      %1241 = vmatmul.mubr.bf16.gmra.mrb[0].mxu0 %v1083
      %v1242 = vpop.f32.mrb[0].mxu0
      %v1243 = vadd.f32 %v936, %v1242
      %v1244 = vpop.f32.mrb[0].mxu0
      %v1245 = vpop.f32.mrb[0].mxu0
      %v1246 = vadd.f32 %v939, %v1245
      %v1247 = vpop.f32.mrb[0].mxu0
      %1248 = vdwg.mxu0
      %v1249 = vld [vmem:[%s207] sm:$0xe]
      %v1250 = vld [vmem:[%s207 + $0xc] sm:$0xe]
      %v1251 = vld [vmem:[%s207 + $0x18] sm:$0xe]
      %v1252 = vld [vmem:[%s207 + $0x24] sm:$0xe]
      %v1253 = vld [vmem:[%s207 + $0x30] sm:$0xe]
      %v1254 = vld [vmem:[%s207 + $0x3c] sm:$0xe]
      %v1255 = vld [vmem:[%s207 + $0x48] sm:$0xe]
      %v1256 = vld [vmem:[%s207 + $0x54] sm:$0xe]
      %v1257 = vld [vmem:[%s207 + $0x60] sm:$0xe]
      %v1258 = vld [vmem:[%s207 + $0x6c] sm:$0xe]
      %v1259 = vld [vmem:[%s207 + $0x78] sm:$0xe]
      %v1260 = vld [vmem:[%s207 + $0x84] sm:$0xe]
      %v1261 = vld [vmem:[%s207 + $0x90] sm:$0xe]
      %v1262 = vld [vmem:[%s207 + $0x9c] sm:$0xe]
      %v1263 = vld [vmem:[%s207 + $0xa8] sm:$0xe]
      %v1264 = vld [vmem:[%s207 + $0xb4] sm:$0xe]
      %vm1297 = vcmask 1042432
      %vm1298 = vcmask 1046532
      %vm1299 = vmor %vm1297, %vm1298
      %v1300 = vrot.slane %v1249, 5
      %v1301 = vrot.slane %v1300, 4
      %v1302 = vrot.slane %v220, 5
      %v1303 = vsel %vm1299, %v1301, %v1302
      %v1304 = vrot.slane %v1302, 4
      %v1305 = vrot.slane %v256, 5
      %v1306 = vsel %vm1299, %v1304, %v1305
      %v1307 = vrot.slane %v1250, 5
      %v1308 = vrot.slane %v1307, 4
      %v1309 = vrot.slane %v222, 5
      %v1310 = vsel %vm1299, %v1308, %v1309
      %v1311 = vrot.slane %v1309, 4
      %v1312 = vrot.slane %v257, 5
      %v1313 = vsel %vm1299, %v1311, %v1312
      %v1314 = vrot.slane %v1251, 5
      %v1315 = vrot.slane %v1314, 4
      %v1316 = vrot.slane %v224, 5
      %v1317 = vsel %vm1299, %v1315, %v1316
      %v1318 = vrot.slane %v1316, 4
      %v1319 = vrot.slane %v258, 5
      %v1320 = vsel %vm1299, %v1318, %v1319
      %v1321 = vrot.slane %v1252, 5
      %v1322 = vrot.slane %v1321, 4
      %v1323 = vrot.slane %v226, 5
      %v1324 = vsel %vm1299, %v1322, %v1323
      %v1325 = vrot.slane %v1323, 4
      %v1326 = vrot.slane %v259, 5
      %v1327 = vsel %vm1299, %v1325, %v1326
      %v1328 = vrot.slane %v1253, 5
      %v1329 = vrot.slane %v1328, 4
      %v1330 = vrot.slane %v228, 5
      %v1331 = vsel %vm1299, %v1329, %v1330
      %v1332 = vrot.slane %v1330, 4
      %v1333 = vrot.slane %v260, 5
      %v1334 = vsel %vm1299, %v1332, %v1333
      %v1335 = vrot.slane %v1254, 5
      %v1336 = vrot.slane %v1335, 4
      %v1337 = vrot.slane %v230, 5
      %v1338 = vsel %vm1299, %v1336, %v1337
      %v1339 = vrot.slane %v1337, 4
      %v1340 = vrot.slane %v261, 5
      %v1341 = vsel %vm1299, %v1339, %v1340
      %v1342 = vrot.slane %v1255, 5
      %v1343 = vrot.slane %v1342, 4
      %v1344 = vrot.slane %v232, 5
      %v1345 = vsel %vm1299, %v1343, %v1344
      %v1346 = vrot.slane %v1344, 4
      %v1347 = vrot.slane %v262, 5
      %v1348 = vsel %vm1299, %v1346, %v1347
      %v1349 = vrot.slane %v1256, 5
      %v1350 = vrot.slane %v1349, 4
      %v1351 = vrot.slane %v234, 5
      %v1352 = vsel %vm1299, %v1350, %v1351
      %v1353 = vrot.slane %v1351, 4
      %v1354 = vrot.slane %v263, 5
      %v1355 = vsel %vm1299, %v1353, %v1354
      %v1356 = vrot.slane %v1257, 5
      %v1357 = vrot.slane %v1356, 4
      %v1358 = vrot.slane %v236, 5
      %v1359 = vsel %vm1299, %v1357, %v1358
      %v1360 = vrot.slane %v1358, 4
      %v1361 = vrot.slane %v264, 5
      %v1362 = vsel %vm1299, %v1360, %v1361
      %v1363 = vrot.slane %v1258, 5
      %v1364 = vrot.slane %v1363, 4
      %v1365 = vrot.slane %v238, 5
      %v1366 = vsel %vm1299, %v1364, %v1365
      %v1367 = vrot.slane %v1365, 4
      %v1368 = vrot.slane %v265, 5
      %v1369 = vsel %vm1299, %v1367, %v1368
      %v1370 = vrot.slane %v1259, 5
      %v1371 = vrot.slane %v1370, 4
      %v1372 = vrot.slane %v240, 5
      %v1373 = vsel %vm1299, %v1371, %v1372
      %v1374 = vrot.slane %v1372, 4
      %v1375 = vrot.slane %v266, 5
      %v1376 = vsel %vm1299, %v1374, %v1375
      %v1377 = vrot.slane %v1260, 5
      %v1378 = vrot.slane %v1377, 4
      %v1379 = vrot.slane %v242, 5
      %v1380 = vsel %vm1299, %v1378, %v1379
      %v1381 = vrot.slane %v1379, 4
      %v1382 = vrot.slane %v267, 5
      %v1383 = vsel %vm1299, %v1381, %v1382
      %v1384 = vrot.slane %v1261, 5
      %v1385 = vrot.slane %v1384, 4
      %v1386 = vrot.slane %v244, 5
      %v1387 = vsel %vm1299, %v1385, %v1386
      %v1388 = vrot.slane %v1386, 4
      %v1389 = vrot.slane %v268, 5
      %v1390 = vsel %vm1299, %v1388, %v1389
      %v1391 = vrot.slane %v1262, 5
      %v1392 = vrot.slane %v1391, 4
      %v1393 = vrot.slane %v246, 5
      %v1394 = vsel %vm1299, %v1392, %v1393
      %v1395 = vrot.slane %v1393, 4
      %v1396 = vrot.slane %v269, 5
      %v1397 = vsel %vm1299, %v1395, %v1396
      %v1398 = vrot.slane %v1263, 5
      %v1399 = vrot.slane %v1398, 4
      %v1400 = vrot.slane %v248, 5
      %v1401 = vsel %vm1299, %v1399, %v1400
      %v1402 = vrot.slane %v1400, 4
      %v1403 = vrot.slane %v270, 5
      %v1404 = vsel %vm1299, %v1402, %v1403
      %v1405 = vrot.slane %v1264, 5
      %v1406 = vrot.slane %v1405, 4
      %v1407 = vrot.slane %v250, 5
      %v1408 = vsel %vm1299, %v1406, %v1407
      %v1409 = vrot.slane %v1407, 4
      %v1410 = vrot.slane %v271, 5
      %v1411 = vsel %vm1299, %v1409, %v1410
      %s1412 = scalar_lea.vmem %s1, 40
      %v1413 = vld [vmem:[%s1412] sm:$0xf]
      %v1414 = vld [vmem:[%s1412 + $0x4] sm:$0xf]
      %v1415 = vld [vmem:[%s1412 + $0x8] sm:$0xf]
      %v1416 = vld [vmem:[%s1412 + $0xc] sm:$0xf]
      %v1417 = vld [vmem:[%s1412 + $0x10] sm:$0x3]
      %v1418 = vunpack.c.l.b16 %v1303
      %v1419 = vunpack.c.l.b16 %v1306
      %v1420 = vunpack.c.l.b16 %v1310
      %v1421 = vunpack.c.l.b16 %v1313
      %v1422 = vunpack.c.l.b16 %v1317
      %v1423 = vunpack.c.l.b16 %v1320
      %v1424 = vunpack.c.l.b16 %v1324
      %v1425 = vunpack.c.l.b16 %v1327
      %v1426 = vunpack.c.l.b16 %v1331
      %v1427 = vunpack.c.l.b16 %v1334
      %v1428 = vunpack.c.l.b16 %v1338
      %v1429 = vunpack.c.l.b16 %v1341
      %v1430 = vunpack.c.l.b16 %v1345
      %v1431 = vunpack.c.l.b16 %v1348
      %v1432 = vunpack.c.l.b16 %v1352
      %v1433 = vunpack.c.l.b16 %v1355
      %v1434 = vunpack.c.l.b16 %v1359
      %v1435 = vunpack.c.l.b16 %v1362
      %v1436 = vunpack.c.l.b16 %v1366
      %v1437 = vunpack.c.l.b16 %v1369
      %v1438 = vunpack.c.l.b16 %v1373
      %v1439 = vunpack.c.l.b16 %v1376
      %v1440 = vunpack.c.l.b16 %v1380
      %v1441 = vunpack.c.l.b16 %v1383
      %v1442 = vunpack.c.l.b16 %v1387
      %v1443 = vunpack.c.l.b16 %v1390
      %v1444 = vunpack.c.l.b16 %v1394
      %v1445 = vunpack.c.l.b16 %v1397
      %v1446 = vunpack.c.l.b16 %v1401
      %v1447 = vunpack.c.l.b16 %v1404
      %v1448 = vunpack.c.l.b16 %v1408
      %v1449 = vunpack.c.l.b16 %v1411
      %v1450 = vpack.c.b16 %v1419, %v1418
      %v1451 = vpack.c.b16 %v1421, %v1420
      %v1452 = vpack.c.b16 %v1423, %v1422
      %v1453 = vpack.c.b16 %v1425, %v1424
      %v1454 = vpack.c.b16 %v1427, %v1426
      %v1455 = vpack.c.b16 %v1429, %v1428
      %v1456 = vpack.c.b16 %v1431, %v1430
      %v1457 = vpack.c.b16 %v1433, %v1432
      %v1458 = vpack.c.b16 %v1435, %v1434
      %v1459 = vpack.c.b16 %v1437, %v1436
      %v1460 = vpack.c.b16 %v1439, %v1438
      %v1461 = vpack.c.b16 %v1441, %v1440
      %v1462 = vpack.c.b16 %v1443, %v1442
      %v1463 = vpack.c.b16 %v1445, %v1444
      %v1464 = vpack.c.b16 %v1447, %v1446
      %v1465 = vpack.c.b16 %v1449, %v1448
      %v1471 = vunpack.c.l.b16 %v1413
      %v1472 = vunpack.c.l.b16 %v1414
      %v1473 = vunpack.c.l.b16 %v1415
      %v1474 = vunpack.c.l.b16 %v1416
      %v1475 = vunpack.c.l.b16 %v1417
      %v1476 = vpack.c.b16 %v1472, %v1471
      %v1477 = vpack.c.b16 %v1474, %v1473
      %v1478 = vpack.c.b16 %v1475, %v1475
      %v1482 = vsel %vm728, %v1450, 0
      %v1485 = vsel %vm728, %v1451, 0
      %v1488 = vsel %vm728, %v1452, 0
      %v1491 = vsel %vm728, %v1453, 0
      %v1494 = vsel %vm728, %v1454, 0
      %v1497 = vsel %vm728, %v1455, 0
      %v1500 = vsel %vm728, %v1456, 0
      %v1503 = vsel %vm728, %v1457, 0
      %v1506 = vsel %vm728, %v1458, 0
      %v1509 = vsel %vm728, %v1459, 0
      %v1512 = vsel %vm728, %v1460, 0
      %v1515 = vsel %vm728, %v1461, 0
      %v1518 = vsel %vm728, %v1462, 0
      %v1521 = vsel %vm728, %v1463, 0
      %v1524 = vsel %vm728, %v1464, 0
      %v1527 = vsel %vm728, %v1465, 0
      %v1530 = vsel %vm777, %v1478, 0
      %1532 = vmatprep.subr.bf16.mxu0 0
      %1533 = vmatpush1.bf16.msra.mxu0 %v1476
      %1534 = vmatprep.subr.bf16.mxu0 0
      %1535 = vmatpush1.bf16.msra.mxu0 %v1477
      %1536 = vmatprep.subr.bf16.mxu0 0
      %1537 = vmatpush1.bf16.msra.mxu0 %v1530
      %1538 = vmatprep.subr.bf16.mxu0 0
      %1539 = vmatpush1.bf16.msra.mxu0 0
      %1540 = vmatprep.subr.bf16.mxu0 0
      %1541 = vmatpush1.bf16.msra.mxu0 0
      %1542 = vmatprep.subr.bf16.mxu0 0
      %1543 = vmatpush1.bf16.msra.mxu0 0
      %1544 = vmatprep.subr.bf16.mxu0 0
      %1545 = vmatpush1.bf16.msra.mxu0 0
      %1546 = vmatprep.subr.bf16.mxu0 0
      %1547 = vmatpush1.bf16.msra.mxu0 0
      %1548 = vmatprep.subr.bf16.mxu0 0
      %1549 = vmatpush1.bf16.msra.mxu0 0
      %1550 = vmatprep.subr.bf16.mxu0 0
      %1551 = vmatpush1.bf16.msra.mxu0 0
      %1552 = vmatprep.subr.bf16.mxu0 0
      %1553 = vmatpush1.bf16.msra.mxu0 0
      %1554 = vmatprep.subr.bf16.mxu0 0
      %1555 = vmatpush1.bf16.msra.mxu0 0
      %1556 = vmatprep.subr.bf16.mxu0 0
      %1557 = vmatpush1.bf16.msra.mxu0 0
      %1558 = vmatprep.subr.bf16.mxu0 0
      %1559 = vmatpush1.bf16.msra.mxu0 0
      %1560 = vmatprep.subr.bf16.mxu0 0
      %1561 = vmatpush1.bf16.msra.mxu0 0
      %1562 = vmatprep.subr.bf16.mxu0 0
      %1563 = vmatpush1.bf16.msra.mxu0 0
      %1564 = vmatprep.mubr.bf16.mxu0 0
      %1565 = vmatmul.mubr.bf16.gmra.mrb[0].mxu0 %v1482
      %v1566 = vpop.f32.mrb[0].mxu0
      %v1567 = vadd.f32 0.0, %v1566
      %v1568 = vpop.f32.mrb[0].mxu0
      %v1569 = vpop.f32.mrb[0].mxu0
      %v1570 = vadd.f32 0.0, %v1569
      %v1571 = vpop.f32.mrb[0].mxu0
      %1572 = vmatprep.mubr.bf16.mxu0 0
      %1573 = vmatmul.mubr.bf16.gmra.mrb[0].mxu0 %v1485
      %v1574 = vpop.f32.mrb[0].mxu0
      %v1575 = vadd.f32 0.0, %v1574
      %v1576 = vpop.f32.mrb[0].mxu0
      %v1577 = vpop.f32.mrb[0].mxu0
      %v1578 = vadd.f32 0.0, %v1577
      %v1579 = vpop.f32.mrb[0].mxu0
      %1580 = vmatprep.mubr.bf16.mxu0 0
      %1581 = vmatmul.mubr.bf16.gmra.mrb[0].mxu0 %v1488
      %v1582 = vpop.f32.mrb[0].mxu0
      %v1583 = vadd.f32 0.0, %v1582
      %v1584 = vpop.f32.mrb[0].mxu0
      %v1585 = vpop.f32.mrb[0].mxu0
      %v1586 = vadd.f32 0.0, %v1585
      %v1587 = vpop.f32.mrb[0].mxu0
      %1588 = vmatprep.mubr.bf16.mxu0 0
      %1589 = vmatmul.mubr.bf16.gmra.mrb[0].mxu0 %v1491
      %v1590 = vpop.f32.mrb[0].mxu0
      %v1591 = vadd.f32 0.0, %v1590
      %v1592 = vpop.f32.mrb[0].mxu0
      %v1593 = vpop.f32.mrb[0].mxu0
      %v1594 = vadd.f32 0.0, %v1593
      %v1595 = vpop.f32.mrb[0].mxu0
      %1596 = vmatprep.mubr.bf16.mxu0 0
      %1597 = vmatmul.mubr.bf16.gmra.mrb[0].mxu0 %v1494
      %v1598 = vpop.f32.mrb[0].mxu0
      %v1599 = vadd.f32 0.0, %v1598
      %v1600 = vpop.f32.mrb[0].mxu0
      %v1601 = vpop.f32.mrb[0].mxu0
      %v1602 = vadd.f32 0.0, %v1601
      %v1603 = vpop.f32.mrb[0].mxu0
      %1604 = vmatprep.mubr.bf16.mxu0 0
      %1605 = vmatmul.mubr.bf16.gmra.mrb[0].mxu0 %v1497
      %v1606 = vpop.f32.mrb[0].mxu0
      %v1607 = vadd.f32 0.0, %v1606
      %v1608 = vpop.f32.mrb[0].mxu0
      %v1609 = vpop.f32.mrb[0].mxu0
      %v1610 = vadd.f32 0.0, %v1609
      %v1611 = vpop.f32.mrb[0].mxu0
      %1612 = vmatprep.mubr.bf16.mxu0 0
      %1613 = vmatmul.mubr.bf16.gmra.mrb[0].mxu0 %v1500
      %v1614 = vpop.f32.mrb[0].mxu0
      %v1615 = vadd.f32 0.0, %v1614
      %v1616 = vpop.f32.mrb[0].mxu0
      %v1617 = vpop.f32.mrb[0].mxu0
      %v1618 = vadd.f32 0.0, %v1617
      %v1619 = vpop.f32.mrb[0].mxu0
      %1620 = vmatprep.mubr.bf16.mxu0 0
      %1621 = vmatmul.mubr.bf16.gmra.mrb[0].mxu0 %v1503
      %v1622 = vpop.f32.mrb[0].mxu0
      %v1623 = vadd.f32 0.0, %v1622
      %v1624 = vpop.f32.mrb[0].mxu0
      %v1625 = vpop.f32.mrb[0].mxu0
      %v1626 = vadd.f32 0.0, %v1625
      %v1627 = vpop.f32.mrb[0].mxu0
      %1628 = vmatprep.mubr.bf16.mxu0 0
      %1629 = vmatmul.mubr.bf16.gmra.mrb[0].mxu0 %v1506
      %v1630 = vpop.f32.mrb[0].mxu0
      %v1631 = vadd.f32 0.0, %v1630
      %v1632 = vpop.f32.mrb[0].mxu0
      %v1633 = vpop.f32.mrb[0].mxu0
      %v1634 = vadd.f32 0.0, %v1633
      %v1635 = vpop.f32.mrb[0].mxu0
      %1636 = vmatprep.mubr.bf16.mxu0 0
      %1637 = vmatmul.mubr.bf16.gmra.mrb[0].mxu0 %v1509
      %v1638 = vpop.f32.mrb[0].mxu0
      %v1639 = vadd.f32 0.0, %v1638
      %v1640 = vpop.f32.mrb[0].mxu0
      %v1641 = vpop.f32.mrb[0].mxu0
      %v1642 = vadd.f32 0.0, %v1641
      %v1643 = vpop.f32.mrb[0].mxu0
      %1644 = vmatprep.mubr.bf16.mxu0 0
      %1645 = vmatmul.mubr.bf16.gmra.mrb[0].mxu0 %v1512
      %v1646 = vpop.f32.mrb[0].mxu0
      %v1647 = vadd.f32 0.0, %v1646
      %v1648 = vpop.f32.mrb[0].mxu0
      %v1649 = vpop.f32.mrb[0].mxu0
      %v1650 = vadd.f32 0.0, %v1649
      %v1651 = vpop.f32.mrb[0].mxu0
      %1652 = vmatprep.mubr.bf16.mxu0 0
      %1653 = vmatmul.mubr.bf16.gmra.mrb[0].mxu0 %v1515
      %v1654 = vpop.f32.mrb[0].mxu0
      %v1655 = vadd.f32 0.0, %v1654
      %v1656 = vpop.f32.mrb[0].mxu0
      %v1657 = vpop.f32.mrb[0].mxu0
      %v1658 = vadd.f32 0.0, %v1657
      %v1659 = vpop.f32.mrb[0].mxu0
      %1660 = vmatprep.mubr.bf16.mxu0 0
      %1661 = vmatmul.mubr.bf16.gmra.mrb[0].mxu0 %v1518
      %v1662 = vpop.f32.mrb[0].mxu0
      %v1663 = vadd.f32 0.0, %v1662
      %v1664 = vpop.f32.mrb[0].mxu0
      %v1665 = vpop.f32.mrb[0].mxu0
      %v1666 = vadd.f32 0.0, %v1665
      %v1667 = vpop.f32.mrb[0].mxu0
      %1668 = vmatprep.mubr.bf16.mxu0 0
      %1669 = vmatmul.mubr.bf16.gmra.mrb[0].mxu0 %v1521
      %v1670 = vpop.f32.mrb[0].mxu0
      %v1671 = vadd.f32 0.0, %v1670
      %v1672 = vpop.f32.mrb[0].mxu0
      %v1673 = vpop.f32.mrb[0].mxu0
      %v1674 = vadd.f32 0.0, %v1673
      %v1675 = vpop.f32.mrb[0].mxu0
      %1676 = vmatprep.mubr.bf16.mxu0 0
      %1677 = vmatmul.mubr.bf16.gmra.mrb[0].mxu0 %v1524
      %v1678 = vpop.f32.mrb[0].mxu0
      %v1679 = vadd.f32 0.0, %v1678
      %v1680 = vpop.f32.mrb[0].mxu0
      %v1681 = vpop.f32.mrb[0].mxu0
      %v1682 = vadd.f32 0.0, %v1681
      %v1683 = vpop.f32.mrb[0].mxu0
      %1684 = vmatprep.mubr.bf16.mxu0 0
      %1685 = vmatmul.mubr.bf16.gmra.mrb[0].mxu0 %v1527
      %v1686 = vpop.f32.mrb[0].mxu0
      %v1687 = vadd.f32 0.0, %v1686
      %v1688 = vpop.f32.mrb[0].mxu0
      %v1689 = vpop.f32.mrb[0].mxu0
      %v1690 = vadd.f32 0.0, %v1689
      %v1691 = vpop.f32.mrb[0].mxu0
      %1692 = vdwg.mxu0
      %v1693 = vadd.f32 %v1123, %v1567
      %v1694 = vadd.f32 %v1126, %v1570
      %v1695 = vadd.f32 %v1131, %v1575
      %v1696 = vadd.f32 %v1134, %v1578
      %v1697 = vadd.f32 %v1139, %v1583
      %v1698 = vadd.f32 %v1142, %v1586
      %v1699 = vadd.f32 %v1147, %v1591
      %v1700 = vadd.f32 %v1150, %v1594
      %v1701 = vadd.f32 %v1155, %v1599
      %v1702 = vadd.f32 %v1158, %v1602
      %v1703 = vadd.f32 %v1163, %v1607
      %v1704 = vadd.f32 %v1166, %v1610
      %v1705 = vadd.f32 %v1171, %v1615
      %v1706 = vadd.f32 %v1174, %v1618
      %v1707 = vadd.f32 %v1179, %v1623
      %v1708 = vadd.f32 %v1182, %v1626
      %v1709 = vadd.f32 %v1187, %v1631
      %v1710 = vadd.f32 %v1190, %v1634
      %v1711 = vadd.f32 %v1195, %v1639
      %v1712 = vadd.f32 %v1198, %v1642
      %v1713 = vadd.f32 %v1203, %v1647
      %v1714 = vadd.f32 %v1206, %v1650
      %v1715 = vadd.f32 %v1211, %v1655
      %v1716 = vadd.f32 %v1214, %v1658
      %v1717 = vadd.f32 %v1219, %v1663
      %v1718 = vadd.f32 %v1222, %v1666
      %v1719 = vadd.f32 %v1227, %v1671
      %v1720 = vadd.f32 %v1230, %v1674
      %v1721 = vadd.f32 %v1235, %v1679
      %v1722 = vadd.f32 %v1238, %v1682
      %v1723 = vadd.f32 %v1243, %v1687
      %v1724 = vadd.f32 %v1246, %v1690
      %s1725 = scalar_lea.vmem %s207, 12
      %v1726 = vld [vmem:[%s1725] sm:$0xf]
      %v1727 = vld [vmem:[%s1725 + $0x4] sm:$0xf]
      %v1728 = vld [vmem:[%s1725 + $0xc] sm:$0xf]
      %v1729 = vld [vmem:[%s1725 + $0x10] sm:$0xf]
      %v1730 = vld [vmem:[%s1725 + $0x18] sm:$0xf]
      %v1731 = vld [vmem:[%s1725 + $0x1c] sm:$0xf]
      %v1732 = vld [vmem:[%s1725 + $0x24] sm:$0xf]
      %v1733 = vld [vmem:[%s1725 + $0x28] sm:$0xf]
      %v1734 = vld [vmem:[%s1725 + $0x30] sm:$0xf]
      %v1735 = vld [vmem:[%s1725 + $0x34] sm:$0xf]
      %v1736 = vld [vmem:[%s1725 + $0x3c] sm:$0xf]
      %v1737 = vld [vmem:[%s1725 + $0x40] sm:$0xf]
      %v1738 = vld [vmem:[%s1725 + $0x48] sm:$0xf]
      %v1739 = vld [vmem:[%s1725 + $0x4c] sm:$0xf]
      %v1740 = vld [vmem:[%s1725 + $0x54] sm:$0xf]
      %v1741 = vld [vmem:[%s1725 + $0x58] sm:$0xf]
      %v1742 = vld [vmem:[%s1725 + $0x60] sm:$0xf]
      %v1743 = vld [vmem:[%s1725 + $0x64] sm:$0xf]
      %v1744 = vld [vmem:[%s1725 + $0x6c] sm:$0xf]
      %v1745 = vld [vmem:[%s1725 + $0x70] sm:$0xf]
      %v1746 = vld [vmem:[%s1725 + $0x78] sm:$0xf]
      %v1747 = vld [vmem:[%s1725 + $0x7c] sm:$0xf]
      %v1748 = vld [vmem:[%s1725 + $0x84] sm:$0xf]
      %v1749 = vld [vmem:[%s1725 + $0x88] sm:$0xf]
      %v1750 = vld [vmem:[%s1725 + $0x90] sm:$0xf]
      %v1751 = vld [vmem:[%s1725 + $0x94] sm:$0xf]
      %v1752 = vld [vmem:[%s1725 + $0x9c] sm:$0xf]
      %v1753 = vld [vmem:[%s1725 + $0xa0] sm:$0xf]
      %v1754 = vld [vmem:[%s1725 + $0xa8] sm:$0xf]
      %v1755 = vld [vmem:[%s1725 + $0xac] sm:$0xf]
      %v1756 = vld [vmem:[%s1725 + $0xb4] sm:$0xf]
      %v1757 = vld [vmem:[%s1725 + $0xb8] sm:$0xf]
      %s1758 = scalar_lea.vmem %s1, 60
      %v1759 = vld [vmem:[%s1758] sm:$0xf]
      %v1760 = vld [vmem:[%s1758 + $0x4] sm:$0xf]
      %v1761 = vld [vmem:[%s1758 + $0x8] sm:$0xf]
      %v1762 = vld [vmem:[%s1758 + $0xc] sm:$0xf]
      %v1763 = vld [vmem:[%s1758 + $0x10] sm:$0x3]
      %v1796 = vunpack.c.l.b16 %v1726
      %v1797 = vunpack.c.l.b16 %v1727
      %v1798 = vunpack.c.l.b16 %v1728
      %v1799 = vunpack.c.l.b16 %v1729
      %v1800 = vunpack.c.l.b16 %v1730
      %v1801 = vunpack.c.l.b16 %v1731
      %v1802 = vunpack.c.l.b16 %v1732
      %v1803 = vunpack.c.l.b16 %v1733
      %v1804 = vunpack.c.l.b16 %v1734
      %v1805 = vunpack.c.l.b16 %v1735
      %v1806 = vunpack.c.l.b16 %v1736
      %v1807 = vunpack.c.l.b16 %v1737
      %v1808 = vunpack.c.l.b16 %v1738
      %v1809 = vunpack.c.l.b16 %v1739
      %v1810 = vunpack.c.l.b16 %v1740
      %v1811 = vunpack.c.l.b16 %v1741
      %v1812 = vunpack.c.l.b16 %v1742
      %v1813 = vunpack.c.l.b16 %v1743
      %v1814 = vunpack.c.l.b16 %v1744
      %v1815 = vunpack.c.l.b16 %v1745
      %v1816 = vunpack.c.l.b16 %v1746
      %v1817 = vunpack.c.l.b16 %v1747
      %v1818 = vunpack.c.l.b16 %v1748
      %v1819 = vunpack.c.l.b16 %v1749
      %v1820 = vunpack.c.l.b16 %v1750
      %v1821 = vunpack.c.l.b16 %v1751
      %v1822 = vunpack.c.l.b16 %v1752
      %v1823 = vunpack.c.l.b16 %v1753
      %v1824 = vunpack.c.l.b16 %v1754
      %v1825 = vunpack.c.l.b16 %v1755
      %v1826 = vunpack.c.l.b16 %v1756
      %v1827 = vunpack.c.l.b16 %v1757
      %v1828 = vpack.c.b16 %v1797, %v1796
      %v1829 = vpack.c.b16 %v1799, %v1798
      %v1830 = vpack.c.b16 %v1801, %v1800
      %v1831 = vpack.c.b16 %v1803, %v1802
      %v1832 = vpack.c.b16 %v1805, %v1804
      %v1833 = vpack.c.b16 %v1807, %v1806
      %v1834 = vpack.c.b16 %v1809, %v1808
      %v1835 = vpack.c.b16 %v1811, %v1810
      %v1836 = vpack.c.b16 %v1813, %v1812
      %v1837 = vpack.c.b16 %v1815, %v1814
      %v1838 = vpack.c.b16 %v1817, %v1816
      %v1839 = vpack.c.b16 %v1819, %v1818
      %v1840 = vpack.c.b16 %v1821, %v1820
      %v1841 = vpack.c.b16 %v1823, %v1822
      %v1842 = vpack.c.b16 %v1825, %v1824
      %v1843 = vpack.c.b16 %v1827, %v1826
      %v1849 = vunpack.c.l.b16 %v1759
      %v1850 = vunpack.c.l.b16 %v1760
      %v1851 = vunpack.c.l.b16 %v1761
      %v1852 = vunpack.c.l.b16 %v1762
      %v1853 = vunpack.c.l.b16 %v1763
      %v1854 = vpack.c.b16 %v1850, %v1849
      %v1855 = vpack.c.b16 %v1852, %v1851
      %v1856 = vpack.c.b16 %v1853, %v1853
      %v1860 = vsel %vm728, %v1828, 0
      %v1863 = vsel %vm728, %v1829, 0
      %v1866 = vsel %vm728, %v1830, 0
      %v1869 = vsel %vm728, %v1831, 0
      %v1872 = vsel %vm728, %v1832, 0
      %v1875 = vsel %vm728, %v1833, 0
      %v1878 = vsel %vm728, %v1834, 0
      %v1881 = vsel %vm728, %v1835, 0
      %v1884 = vsel %vm728, %v1836, 0
      %v1887 = vsel %vm728, %v1837, 0
      %v1890 = vsel %vm728, %v1838, 0
      %v1893 = vsel %vm728, %v1839, 0
      %v1896 = vsel %vm728, %v1840, 0
      %v1899 = vsel %vm728, %v1841, 0
      %v1902 = vsel %vm728, %v1842, 0
      %v1905 = vsel %vm728, %v1843, 0
      %v1908 = vsel %vm777, %v1856, 0
      %1910 = vmatprep.subr.bf16.mxu0 0
      %1911 = vmatpush1.bf16.msra.mxu0 %v1854
      %1912 = vmatprep.subr.bf16.mxu0 0
      %1913 = vmatpush1.bf16.msra.mxu0 %v1855
      %1914 = vmatprep.subr.bf16.mxu0 0
      %1915 = vmatpush1.bf16.msra.mxu0 %v1908
      %1916 = vmatprep.subr.bf16.mxu0 0
      %1917 = vmatpush1.bf16.msra.mxu0 0
      %1918 = vmatprep.subr.bf16.mxu0 0
      %1919 = vmatpush1.bf16.msra.mxu0 0
      %1920 = vmatprep.subr.bf16.mxu0 0
      %1921 = vmatpush1.bf16.msra.mxu0 0
      %1922 = vmatprep.subr.bf16.mxu0 0
      %1923 = vmatpush1.bf16.msra.mxu0 0
      %1924 = vmatprep.subr.bf16.mxu0 0
      %1925 = vmatpush1.bf16.msra.mxu0 0
      %1926 = vmatprep.subr.bf16.mxu0 0
      %1927 = vmatpush1.bf16.msra.mxu0 0
      %1928 = vmatprep.subr.bf16.mxu0 0
      %1929 = vmatpush1.bf16.msra.mxu0 0
      %1930 = vmatprep.subr.bf16.mxu0 0
      %1931 = vmatpush1.bf16.msra.mxu0 0
      %1932 = vmatprep.subr.bf16.mxu0 0
      %1933 = vmatpush1.bf16.msra.mxu0 0
      %1934 = vmatprep.subr.bf16.mxu0 0
      %1935 = vmatpush1.bf16.msra.mxu0 0
      %1936 = vmatprep.subr.bf16.mxu0 0
      %1937 = vmatpush1.bf16.msra.mxu0 0
      %1938 = vmatprep.subr.bf16.mxu0 0
      %1939 = vmatpush1.bf16.msra.mxu0 0
      %1940 = vmatprep.subr.bf16.mxu0 0
      %1941 = vmatpush1.bf16.msra.mxu0 0
      %1942 = vmatprep.mubr.bf16.mxu0 0
      %1943 = vmatmul.mubr.bf16.gmra.mrb[0].mxu0 %v1860
      %v1944 = vpop.f32.mrb[0].mxu0
      %v1945 = vadd.f32 0.0, %v1944
      %v1946 = vpop.f32.mrb[0].mxu0
      %v1947 = vpop.f32.mrb[0].mxu0
      %v1948 = vadd.f32 0.0, %v1947
      %v1949 = vpop.f32.mrb[0].mxu0
      %1950 = vmatprep.mubr.bf16.mxu0 0
      %1951 = vmatmul.mubr.bf16.gmra.mrb[0].mxu0 %v1863
      %v1952 = vpop.f32.mrb[0].mxu0
      %v1953 = vadd.f32 0.0, %v1952
      %v1954 = vpop.f32.mrb[0].mxu0
      %v1955 = vpop.f32.mrb[0].mxu0
      %v1956 = vadd.f32 0.0, %v1955
      %v1957 = vpop.f32.mrb[0].mxu0
      %1958 = vmatprep.mubr.bf16.mxu0 0
      %1959 = vmatmul.mubr.bf16.gmra.mrb[0].mxu0 %v1866
      %v1960 = vpop.f32.mrb[0].mxu0
      %v1961 = vadd.f32 0.0, %v1960
      %v1962 = vpop.f32.mrb[0].mxu0
      %v1963 = vpop.f32.mrb[0].mxu0
      %v1964 = vadd.f32 0.0, %v1963
      %v1965 = vpop.f32.mrb[0].mxu0
      %1966 = vmatprep.mubr.bf16.mxu0 0
      %1967 = vmatmul.mubr.bf16.gmra.mrb[0].mxu0 %v1869
      %v1968 = vpop.f32.mrb[0].mxu0
      %v1969 = vadd.f32 0.0, %v1968
      %v1970 = vpop.f32.mrb[0].mxu0
      %v1971 = vpop.f32.mrb[0].mxu0
      %v1972 = vadd.f32 0.0, %v1971
      %v1973 = vpop.f32.mrb[0].mxu0
      %1974 = vmatprep.mubr.bf16.mxu0 0
      %1975 = vmatmul.mubr.bf16.gmra.mrb[0].mxu0 %v1872
      %v1976 = vpop.f32.mrb[0].mxu0
      %v1977 = vadd.f32 0.0, %v1976
      %v1978 = vpop.f32.mrb[0].mxu0
      %v1979 = vpop.f32.mrb[0].mxu0
      %v1980 = vadd.f32 0.0, %v1979
      %v1981 = vpop.f32.mrb[0].mxu0
      %1982 = vmatprep.mubr.bf16.mxu0 0
      %1983 = vmatmul.mubr.bf16.gmra.mrb[0].mxu0 %v1875
      %v1984 = vpop.f32.mrb[0].mxu0
      %v1985 = vadd.f32 0.0, %v1984
      %v1986 = vpop.f32.mrb[0].mxu0
      %v1987 = vpop.f32.mrb[0].mxu0
      %v1988 = vadd.f32 0.0, %v1987
      %v1989 = vpop.f32.mrb[0].mxu0
      %1990 = vmatprep.mubr.bf16.mxu0 0
      %1991 = vmatmul.mubr.bf16.gmra.mrb[0].mxu0 %v1878
      %v1992 = vpop.f32.mrb[0].mxu0
      %v1993 = vadd.f32 0.0, %v1992
      %v1994 = vpop.f32.mrb[0].mxu0
      %v1995 = vpop.f32.mrb[0].mxu0
      %v1996 = vadd.f32 0.0, %v1995
      %v1997 = vpop.f32.mrb[0].mxu0
      %1998 = vmatprep.mubr.bf16.mxu0 0
      %1999 = vmatmul.mubr.bf16.gmra.mrb[0].mxu0 %v1881
      %v2000 = vpop.f32.mrb[0].mxu0
      %v2001 = vadd.f32 0.0, %v2000
      %v2002 = vpop.f32.mrb[0].mxu0
      %v2003 = vpop.f32.mrb[0].mxu0
      %v2004 = vadd.f32 0.0, %v2003
      %v2005 = vpop.f32.mrb[0].mxu0
      %2006 = vmatprep.mubr.bf16.mxu0 0
      %2007 = vmatmul.mubr.bf16.gmra.mrb[0].mxu0 %v1884
      %v2008 = vpop.f32.mrb[0].mxu0
      %v2009 = vadd.f32 0.0, %v2008
      %v2010 = vpop.f32.mrb[0].mxu0
      %v2011 = vpop.f32.mrb[0].mxu0
      %v2012 = vadd.f32 0.0, %v2011
      %v2013 = vpop.f32.mrb[0].mxu0
      %2014 = vmatprep.mubr.bf16.mxu0 0
      %2015 = vmatmul.mubr.bf16.gmra.mrb[0].mxu0 %v1887
      %v2016 = vpop.f32.mrb[0].mxu0
      %v2017 = vadd.f32 0.0, %v2016
      %v2018 = vpop.f32.mrb[0].mxu0
      %v2019 = vpop.f32.mrb[0].mxu0
      %v2020 = vadd.f32 0.0, %v2019
      %v2021 = vpop.f32.mrb[0].mxu0
      %2022 = vmatprep.mubr.bf16.mxu0 0
      %2023 = vmatmul.mubr.bf16.gmra.mrb[0].mxu0 %v1890
      %v2024 = vpop.f32.mrb[0].mxu0
      %v2025 = vadd.f32 0.0, %v2024
      %v2026 = vpop.f32.mrb[0].mxu0
      %v2027 = vpop.f32.mrb[0].mxu0
      %v2028 = vadd.f32 0.0, %v2027
      %v2029 = vpop.f32.mrb[0].mxu0
      %2030 = vmatprep.mubr.bf16.mxu0 0
      %2031 = vmatmul.mubr.bf16.gmra.mrb[0].mxu0 %v1893
      %v2032 = vpop.f32.mrb[0].mxu0
      %v2033 = vadd.f32 0.0, %v2032
      %v2034 = vpop.f32.mrb[0].mxu0
      %v2035 = vpop.f32.mrb[0].mxu0
      %v2036 = vadd.f32 0.0, %v2035
      %v2037 = vpop.f32.mrb[0].mxu0
      %2038 = vmatprep.mubr.bf16.mxu0 0
      %2039 = vmatmul.mubr.bf16.gmra.mrb[0].mxu0 %v1896
      %v2040 = vpop.f32.mrb[0].mxu0
      %v2041 = vadd.f32 0.0, %v2040
      %v2042 = vpop.f32.mrb[0].mxu0
      %v2043 = vpop.f32.mrb[0].mxu0
      %v2044 = vadd.f32 0.0, %v2043
      %v2045 = vpop.f32.mrb[0].mxu0
      %2046 = vmatprep.mubr.bf16.mxu0 0
      %2047 = vmatmul.mubr.bf16.gmra.mrb[0].mxu0 %v1899
      %v2048 = vpop.f32.mrb[0].mxu0
      %v2049 = vadd.f32 0.0, %v2048
      %v2050 = vpop.f32.mrb[0].mxu0
      %v2051 = vpop.f32.mrb[0].mxu0
      %v2052 = vadd.f32 0.0, %v2051
      %v2053 = vpop.f32.mrb[0].mxu0
      %2054 = vmatprep.mubr.bf16.mxu0 0
      %2055 = vmatmul.mubr.bf16.gmra.mrb[0].mxu0 %v1902
      %v2056 = vpop.f32.mrb[0].mxu0
      %v2057 = vadd.f32 0.0, %v2056
      %v2058 = vpop.f32.mrb[0].mxu0
      %v2059 = vpop.f32.mrb[0].mxu0
      %v2060 = vadd.f32 0.0, %v2059
      %v2061 = vpop.f32.mrb[0].mxu0
      %2062 = vmatprep.mubr.bf16.mxu0 0
      %2063 = vmatmul.mubr.bf16.gmra.mrb[0].mxu0 %v1905
      %v2064 = vpop.f32.mrb[0].mxu0
      %v2065 = vadd.f32 0.0, %v2064
      %v2066 = vpop.f32.mrb[0].mxu0
      %v2067 = vpop.f32.mrb[0].mxu0
      %v2068 = vadd.f32 0.0, %v2067
      %v2069 = vpop.f32.mrb[0].mxu0
      %2070 = vdwg.mxu0
      %v2071 = vadd.f32 %v1693, %v1945
      %v2072 = vadd.f32 %v1694, %v1948
      %v2073 = vadd.f32 %v1695, %v1953
      %v2074 = vadd.f32 %v1696, %v1956
      %v2075 = vadd.f32 %v1697, %v1961
      %v2076 = vadd.f32 %v1698, %v1964
      %v2077 = vadd.f32 %v1699, %v1969
      %v2078 = vadd.f32 %v1700, %v1972
      %v2079 = vadd.f32 %v1701, %v1977
      %v2080 = vadd.f32 %v1702, %v1980
      %v2081 = vadd.f32 %v1703, %v1985
      %v2082 = vadd.f32 %v1704, %v1988
      %v2083 = vadd.f32 %v1705, %v1993
      %v2084 = vadd.f32 %v1706, %v1996
      %v2085 = vadd.f32 %v1707, %v2001
      %v2086 = vadd.f32 %v1708, %v2004
      %v2087 = vadd.f32 %v1709, %v2009
      %v2088 = vadd.f32 %v1710, %v2012
      %v2089 = vadd.f32 %v1711, %v2017
      %v2090 = vadd.f32 %v1712, %v2020
      %v2091 = vadd.f32 %v1713, %v2025
      %v2092 = vadd.f32 %v1714, %v2028
      %v2093 = vadd.f32 %v1715, %v2033
      %v2094 = vadd.f32 %v1716, %v2036
      %v2095 = vadd.f32 %v1717, %v2041
      %v2096 = vadd.f32 %v1718, %v2044
      %v2097 = vadd.f32 %v1719, %v2049
      %v2098 = vadd.f32 %v1720, %v2052
      %v2099 = vadd.f32 %v1721, %v2057
      %v2100 = vadd.f32 %v1722, %v2060
      %v2101 = vadd.f32 %v1723, %v2065
      %v2102 = vadd.f32 %v1724, %v2068
      %v2103 = vld [vmem:[%s1725] sm:$0xf]
      %v2104 = vld [vmem:[%s1725 + $0x4] sm:$0xf]
      %v2105 = vld [vmem:[%s1725 + $0x8] sm:$0x1]
      %v2106 = vld [vmem:[%s1725 + $0xc] sm:$0xf]
      %v2107 = vld [vmem:[%s1725 + $0x10] sm:$0xf]
      %v2108 = vld [vmem:[%s1725 + $0x14] sm:$0x1]
      %v2109 = vld [vmem:[%s1725 + $0x18] sm:$0xf]
      %v2110 = vld [vmem:[%s1725 + $0x1c] sm:$0xf]
      %v2111 = vld [vmem:[%s1725 + $0x20] sm:$0x1]
      %v2112 = vld [vmem:[%s1725 + $0x24] sm:$0xf]
      %v2113 = vld [vmem:[%s1725 + $0x28] sm:$0xf]
      %v2114 = vld [vmem:[%s1725 + $0x2c] sm:$0x1]
      %v2115 = vld [vmem:[%s1725 + $0x30] sm:$0xf]
      %v2116 = vld [vmem:[%s1725 + $0x34] sm:$0xf]
      %v2117 = vld [vmem:[%s1725 + $0x38] sm:$0x1]
      %v2118 = vld [vmem:[%s1725 + $0x3c] sm:$0xf]
      %v2119 = vld [vmem:[%s1725 + $0x40] sm:$0xf]
      %v2120 = vld [vmem:[%s1725 + $0x44] sm:$0x1]
      %v2121 = vld [vmem:[%s1725 + $0x48] sm:$0xf]
      %v2122 = vld [vmem:[%s1725 + $0x4c] sm:$0xf]
      %v2123 = vld [vmem:[%s1725 + $0x50] sm:$0x1]
      %v2124 = vld [vmem:[%s1725 + $0x54] sm:$0xf]
      %v2125 = vld [vmem:[%s1725 + $0x58] sm:$0xf]
      %v2126 = vld [vmem:[%s1725 + $0x5c] sm:$0x1]
      %v2127 = vld [vmem:[%s1725 + $0x60] sm:$0xf]
      %v2128 = vld [vmem:[%s1725 + $0x64] sm:$0xf]
      %v2129 = vld [vmem:[%s1725 + $0x68] sm:$0x1]
      %v2130 = vld [vmem:[%s1725 + $0x6c] sm:$0xf]
      %v2131 = vld [vmem:[%s1725 + $0x70] sm:$0xf]
      %v2132 = vld [vmem:[%s1725 + $0x74] sm:$0x1]
      %v2133 = vld [vmem:[%s1725 + $0x78] sm:$0xf]
      %v2134 = vld [vmem:[%s1725 + $0x7c] sm:$0xf]
      %v2135 = vld [vmem:[%s1725 + $0x80] sm:$0x1]
      %v2136 = vld [vmem:[%s1725 + $0x84] sm:$0xf]
      %v2137 = vld [vmem:[%s1725 + $0x88] sm:$0xf]
      %v2138 = vld [vmem:[%s1725 + $0x8c] sm:$0x1]
      %v2139 = vld [vmem:[%s1725 + $0x90] sm:$0xf]
      %v2140 = vld [vmem:[%s1725 + $0x94] sm:$0xf]
      %v2141 = vld [vmem:[%s1725 + $0x98] sm:$0x1]
      %v2142 = vld [vmem:[%s1725 + $0x9c] sm:$0xf]
      %v2143 = vld [vmem:[%s1725 + $0xa0] sm:$0xf]
      %v2144 = vld [vmem:[%s1725 + $0xa4] sm:$0x1]
      %v2145 = vld [vmem:[%s1725 + $0xa8] sm:$0xf]
      %v2146 = vld [vmem:[%s1725 + $0xac] sm:$0xf]
      %v2147 = vld [vmem:[%s1725 + $0xb0] sm:$0x1]
      %v2148 = vld [vmem:[%s1725 + $0xb4] sm:$0xf]
      %v2149 = vld [vmem:[%s1725 + $0xb8] sm:$0xf]
      %v2150 = vld [vmem:[%s1725 + $0xbc] sm:$0x1]
      %v2152 = vshrl.u32 %v2103, 16
      %v2154 = vrot.slane %v2152, 4
      %v2155 = vshll.u32 %v2103, 16
      %v2157 = vrot.slane %v2155, 5
      %v2158 = vor.u32 %v2154, %v2157
      %v2159 = vrot.slane %v2158, 4
      %v2161 = vshll.u32 %v2104, 16
      %v2163 = vrot.slane %v2161, 5
      %v2164 = vsel %vm274, %v2159, %v2163
      %v2165 = vshrl.u32 %v2104, 16
      %v2167 = vrot.slane %v2165, 4
      %v2168 = vor.u32 %v2167, %v2163
      %v2169 = vrot.slane %v2168, 4
      %v2171 = vshll.u32 %v2105, 16
      %v2173 = vrot.slane %v2171, 5
      %v2174 = vsel %vm274, %v2169, %v2173
      %v2176 = vshrl.u32 %v2106, 16
      %v2178 = vrot.slane %v2176, 4
      %v2179 = vshll.u32 %v2106, 16
      %v2181 = vrot.slane %v2179, 5
      %v2182 = vor.u32 %v2178, %v2181
      %v2183 = vrot.slane %v2182, 4
      %v2185 = vshll.u32 %v2107, 16
      %v2187 = vrot.slane %v2185, 5
      %v2188 = vsel %vm274, %v2183, %v2187
      %v2189 = vshrl.u32 %v2107, 16
      %v2191 = vrot.slane %v2189, 4
      %v2192 = vor.u32 %v2191, %v2187
      %v2193 = vrot.slane %v2192, 4
      %v2195 = vshll.u32 %v2108, 16
      %v2197 = vrot.slane %v2195, 5
      %v2198 = vsel %vm274, %v2193, %v2197
      %v2200 = vshrl.u32 %v2109, 16
      %v2202 = vrot.slane %v2200, 4
      %v2203 = vshll.u32 %v2109, 16
      %v2205 = vrot.slane %v2203, 5
      %v2206 = vor.u32 %v2202, %v2205
      %v2207 = vrot.slane %v2206, 4
      %v2209 = vshll.u32 %v2110, 16
      %v2211 = vrot.slane %v2209, 5
      %v2212 = vsel %vm274, %v2207, %v2211
      %v2213 = vshrl.u32 %v2110, 16
      %v2215 = vrot.slane %v2213, 4
      %v2216 = vor.u32 %v2215, %v2211
      %v2217 = vrot.slane %v2216, 4
      %v2219 = vshll.u32 %v2111, 16
      %v2221 = vrot.slane %v2219, 5
      %v2222 = vsel %vm274, %v2217, %v2221
      %v2224 = vshrl.u32 %v2112, 16
      %v2226 = vrot.slane %v2224, 4
      %v2227 = vshll.u32 %v2112, 16
      %v2229 = vrot.slane %v2227, 5
      %v2230 = vor.u32 %v2226, %v2229
      %v2231 = vrot.slane %v2230, 4
      %v2233 = vshll.u32 %v2113, 16
      %v2235 = vrot.slane %v2233, 5
      %v2236 = vsel %vm274, %v2231, %v2235
      %v2237 = vshrl.u32 %v2113, 16
      %v2239 = vrot.slane %v2237, 4
      %v2240 = vor.u32 %v2239, %v2235
      %v2241 = vrot.slane %v2240, 4
      %v2243 = vshll.u32 %v2114, 16
      %v2245 = vrot.slane %v2243, 5
      %v2246 = vsel %vm274, %v2241, %v2245
      %v2248 = vshrl.u32 %v2115, 16
      %v2250 = vrot.slane %v2248, 4
      %v2251 = vshll.u32 %v2115, 16
      %v2253 = vrot.slane %v2251, 5
      %v2254 = vor.u32 %v2250, %v2253
      %v2255 = vrot.slane %v2254, 4
      %v2257 = vshll.u32 %v2116, 16
      %v2259 = vrot.slane %v2257, 5
      %v2260 = vsel %vm274, %v2255, %v2259
      %v2261 = vshrl.u32 %v2116, 16
      %v2263 = vrot.slane %v2261, 4
      %v2264 = vor.u32 %v2263, %v2259
      %v2265 = vrot.slane %v2264, 4
      %v2267 = vshll.u32 %v2117, 16
      %v2269 = vrot.slane %v2267, 5
      %v2270 = vsel %vm274, %v2265, %v2269
      %v2272 = vshrl.u32 %v2118, 16
      %v2274 = vrot.slane %v2272, 4
      %v2275 = vshll.u32 %v2118, 16
      %v2277 = vrot.slane %v2275, 5
      %v2278 = vor.u32 %v2274, %v2277
      %v2279 = vrot.slane %v2278, 4
      %v2281 = vshll.u32 %v2119, 16
      %v2283 = vrot.slane %v2281, 5
      %v2284 = vsel %vm274, %v2279, %v2283
      %v2285 = vshrl.u32 %v2119, 16
      %v2287 = vrot.slane %v2285, 4
      %v2288 = vor.u32 %v2287, %v2283
      %v2289 = vrot.slane %v2288, 4
      %v2291 = vshll.u32 %v2120, 16
      %v2293 = vrot.slane %v2291, 5
      %v2294 = vsel %vm274, %v2289, %v2293
      %v2296 = vshrl.u32 %v2121, 16
      %v2298 = vrot.slane %v2296, 4
      %v2299 = vshll.u32 %v2121, 16
      %v2301 = vrot.slane %v2299, 5
      %v2302 = vor.u32 %v2298, %v2301
      %v2303 = vrot.slane %v2302, 4
      %v2305 = vshll.u32 %v2122, 16
      %v2307 = vrot.slane %v2305, 5
      %v2308 = vsel %vm274, %v2303, %v2307
      %v2309 = vshrl.u32 %v2122, 16
      %v2311 = vrot.slane %v2309, 4
      %v2312 = vor.u32 %v2311, %v2307
      %v2313 = vrot.slane %v2312, 4
      %v2315 = vshll.u32 %v2123, 16
      %v2317 = vrot.slane %v2315, 5
      %v2318 = vsel %vm274, %v2313, %v2317
      %v2320 = vshrl.u32 %v2124, 16
      %v2322 = vrot.slane %v2320, 4
      %v2323 = vshll.u32 %v2124, 16
      %v2325 = vrot.slane %v2323, 5
      %v2326 = vor.u32 %v2322, %v2325
      %v2327 = vrot.slane %v2326, 4
      %v2329 = vshll.u32 %v2125, 16
      %v2331 = vrot.slane %v2329, 5
      %v2332 = vsel %vm274, %v2327, %v2331
      %v2333 = vshrl.u32 %v2125, 16
      %v2335 = vrot.slane %v2333, 4
      %v2336 = vor.u32 %v2335, %v2331
      %v2337 = vrot.slane %v2336, 4
      %v2339 = vshll.u32 %v2126, 16
      %v2341 = vrot.slane %v2339, 5
      %v2342 = vsel %vm274, %v2337, %v2341
      %v2344 = vshrl.u32 %v2127, 16
      %v2346 = vrot.slane %v2344, 4
      %v2347 = vshll.u32 %v2127, 16
      %v2349 = vrot.slane %v2347, 5
      %v2350 = vor.u32 %v2346, %v2349
      %v2351 = vrot.slane %v2350, 4
      %v2353 = vshll.u32 %v2128, 16
      %v2355 = vrot.slane %v2353, 5
      %v2356 = vsel %vm274, %v2351, %v2355
      %v2357 = vshrl.u32 %v2128, 16
      %v2359 = vrot.slane %v2357, 4
      %v2360 = vor.u32 %v2359, %v2355
      %v2361 = vrot.slane %v2360, 4
      %v2363 = vshll.u32 %v2129, 16
      %v2365 = vrot.slane %v2363, 5
      %v2366 = vsel %vm274, %v2361, %v2365
      %v2368 = vshrl.u32 %v2130, 16
      %v2370 = vrot.slane %v2368, 4
      %v2371 = vshll.u32 %v2130, 16
      %v2373 = vrot.slane %v2371, 5
      %v2374 = vor.u32 %v2370, %v2373
      %v2375 = vrot.slane %v2374, 4
      %v2377 = vshll.u32 %v2131, 16
      %v2379 = vrot.slane %v2377, 5
      %v2380 = vsel %vm274, %v2375, %v2379
      %v2381 = vshrl.u32 %v2131, 16
      %v2383 = vrot.slane %v2381, 4
      %v2384 = vor.u32 %v2383, %v2379
      %v2385 = vrot.slane %v2384, 4
      %v2387 = vshll.u32 %v2132, 16
      %v2389 = vrot.slane %v2387, 5
      %v2390 = vsel %vm274, %v2385, %v2389
      %v2392 = vshrl.u32 %v2133, 16
      %v2394 = vrot.slane %v2392, 4
      %v2395 = vshll.u32 %v2133, 16
      %v2397 = vrot.slane %v2395, 5
      %v2398 = vor.u32 %v2394, %v2397
      %v2399 = vrot.slane %v2398, 4
      %v2401 = vshll.u32 %v2134, 16
      %v2403 = vrot.slane %v2401, 5
      %v2404 = vsel %vm274, %v2399, %v2403
      %v2405 = vshrl.u32 %v2134, 16
      %v2407 = vrot.slane %v2405, 4
      %v2408 = vor.u32 %v2407, %v2403
      %v2409 = vrot.slane %v2408, 4
      %v2411 = vshll.u32 %v2135, 16
      %v2413 = vrot.slane %v2411, 5
      %v2414 = vsel %vm274, %v2409, %v2413
      %v2416 = vshrl.u32 %v2136, 16
      %v2418 = vrot.slane %v2416, 4
      %v2419 = vshll.u32 %v2136, 16
      %v2421 = vrot.slane %v2419, 5
      %v2422 = vor.u32 %v2418, %v2421
      %v2423 = vrot.slane %v2422, 4
      %v2425 = vshll.u32 %v2137, 16
      %v2427 = vrot.slane %v2425, 5
      %v2428 = vsel %vm274, %v2423, %v2427
      %v2429 = vshrl.u32 %v2137, 16
      %v2431 = vrot.slane %v2429, 4
      %v2432 = vor.u32 %v2431, %v2427
      %v2433 = vrot.slane %v2432, 4
      %v2435 = vshll.u32 %v2138, 16
      %v2437 = vrot.slane %v2435, 5
      %v2438 = vsel %vm274, %v2433, %v2437
      %v2440 = vshrl.u32 %v2139, 16
      %v2442 = vrot.slane %v2440, 4
      %v2443 = vshll.u32 %v2139, 16
      %v2445 = vrot.slane %v2443, 5
      %v2446 = vor.u32 %v2442, %v2445
      %v2447 = vrot.slane %v2446, 4
      %v2449 = vshll.u32 %v2140, 16
      %v2451 = vrot.slane %v2449, 5
      %v2452 = vsel %vm274, %v2447, %v2451
      %v2453 = vshrl.u32 %v2140, 16
      %v2455 = vrot.slane %v2453, 4
      %v2456 = vor.u32 %v2455, %v2451
      %v2457 = vrot.slane %v2456, 4
      %v2459 = vshll.u32 %v2141, 16
      %v2461 = vrot.slane %v2459, 5
      %v2462 = vsel %vm274, %v2457, %v2461
      %v2464 = vshrl.u32 %v2142, 16
      %v2466 = vrot.slane %v2464, 4
      %v2467 = vshll.u32 %v2142, 16
      %v2469 = vrot.slane %v2467, 5
      %v2470 = vor.u32 %v2466, %v2469
      %v2471 = vrot.slane %v2470, 4
      %v2473 = vshll.u32 %v2143, 16
      %v2475 = vrot.slane %v2473, 5
      %v2476 = vsel %vm274, %v2471, %v2475
      %v2477 = vshrl.u32 %v2143, 16
      %v2479 = vrot.slane %v2477, 4
      %v2480 = vor.u32 %v2479, %v2475
      %v2481 = vrot.slane %v2480, 4
      %v2483 = vshll.u32 %v2144, 16
      %v2485 = vrot.slane %v2483, 5
      %v2486 = vsel %vm274, %v2481, %v2485
      %v2488 = vshrl.u32 %v2145, 16
      %v2490 = vrot.slane %v2488, 4
      %v2491 = vshll.u32 %v2145, 16
      %v2493 = vrot.slane %v2491, 5
      %v2494 = vor.u32 %v2490, %v2493
      %v2495 = vrot.slane %v2494, 4
      %v2497 = vshll.u32 %v2146, 16
      %v2499 = vrot.slane %v2497, 5
      %v2500 = vsel %vm274, %v2495, %v2499
      %v2501 = vshrl.u32 %v2146, 16
      %v2503 = vrot.slane %v2501, 4
      %v2504 = vor.u32 %v2503, %v2499
      %v2505 = vrot.slane %v2504, 4
      %v2507 = vshll.u32 %v2147, 16
      %v2509 = vrot.slane %v2507, 5
      %v2510 = vsel %vm274, %v2505, %v2509
      %v2512 = vshrl.u32 %v2148, 16
      %v2514 = vrot.slane %v2512, 4
      %v2515 = vshll.u32 %v2148, 16
      %v2517 = vrot.slane %v2515, 5
      %v2518 = vor.u32 %v2514, %v2517
      %v2519 = vrot.slane %v2518, 4
      %v2521 = vshll.u32 %v2149, 16
      %v2523 = vrot.slane %v2521, 5
      %v2524 = vsel %vm274, %v2519, %v2523
      %v2525 = vshrl.u32 %v2149, 16
      %v2527 = vrot.slane %v2525, 4
      %v2528 = vor.u32 %v2527, %v2523
      %v2529 = vrot.slane %v2528, 4
      %v2531 = vshll.u32 %v2150, 16
      %v2533 = vrot.slane %v2531, 5
      %v2534 = vsel %vm274, %v2529, %v2533
      %s2535 = scalar_lea.vmem %s1, 80
      %v2536 = vld [vmem:[%s2535] sm:$0xf]
      %v2537 = vld [vmem:[%s2535 + $0x4] sm:$0xf]
      %v2538 = vld [vmem:[%s2535 + $0x8] sm:$0xf]
      %v2539 = vld [vmem:[%s2535 + $0xc] sm:$0xf]
      %v2540 = vld [vmem:[%s2535 + $0x10] sm:$0x3]
      %v2541 = vunpack.c.l.b16 %v2164
      %v2542 = vunpack.c.l.b16 %v2174
      %v2543 = vunpack.c.l.b16 %v2188
      %v2544 = vunpack.c.l.b16 %v2198
      %v2545 = vunpack.c.l.b16 %v2212
      %v2546 = vunpack.c.l.b16 %v2222
      %v2547 = vunpack.c.l.b16 %v2236
      %v2548 = vunpack.c.l.b16 %v2246
      %v2549 = vunpack.c.l.b16 %v2260
      %v2550 = vunpack.c.l.b16 %v2270
      %v2551 = vunpack.c.l.b16 %v2284
      %v2552 = vunpack.c.l.b16 %v2294
      %v2553 = vunpack.c.l.b16 %v2308
      %v2554 = vunpack.c.l.b16 %v2318
      %v2555 = vunpack.c.l.b16 %v2332
      %v2556 = vunpack.c.l.b16 %v2342
      %v2557 = vunpack.c.l.b16 %v2356
      %v2558 = vunpack.c.l.b16 %v2366
      %v2559 = vunpack.c.l.b16 %v2380
      %v2560 = vunpack.c.l.b16 %v2390
      %v2561 = vunpack.c.l.b16 %v2404
      %v2562 = vunpack.c.l.b16 %v2414
      %v2563 = vunpack.c.l.b16 %v2428
      %v2564 = vunpack.c.l.b16 %v2438
      %v2565 = vunpack.c.l.b16 %v2452
      %v2566 = vunpack.c.l.b16 %v2462
      %v2567 = vunpack.c.l.b16 %v2476
      %v2568 = vunpack.c.l.b16 %v2486
      %v2569 = vunpack.c.l.b16 %v2500
      %v2570 = vunpack.c.l.b16 %v2510
      %v2571 = vunpack.c.l.b16 %v2524
      %v2572 = vunpack.c.l.b16 %v2534
      %v2573 = vpack.c.b16 %v2542, %v2541
      %v2574 = vpack.c.b16 %v2544, %v2543
      %v2575 = vpack.c.b16 %v2546, %v2545
      %v2576 = vpack.c.b16 %v2548, %v2547
      %v2577 = vpack.c.b16 %v2550, %v2549
      %v2578 = vpack.c.b16 %v2552, %v2551
      %v2579 = vpack.c.b16 %v2554, %v2553
      %v2580 = vpack.c.b16 %v2556, %v2555
      %v2581 = vpack.c.b16 %v2558, %v2557
      %v2582 = vpack.c.b16 %v2560, %v2559
      %v2583 = vpack.c.b16 %v2562, %v2561
      %v2584 = vpack.c.b16 %v2564, %v2563
      %v2585 = vpack.c.b16 %v2566, %v2565
      %v2586 = vpack.c.b16 %v2568, %v2567
      %v2587 = vpack.c.b16 %v2570, %v2569
      %v2588 = vpack.c.b16 %v2572, %v2571
      %v2594 = vunpack.c.l.b16 %v2536
      %v2595 = vunpack.c.l.b16 %v2537
      %v2596 = vunpack.c.l.b16 %v2538
      %v2597 = vunpack.c.l.b16 %v2539
      %v2598 = vunpack.c.l.b16 %v2540
      %v2599 = vpack.c.b16 %v2595, %v2594
      %v2600 = vpack.c.b16 %v2597, %v2596
      %v2601 = vpack.c.b16 %v2598, %v2598
      %v2605 = vsel %vm728, %v2573, 0
      %v2608 = vsel %vm728, %v2574, 0
      %v2611 = vsel %vm728, %v2575, 0
      %v2614 = vsel %vm728, %v2576, 0
      %v2617 = vsel %vm728, %v2577, 0
      %v2620 = vsel %vm728, %v2578, 0
      %v2623 = vsel %vm728, %v2579, 0
      %v2626 = vsel %vm728, %v2580, 0
      %v2629 = vsel %vm728, %v2581, 0
      %v2632 = vsel %vm728, %v2582, 0
      %v2635 = vsel %vm728, %v2583, 0
      %v2638 = vsel %vm728, %v2584, 0
      %v2641 = vsel %vm728, %v2585, 0
      %v2644 = vsel %vm728, %v2586, 0
      %v2647 = vsel %vm728, %v2587, 0
      %v2650 = vsel %vm728, %v2588, 0
      %v2653 = vsel %vm777, %v2601, 0
      %2655 = vmatprep.subr.bf16.mxu0 0
      %2656 = vmatpush1.bf16.msra.mxu0 %v2599
      %2657 = vmatprep.subr.bf16.mxu0 0
      %2658 = vmatpush1.bf16.msra.mxu0 %v2600
      %2659 = vmatprep.subr.bf16.mxu0 0
      %2660 = vmatpush1.bf16.msra.mxu0 %v2653
      %2661 = vmatprep.subr.bf16.mxu0 0
      %2662 = vmatpush1.bf16.msra.mxu0 0
      %2663 = vmatprep.subr.bf16.mxu0 0
      %2664 = vmatpush1.bf16.msra.mxu0 0
      %2665 = vmatprep.subr.bf16.mxu0 0
      %2666 = vmatpush1.bf16.msra.mxu0 0
      %2667 = vmatprep.subr.bf16.mxu0 0
      %2668 = vmatpush1.bf16.msra.mxu0 0
      %2669 = vmatprep.subr.bf16.mxu0 0
      %2670 = vmatpush1.bf16.msra.mxu0 0
      %2671 = vmatprep.subr.bf16.mxu0 0
      %2672 = vmatpush1.bf16.msra.mxu0 0
      %2673 = vmatprep.subr.bf16.mxu0 0
      %2674 = vmatpush1.bf16.msra.mxu0 0
      %2675 = vmatprep.subr.bf16.mxu0 0
      %2676 = vmatpush1.bf16.msra.mxu0 0
      %2677 = vmatprep.subr.bf16.mxu0 0
      %2678 = vmatpush1.bf16.msra.mxu0 0
      %2679 = vmatprep.subr.bf16.mxu0 0
      %2680 = vmatpush1.bf16.msra.mxu0 0
      %2681 = vmatprep.subr.bf16.mxu0 0
      %2682 = vmatpush1.bf16.msra.mxu0 0
      %2683 = vmatprep.subr.bf16.mxu0 0
      %2684 = vmatpush1.bf16.msra.mxu0 0
      %2685 = vmatprep.subr.bf16.mxu0 0
      %2686 = vmatpush1.bf16.msra.mxu0 0
      %2687 = vmatprep.mubr.bf16.mxu0 0
      %2688 = vmatmul.mubr.bf16.gmra.mrb[0].mxu0 %v2605
      %v2689 = vpop.f32.mrb[0].mxu0
      %v2690 = vadd.f32 0.0, %v2689
      %v2691 = vpop.f32.mrb[0].mxu0
      %v2692 = vpop.f32.mrb[0].mxu0
      %v2693 = vadd.f32 0.0, %v2692
      %v2694 = vpop.f32.mrb[0].mxu0
      %2695 = vmatprep.mubr.bf16.mxu0 0
      %2696 = vmatmul.mubr.bf16.gmra.mrb[0].mxu0 %v2608
      %v2697 = vpop.f32.mrb[0].mxu0
      %v2698 = vadd.f32 0.0, %v2697
      %v2699 = vpop.f32.mrb[0].mxu0
      %v2700 = vpop.f32.mrb[0].mxu0
      %v2701 = vadd.f32 0.0, %v2700
      %v2702 = vpop.f32.mrb[0].mxu0
      %2703 = vmatprep.mubr.bf16.mxu0 0
      %2704 = vmatmul.mubr.bf16.gmra.mrb[0].mxu0 %v2611
      %v2705 = vpop.f32.mrb[0].mxu0
      %v2706 = vadd.f32 0.0, %v2705
      %v2707 = vpop.f32.mrb[0].mxu0
      %v2708 = vpop.f32.mrb[0].mxu0
      %v2709 = vadd.f32 0.0, %v2708
      %v2710 = vpop.f32.mrb[0].mxu0
      %2711 = vmatprep.mubr.bf16.mxu0 0
      %2712 = vmatmul.mubr.bf16.gmra.mrb[0].mxu0 %v2614
      %v2713 = vpop.f32.mrb[0].mxu0
      %v2714 = vadd.f32 0.0, %v2713
      %v2715 = vpop.f32.mrb[0].mxu0
      %v2716 = vpop.f32.mrb[0].mxu0
      %v2717 = vadd.f32 0.0, %v2716
      %v2718 = vpop.f32.mrb[0].mxu0
      %2719 = vmatprep.mubr.bf16.mxu0 0
      %2720 = vmatmul.mubr.bf16.gmra.mrb[0].mxu0 %v2617
      %v2721 = vpop.f32.mrb[0].mxu0
      %v2722 = vadd.f32 0.0, %v2721
      %v2723 = vpop.f32.mrb[0].mxu0
      %v2724 = vpop.f32.mrb[0].mxu0
      %v2725 = vadd.f32 0.0, %v2724
      %v2726 = vpop.f32.mrb[0].mxu0
      %2727 = vmatprep.mubr.bf16.mxu0 0
      %2728 = vmatmul.mubr.bf16.gmra.mrb[0].mxu0 %v2620
      %v2729 = vpop.f32.mrb[0].mxu0
      %v2730 = vadd.f32 0.0, %v2729
      %v2731 = vpop.f32.mrb[0].mxu0
      %v2732 = vpop.f32.mrb[0].mxu0
      %v2733 = vadd.f32 0.0, %v2732
      %v2734 = vpop.f32.mrb[0].mxu0
      %2735 = vmatprep.mubr.bf16.mxu0 0
      %2736 = vmatmul.mubr.bf16.gmra.mrb[0].mxu0 %v2623
      %v2737 = vpop.f32.mrb[0].mxu0
      %v2738 = vadd.f32 0.0, %v2737
      %v2739 = vpop.f32.mrb[0].mxu0
      %v2740 = vpop.f32.mrb[0].mxu0
      %v2741 = vadd.f32 0.0, %v2740
      %v2742 = vpop.f32.mrb[0].mxu0
      %2743 = vmatprep.mubr.bf16.mxu0 0
      %2744 = vmatmul.mubr.bf16.gmra.mrb[0].mxu0 %v2626
      %v2745 = vpop.f32.mrb[0].mxu0
      %v2746 = vadd.f32 0.0, %v2745
      %v2747 = vpop.f32.mrb[0].mxu0
      %v2748 = vpop.f32.mrb[0].mxu0
      %v2749 = vadd.f32 0.0, %v2748
      %v2750 = vpop.f32.mrb[0].mxu0
      %2751 = vmatprep.mubr.bf16.mxu0 0
      %2752 = vmatmul.mubr.bf16.gmra.mrb[0].mxu0 %v2629
      %v2753 = vpop.f32.mrb[0].mxu0
      %v2754 = vadd.f32 0.0, %v2753
      %v2755 = vpop.f32.mrb[0].mxu0
      %v2756 = vpop.f32.mrb[0].mxu0
      %v2757 = vadd.f32 0.0, %v2756
      %v2758 = vpop.f32.mrb[0].mxu0
      %2759 = vmatprep.mubr.bf16.mxu0 0
      %2760 = vmatmul.mubr.bf16.gmra.mrb[0].mxu0 %v2632
      %v2761 = vpop.f32.mrb[0].mxu0
      %v2762 = vadd.f32 0.0, %v2761
      %v2763 = vpop.f32.mrb[0].mxu0
      %v2764 = vpop.f32.mrb[0].mxu0
      %v2765 = vadd.f32 0.0, %v2764
      %v2766 = vpop.f32.mrb[0].mxu0
      %2767 = vmatprep.mubr.bf16.mxu0 0
      %2768 = vmatmul.mubr.bf16.gmra.mrb[0].mxu0 %v2635
      %v2769 = vpop.f32.mrb[0].mxu0
      %v2770 = vadd.f32 0.0, %v2769
      %v2771 = vpop.f32.mrb[0].mxu0
      %v2772 = vpop.f32.mrb[0].mxu0
      %v2773 = vadd.f32 0.0, %v2772
      %v2774 = vpop.f32.mrb[0].mxu0
      %2775 = vmatprep.mubr.bf16.mxu0 0
      %2776 = vmatmul.mubr.bf16.gmra.mrb[0].mxu0 %v2638
      %v2777 = vpop.f32.mrb[0].mxu0
      %v2778 = vadd.f32 0.0, %v2777
      %v2779 = vpop.f32.mrb[0].mxu0
      %v2780 = vpop.f32.mrb[0].mxu0
      %v2781 = vadd.f32 0.0, %v2780
      %v2782 = vpop.f32.mrb[0].mxu0
      %2783 = vmatprep.mubr.bf16.mxu0 0
      %2784 = vmatmul.mubr.bf16.gmra.mrb[0].mxu0 %v2641
      %v2785 = vpop.f32.mrb[0].mxu0
      %v2786 = vadd.f32 0.0, %v2785
      %v2787 = vpop.f32.mrb[0].mxu0
      %v2788 = vpop.f32.mrb[0].mxu0
      %v2789 = vadd.f32 0.0, %v2788
      %v2790 = vpop.f32.mrb[0].mxu0
      %2791 = vmatprep.mubr.bf16.mxu0 0
      %2792 = vmatmul.mubr.bf16.gmra.mrb[0].mxu0 %v2644
      %v2793 = vpop.f32.mrb[0].mxu0
      %v2794 = vadd.f32 0.0, %v2793
      %v2795 = vpop.f32.mrb[0].mxu0
      %v2796 = vpop.f32.mrb[0].mxu0
      %v2797 = vadd.f32 0.0, %v2796
      %v2798 = vpop.f32.mrb[0].mxu0
      %2799 = vmatprep.mubr.bf16.mxu0 0
      %2800 = vmatmul.mubr.bf16.gmra.mrb[0].mxu0 %v2647
      %v2801 = vpop.f32.mrb[0].mxu0
      %v2802 = vadd.f32 0.0, %v2801
      %v2803 = vpop.f32.mrb[0].mxu0
      %v2804 = vpop.f32.mrb[0].mxu0
      %v2805 = vadd.f32 0.0, %v2804
      %v2806 = vpop.f32.mrb[0].mxu0
      %2807 = vmatprep.mubr.bf16.mxu0 0
      %2808 = vmatmul.mubr.bf16.gmra.mrb[0].mxu0 %v2650
      %v2809 = vpop.f32.mrb[0].mxu0
      %v2810 = vadd.f32 0.0, %v2809
      %v2811 = vpop.f32.mrb[0].mxu0
      %v2812 = vpop.f32.mrb[0].mxu0
      %v2813 = vadd.f32 0.0, %v2812
      %v2814 = vpop.f32.mrb[0].mxu0
      %2815 = vdwg.mxu0
      %v2816 = vadd.f32 %v2071, %v2690
      %v2817 = vadd.f32 %v2072, %v2693
      %v2818 = vadd.f32 %v2073, %v2698
      %v2819 = vadd.f32 %v2074, %v2701
      %v2820 = vadd.f32 %v2075, %v2706
      %v2821 = vadd.f32 %v2076, %v2709
      %v2822 = vadd.f32 %v2077, %v2714
      %v2823 = vadd.f32 %v2078, %v2717
      %v2824 = vadd.f32 %v2079, %v2722
      %v2825 = vadd.f32 %v2080, %v2725
      %v2826 = vadd.f32 %v2081, %v2730
      %v2827 = vadd.f32 %v2082, %v2733
      %v2828 = vadd.f32 %v2083, %v2738
      %v2829 = vadd.f32 %v2084, %v2741
      %v2830 = vadd.f32 %v2085, %v2746
      %v2831 = vadd.f32 %v2086, %v2749
      %v2832 = vadd.f32 %v2087, %v2754
      %v2833 = vadd.f32 %v2088, %v2757
      %v2834 = vadd.f32 %v2089, %v2762
      %v2835 = vadd.f32 %v2090, %v2765
      %v2836 = vadd.f32 %v2091, %v2770
      %v2837 = vadd.f32 %v2092, %v2773
      %v2838 = vadd.f32 %v2093, %v2778
      %v2839 = vadd.f32 %v2094, %v2781
      %v2840 = vadd.f32 %v2095, %v2786
      %v2841 = vadd.f32 %v2096, %v2789
      %v2842 = vadd.f32 %v2097, %v2794
      %v2843 = vadd.f32 %v2098, %v2797
      %v2844 = vadd.f32 %v2099, %v2802
      %v2845 = vadd.f32 %v2100, %v2805
      %v2846 = vadd.f32 %v2101, %v2810
      %v2847 = vadd.f32 %v2102, %v2813
      %v2848 = vld [vmem:[%s1725] sm:$0xe]
      %v2849 = vld [vmem:[%s1725 + $0xc] sm:$0xe]
      %v2850 = vld [vmem:[%s1725 + $0x18] sm:$0xe]
      %v2851 = vld [vmem:[%s1725 + $0x24] sm:$0xe]
      %v2852 = vld [vmem:[%s1725 + $0x30] sm:$0xe]
      %v2853 = vld [vmem:[%s1725 + $0x3c] sm:$0xe]
      %v2854 = vld [vmem:[%s1725 + $0x48] sm:$0xe]
      %v2855 = vld [vmem:[%s1725 + $0x54] sm:$0xe]
      %v2856 = vld [vmem:[%s1725 + $0x60] sm:$0xe]
      %v2857 = vld [vmem:[%s1725 + $0x6c] sm:$0xe]
      %v2858 = vld [vmem:[%s1725 + $0x78] sm:$0xe]
      %v2859 = vld [vmem:[%s1725 + $0x84] sm:$0xe]
      %v2860 = vld [vmem:[%s1725 + $0x90] sm:$0xe]
      %v2861 = vld [vmem:[%s1725 + $0x9c] sm:$0xe]
      %v2862 = vld [vmem:[%s1725 + $0xa8] sm:$0xe]
      %v2863 = vld [vmem:[%s1725 + $0xb4] sm:$0xe]
      %v2912 = vrot.slane %v2848, 5
      %v2913 = vrot.slane %v2912, 4
      %v2914 = vrot.slane %v2104, 5
      %v2915 = vsel %vm1299, %v2913, %v2914
      %v2916 = vrot.slane %v2914, 4
      %v2917 = vrot.slane %v2105, 5
      %v2918 = vsel %vm1299, %v2916, %v2917
      %v2919 = vrot.slane %v2849, 5
      %v2920 = vrot.slane %v2919, 4
      %v2921 = vrot.slane %v2107, 5
      %v2922 = vsel %vm1299, %v2920, %v2921
      %v2923 = vrot.slane %v2921, 4
      %v2924 = vrot.slane %v2108, 5
      %v2925 = vsel %vm1299, %v2923, %v2924
      %v2926 = vrot.slane %v2850, 5
      %v2927 = vrot.slane %v2926, 4
      %v2928 = vrot.slane %v2110, 5
      %v2929 = vsel %vm1299, %v2927, %v2928
      %v2930 = vrot.slane %v2928, 4
      %v2931 = vrot.slane %v2111, 5
      %v2932 = vsel %vm1299, %v2930, %v2931
      %v2933 = vrot.slane %v2851, 5
      %v2934 = vrot.slane %v2933, 4
      %v2935 = vrot.slane %v2113, 5
      %v2936 = vsel %vm1299, %v2934, %v2935
      %v2937 = vrot.slane %v2935, 4
      %v2938 = vrot.slane %v2114, 5
      %v2939 = vsel %vm1299, %v2937, %v2938
      %v2940 = vrot.slane %v2852, 5
      %v2941 = vrot.slane %v2940, 4
      %v2942 = vrot.slane %v2116, 5
      %v2943 = vsel %vm1299, %v2941, %v2942
      %v2944 = vrot.slane %v2942, 4
      %v2945 = vrot.slane %v2117, 5
      %v2946 = vsel %vm1299, %v2944, %v2945
      %v2947 = vrot.slane %v2853, 5
      %v2948 = vrot.slane %v2947, 4
      %v2949 = vrot.slane %v2119, 5
      %v2950 = vsel %vm1299, %v2948, %v2949
      %v2951 = vrot.slane %v2949, 4
      %v2952 = vrot.slane %v2120, 5
      %v2953 = vsel %vm1299, %v2951, %v2952
      %v2954 = vrot.slane %v2854, 5
      %v2955 = vrot.slane %v2954, 4
      %v2956 = vrot.slane %v2122, 5
      %v2957 = vsel %vm1299, %v2955, %v2956
      %v2958 = vrot.slane %v2956, 4
      %v2959 = vrot.slane %v2123, 5
      %v2960 = vsel %vm1299, %v2958, %v2959
      %v2961 = vrot.slane %v2855, 5
      %v2962 = vrot.slane %v2961, 4
      %v2963 = vrot.slane %v2125, 5
      %v2964 = vsel %vm1299, %v2962, %v2963
      %v2965 = vrot.slane %v2963, 4
      %v2966 = vrot.slane %v2126, 5
      %v2967 = vsel %vm1299, %v2965, %v2966
      %v2968 = vrot.slane %v2856, 5
      %v2969 = vrot.slane %v2968, 4
      %v2970 = vrot.slane %v2128, 5
      %v2971 = vsel %vm1299, %v2969, %v2970
      %v2972 = vrot.slane %v2970, 4
      %v2973 = vrot.slane %v2129, 5
      %v2974 = vsel %vm1299, %v2972, %v2973
      %v2975 = vrot.slane %v2857, 5
      %v2976 = vrot.slane %v2975, 4
      %v2977 = vrot.slane %v2131, 5
      %v2978 = vsel %vm1299, %v2976, %v2977
      %v2979 = vrot.slane %v2977, 4
      %v2980 = vrot.slane %v2132, 5
      %v2981 = vsel %vm1299, %v2979, %v2980
      %v2982 = vrot.slane %v2858, 5
      %v2983 = vrot.slane %v2982, 4
      %v2984 = vrot.slane %v2134, 5
      %v2985 = vsel %vm1299, %v2983, %v2984
      %v2986 = vrot.slane %v2984, 4
      %v2987 = vrot.slane %v2135, 5
      %v2988 = vsel %vm1299, %v2986, %v2987
      %v2989 = vrot.slane %v2859, 5
      %v2990 = vrot.slane %v2989, 4
      %v2991 = vrot.slane %v2137, 5
      %v2992 = vsel %vm1299, %v2990, %v2991
      %v2993 = vrot.slane %v2991, 4
      %v2994 = vrot.slane %v2138, 5
      %v2995 = vsel %vm1299, %v2993, %v2994
      %v2996 = vrot.slane %v2860, 5
      %v2997 = vrot.slane %v2996, 4
      %v2998 = vrot.slane %v2140, 5
      %v2999 = vsel %vm1299, %v2997, %v2998
      %v3000 = vrot.slane %v2998, 4
      %v3001 = vrot.slane %v2141, 5
      %v3002 = vsel %vm1299, %v3000, %v3001
      %v3003 = vrot.slane %v2861, 5
      %v3004 = vrot.slane %v3003, 4
      %v3005 = vrot.slane %v2143, 5
      %v3006 = vsel %vm1299, %v3004, %v3005
      %v3007 = vrot.slane %v3005, 4
      %v3008 = vrot.slane %v2144, 5
      %v3009 = vsel %vm1299, %v3007, %v3008
      %v3010 = vrot.slane %v2862, 5
      %v3011 = vrot.slane %v3010, 4
      %v3012 = vrot.slane %v2146, 5
      %v3013 = vsel %vm1299, %v3011, %v3012
      %v3014 = vrot.slane %v3012, 4
      %v3015 = vrot.slane %v2147, 5
      %v3016 = vsel %vm1299, %v3014, %v3015
      %v3017 = vrot.slane %v2863, 5
      %v3018 = vrot.slane %v3017, 4
      %v3019 = vrot.slane %v2149, 5
      %v3020 = vsel %vm1299, %v3018, %v3019
      %v3021 = vrot.slane %v3019, 4
      %v3022 = vrot.slane %v2150, 5
      %v3023 = vsel %vm1299, %v3021, %v3022
      %s3024 = scalar_lea.vmem %s1, 100
      %v3025 = vld [vmem:[%s3024] sm:$0xf]
      %v3026 = vld [vmem:[%s3024 + $0x4] sm:$0xf]
      %v3027 = vld [vmem:[%s3024 + $0x8] sm:$0xf]
      %v3028 = vld [vmem:[%s3024 + $0xc] sm:$0xf]
      %v3029 = vld [vmem:[%s3024 + $0x10] sm:$0x3]
      %v3030 = vunpack.c.l.b16 %v2915
      %v3031 = vunpack.c.l.b16 %v2918
      %v3032 = vunpack.c.l.b16 %v2922
      %v3033 = vunpack.c.l.b16 %v2925
      %v3034 = vunpack.c.l.b16 %v2929
      %v3035 = vunpack.c.l.b16 %v2932
      %v3036 = vunpack.c.l.b16 %v2936
      %v3037 = vunpack.c.l.b16 %v2939
      %v3038 = vunpack.c.l.b16 %v2943
      %v3039 = vunpack.c.l.b16 %v2946
      %v3040 = vunpack.c.l.b16 %v2950
      %v3041 = vunpack.c.l.b16 %v2953
      %v3042 = vunpack.c.l.b16 %v2957
      %v3043 = vunpack.c.l.b16 %v2960
      %v3044 = vunpack.c.l.b16 %v2964
      %v3045 = vunpack.c.l.b16 %v2967
      %v3046 = vunpack.c.l.b16 %v2971
      %v3047 = vunpack.c.l.b16 %v2974
      %v3048 = vunpack.c.l.b16 %v2978
      %v3049 = vunpack.c.l.b16 %v2981
      %v3050 = vunpack.c.l.b16 %v2985
      %v3051 = vunpack.c.l.b16 %v2988
      %v3052 = vunpack.c.l.b16 %v2992
      %v3053 = vunpack.c.l.b16 %v2995
      %v3054 = vunpack.c.l.b16 %v2999
      %v3055 = vunpack.c.l.b16 %v3002
      %v3056 = vunpack.c.l.b16 %v3006
      %v3057 = vunpack.c.l.b16 %v3009
      %v3058 = vunpack.c.l.b16 %v3013
      %v3059 = vunpack.c.l.b16 %v3016
      %v3060 = vunpack.c.l.b16 %v3020
      %v3061 = vunpack.c.l.b16 %v3023
      %v3062 = vpack.c.b16 %v3031, %v3030
      %v3063 = vpack.c.b16 %v3033, %v3032
      %v3064 = vpack.c.b16 %v3035, %v3034
      %v3065 = vpack.c.b16 %v3037, %v3036
      %v3066 = vpack.c.b16 %v3039, %v3038
      %v3067 = vpack.c.b16 %v3041, %v3040
      %v3068 = vpack.c.b16 %v3043, %v3042
      %v3069 = vpack.c.b16 %v3045, %v3044
      %v3070 = vpack.c.b16 %v3047, %v3046
      %v3071 = vpack.c.b16 %v3049, %v3048
      %v3072 = vpack.c.b16 %v3051, %v3050
      %v3073 = vpack.c.b16 %v3053, %v3052
      %v3074 = vpack.c.b16 %v3055, %v3054
      %v3075 = vpack.c.b16 %v3057, %v3056
      %v3076 = vpack.c.b16 %v3059, %v3058
      %v3077 = vpack.c.b16 %v3061, %v3060
      %v3083 = vunpack.c.l.b16 %v3025
      %v3084 = vunpack.c.l.b16 %v3026
      %v3085 = vunpack.c.l.b16 %v3027
      %v3086 = vunpack.c.l.b16 %v3028
      %v3087 = vunpack.c.l.b16 %v3029
      %v3088 = vpack.c.b16 %v3084, %v3083
      %v3089 = vpack.c.b16 %v3086, %v3085
      %v3090 = vpack.c.b16 %v3087, %v3087
      %v3094 = vsel %vm728, %v3062, 0
      %v3097 = vsel %vm728, %v3063, 0
      %v3100 = vsel %vm728, %v3064, 0
      %v3103 = vsel %vm728, %v3065, 0
      %v3106 = vsel %vm728, %v3066, 0
      %v3109 = vsel %vm728, %v3067, 0
      %v3112 = vsel %vm728, %v3068, 0
      %v3115 = vsel %vm728, %v3069, 0
      %v3118 = vsel %vm728, %v3070, 0
      %v3121 = vsel %vm728, %v3071, 0
      %v3124 = vsel %vm728, %v3072, 0
      %v3127 = vsel %vm728, %v3073, 0
      %v3130 = vsel %vm728, %v3074, 0
      %v3133 = vsel %vm728, %v3075, 0
      %v3136 = vsel %vm728, %v3076, 0
      %v3139 = vsel %vm728, %v3077, 0
      %v3142 = vsel %vm777, %v3090, 0
      %3144 = vmatprep.subr.bf16.mxu0 0
      %3145 = vmatpush1.bf16.msra.mxu0 %v3088
      %3146 = vmatprep.subr.bf16.mxu0 0
      %3147 = vmatpush1.bf16.msra.mxu0 %v3089
      %3148 = vmatprep.subr.bf16.mxu0 0
      %3149 = vmatpush1.bf16.msra.mxu0 %v3142
      %3150 = vmatprep.subr.bf16.mxu0 0
      %3151 = vmatpush1.bf16.msra.mxu0 0
      %3152 = vmatprep.subr.bf16.mxu0 0
      %3153 = vmatpush1.bf16.msra.mxu0 0
      %3154 = vmatprep.subr.bf16.mxu0 0
      %3155 = vmatpush1.bf16.msra.mxu0 0
      %3156 = vmatprep.subr.bf16.mxu0 0
      %3157 = vmatpush1.bf16.msra.mxu0 0
      %3158 = vmatprep.subr.bf16.mxu0 0
      %3159 = vmatpush1.bf16.msra.mxu0 0
      %3160 = vmatprep.subr.bf16.mxu0 0
      %3161 = vmatpush1.bf16.msra.mxu0 0
      %3162 = vmatprep.subr.bf16.mxu0 0
      %3163 = vmatpush1.bf16.msra.mxu0 0
      %3164 = vmatprep.subr.bf16.mxu0 0
      %3165 = vmatpush1.bf16.msra.mxu0 0
      %3166 = vmatprep.subr.bf16.mxu0 0
      %3167 = vmatpush1.bf16.msra.mxu0 0
      %3168 = vmatprep.subr.bf16.mxu0 0
      %3169 = vmatpush1.bf16.msra.mxu0 0
      %3170 = vmatprep.subr.bf16.mxu0 0
      %3171 = vmatpush1.bf16.msra.mxu0 0
      %3172 = vmatprep.subr.bf16.mxu0 0
      %3173 = vmatpush1.bf16.msra.mxu0 0
      %3174 = vmatprep.subr.bf16.mxu0 0
      %3175 = vmatpush1.bf16.msra.mxu0 0
      %3176 = vmatprep.mubr.bf16.mxu0 0
      %3177 = vmatmul.mubr.bf16.gmra.mrb[0].mxu0 %v3094
      %v3178 = vpop.f32.mrb[0].mxu0
      %v3179 = vadd.f32 0.0, %v3178
      %v3180 = vpop.f32.mrb[0].mxu0
      %v3181 = vpop.f32.mrb[0].mxu0
      %v3182 = vadd.f32 0.0, %v3181
      %v3183 = vpop.f32.mrb[0].mxu0
      %3184 = vmatprep.mubr.bf16.mxu0 0
      %3185 = vmatmul.mubr.bf16.gmra.mrb[0].mxu0 %v3097
      %v3186 = vpop.f32.mrb[0].mxu0
      %v3187 = vadd.f32 0.0, %v3186
      %v3188 = vpop.f32.mrb[0].mxu0
      %v3189 = vpop.f32.mrb[0].mxu0
      %v3190 = vadd.f32 0.0, %v3189
      %v3191 = vpop.f32.mrb[0].mxu0
      %3192 = vmatprep.mubr.bf16.mxu0 0
      %3193 = vmatmul.mubr.bf16.gmra.mrb[0].mxu0 %v3100
      %v3194 = vpop.f32.mrb[0].mxu0
      %v3195 = vadd.f32 0.0, %v3194
      %v3196 = vpop.f32.mrb[0].mxu0
      %v3197 = vpop.f32.mrb[0].mxu0
      %v3198 = vadd.f32 0.0, %v3197
      %v3199 = vpop.f32.mrb[0].mxu0
      %3200 = vmatprep.mubr.bf16.mxu0 0
      %3201 = vmatmul.mubr.bf16.gmra.mrb[0].mxu0 %v3103
      %v3202 = vpop.f32.mrb[0].mxu0
      %v3203 = vadd.f32 0.0, %v3202
      %v3204 = vpop.f32.mrb[0].mxu0
      %v3205 = vpop.f32.mrb[0].mxu0
      %v3206 = vadd.f32 0.0, %v3205
      %v3207 = vpop.f32.mrb[0].mxu0
      %3208 = vmatprep.mubr.bf16.mxu0 0
      %3209 = vmatmul.mubr.bf16.gmra.mrb[0].mxu0 %v3106
      %v3210 = vpop.f32.mrb[0].mxu0
      %v3211 = vadd.f32 0.0, %v3210
      %v3212 = vpop.f32.mrb[0].mxu0
      %v3213 = vpop.f32.mrb[0].mxu0
      %v3214 = vadd.f32 0.0, %v3213
      %v3215 = vpop.f32.mrb[0].mxu0
      %3216 = vmatprep.mubr.bf16.mxu0 0
      %3217 = vmatmul.mubr.bf16.gmra.mrb[0].mxu0 %v3109
      %v3218 = vpop.f32.mrb[0].mxu0
      %v3219 = vadd.f32 0.0, %v3218
      %v3220 = vpop.f32.mrb[0].mxu0
      %v3221 = vpop.f32.mrb[0].mxu0
      %v3222 = vadd.f32 0.0, %v3221
      %v3223 = vpop.f32.mrb[0].mxu0
      %3224 = vmatprep.mubr.bf16.mxu0 0
      %3225 = vmatmul.mubr.bf16.gmra.mrb[0].mxu0 %v3112
      %v3226 = vpop.f32.mrb[0].mxu0
      %v3227 = vadd.f32 0.0, %v3226
      %v3228 = vpop.f32.mrb[0].mxu0
      %v3229 = vpop.f32.mrb[0].mxu0
      %v3230 = vadd.f32 0.0, %v3229
      %v3231 = vpop.f32.mrb[0].mxu0
      %3232 = vmatprep.mubr.bf16.mxu0 0
      %3233 = vmatmul.mubr.bf16.gmra.mrb[0].mxu0 %v3115
      %v3234 = vpop.f32.mrb[0].mxu0
      %v3235 = vadd.f32 0.0, %v3234
      %v3236 = vpop.f32.mrb[0].mxu0
      %v3237 = vpop.f32.mrb[0].mxu0
      %v3238 = vadd.f32 0.0, %v3237
      %v3239 = vpop.f32.mrb[0].mxu0
      %3240 = vmatprep.mubr.bf16.mxu0 0
      %3241 = vmatmul.mubr.bf16.gmra.mrb[0].mxu0 %v3118
      %v3242 = vpop.f32.mrb[0].mxu0
      %v3243 = vadd.f32 0.0, %v3242
      %v3244 = vpop.f32.mrb[0].mxu0
      %v3245 = vpop.f32.mrb[0].mxu0
      %v3246 = vadd.f32 0.0, %v3245
      %v3247 = vpop.f32.mrb[0].mxu0
      %3248 = vmatprep.mubr.bf16.mxu0 0
      %3249 = vmatmul.mubr.bf16.gmra.mrb[0].mxu0 %v3121
      %v3250 = vpop.f32.mrb[0].mxu0
      %v3251 = vadd.f32 0.0, %v3250
      %v3252 = vpop.f32.mrb[0].mxu0
      %v3253 = vpop.f32.mrb[0].mxu0
      %v3254 = vadd.f32 0.0, %v3253
      %v3255 = vpop.f32.mrb[0].mxu0
      %3256 = vmatprep.mubr.bf16.mxu0 0
      %3257 = vmatmul.mubr.bf16.gmra.mrb[0].mxu0 %v3124
      %v3258 = vpop.f32.mrb[0].mxu0
      %v3259 = vadd.f32 0.0, %v3258
      %v3260 = vpop.f32.mrb[0].mxu0
      %v3261 = vpop.f32.mrb[0].mxu0
      %v3262 = vadd.f32 0.0, %v3261
      %v3263 = vpop.f32.mrb[0].mxu0
      %3264 = vmatprep.mubr.bf16.mxu0 0
      %3265 = vmatmul.mubr.bf16.gmra.mrb[0].mxu0 %v3127
      %v3266 = vpop.f32.mrb[0].mxu0
      %v3267 = vadd.f32 0.0, %v3266
      %v3268 = vpop.f32.mrb[0].mxu0
      %v3269 = vpop.f32.mrb[0].mxu0
      %v3270 = vadd.f32 0.0, %v3269
      %v3271 = vpop.f32.mrb[0].mxu0
      %3272 = vmatprep.mubr.bf16.mxu0 0
      %3273 = vmatmul.mubr.bf16.gmra.mrb[0].mxu0 %v3130
      %v3274 = vpop.f32.mrb[0].mxu0
      %v3275 = vadd.f32 0.0, %v3274
      %v3276 = vpop.f32.mrb[0].mxu0
      %v3277 = vpop.f32.mrb[0].mxu0
      %v3278 = vadd.f32 0.0, %v3277
      %v3279 = vpop.f32.mrb[0].mxu0
      %3280 = vmatprep.mubr.bf16.mxu0 0
      %3281 = vmatmul.mubr.bf16.gmra.mrb[0].mxu0 %v3133
      %v3282 = vpop.f32.mrb[0].mxu0
      %v3283 = vadd.f32 0.0, %v3282
      %v3284 = vpop.f32.mrb[0].mxu0
      %v3285 = vpop.f32.mrb[0].mxu0
      %v3286 = vadd.f32 0.0, %v3285
      %v3287 = vpop.f32.mrb[0].mxu0
      %3288 = vmatprep.mubr.bf16.mxu0 0
      %3289 = vmatmul.mubr.bf16.gmra.mrb[0].mxu0 %v3136
      %v3290 = vpop.f32.mrb[0].mxu0
      %v3291 = vadd.f32 0.0, %v3290
      %v3292 = vpop.f32.mrb[0].mxu0
      %v3293 = vpop.f32.mrb[0].mxu0
      %v3294 = vadd.f32 0.0, %v3293
      %v3295 = vpop.f32.mrb[0].mxu0
      %3296 = vmatprep.mubr.bf16.mxu0 0
      %3297 = vmatmul.mubr.bf16.gmra.mrb[0].mxu0 %v3139
      %v3298 = vpop.f32.mrb[0].mxu0
      %v3299 = vadd.f32 0.0, %v3298
      %v3300 = vpop.f32.mrb[0].mxu0
      %v3301 = vpop.f32.mrb[0].mxu0
      %v3302 = vadd.f32 0.0, %v3301
      %v3303 = vpop.f32.mrb[0].mxu0
      %3304 = vdwg.mxu0
      %v3305 = vadd.f32 %v2816, %v3179
      %v3306 = vadd.f32 %v2817, %v3182
      %v3307 = vadd.f32 %v2818, %v3187
      %v3308 = vadd.f32 %v2819, %v3190
      %v3309 = vadd.f32 %v2820, %v3195
      %v3310 = vadd.f32 %v2821, %v3198
      %v3311 = vadd.f32 %v2822, %v3203
      %v3312 = vadd.f32 %v2823, %v3206
      %v3313 = vadd.f32 %v2824, %v3211
      %v3314 = vadd.f32 %v2825, %v3214
      %v3315 = vadd.f32 %v2826, %v3219
      %v3316 = vadd.f32 %v2827, %v3222
      %v3317 = vadd.f32 %v2828, %v3227
      %v3318 = vadd.f32 %v2829, %v3230
      %v3319 = vadd.f32 %v2830, %v3235
      %v3320 = vadd.f32 %v2831, %v3238
      %v3321 = vadd.f32 %v2832, %v3243
      %v3322 = vadd.f32 %v2833, %v3246
      %v3323 = vadd.f32 %v2834, %v3251
      %v3324 = vadd.f32 %v2835, %v3254
      %v3325 = vadd.f32 %v2836, %v3259
      %v3326 = vadd.f32 %v2837, %v3262
      %v3327 = vadd.f32 %v2838, %v3267
      %v3328 = vadd.f32 %v2839, %v3270
      %v3329 = vadd.f32 %v2840, %v3275
      %v3330 = vadd.f32 %v2841, %v3278
      %v3331 = vadd.f32 %v2842, %v3283
      %v3332 = vadd.f32 %v2843, %v3286
      %v3333 = vadd.f32 %v2844, %v3291
      %v3334 = vadd.f32 %v2845, %v3294
      %v3335 = vadd.f32 %v2846, %v3299
      %v3336 = vadd.f32 %v2847, %v3302
      %s3337 = scalar_lea.vmem %s207, 24
      %v3338 = vld [vmem:[%s3337] sm:$0xf]
      %v3339 = vld [vmem:[%s3337 + $0x4] sm:$0xf]
      %v3340 = vld [vmem:[%s3337 + $0xc] sm:$0xf]
      %v3341 = vld [vmem:[%s3337 + $0x10] sm:$0xf]
      %v3342 = vld [vmem:[%s3337 + $0x18] sm:$0xf]
      %v3343 = vld [vmem:[%s3337 + $0x1c] sm:$0xf]
      %v3344 = vld [vmem:[%s3337 + $0x24] sm:$0xf]
      %v3345 = vld [vmem:[%s3337 + $0x28] sm:$0xf]
      %v3346 = vld [vmem:[%s3337 + $0x30] sm:$0xf]
      %v3347 = vld [vmem:[%s3337 + $0x34] sm:$0xf]
      %v3348 = vld [vmem:[%s3337 + $0x3c] sm:$0xf]
      %v3349 = vld [vmem:[%s3337 + $0x40] sm:$0xf]
      %v3350 = vld [vmem:[%s3337 + $0x48] sm:$0xf]
      %v3351 = vld [vmem:[%s3337 + $0x4c] sm:$0xf]
      %v3352 = vld [vmem:[%s3337 + $0x54] sm:$0xf]
      %v3353 = vld [vmem:[%s3337 + $0x58] sm:$0xf]
      %v3354 = vld [vmem:[%s3337 + $0x60] sm:$0xf]
      %v3355 = vld [vmem:[%s3337 + $0x64] sm:$0xf]
      %v3356 = vld [vmem:[%s3337 + $0x6c] sm:$0xf]
      %v3357 = vld [vmem:[%s3337 + $0x70] sm:$0xf]
      %v3358 = vld [vmem:[%s3337 + $0x78] sm:$0xf]
      %v3359 = vld [vmem:[%s3337 + $0x7c] sm:$0xf]
      %v3360 = vld [vmem:[%s3337 + $0x84] sm:$0xf]
      %v3361 = vld [vmem:[%s3337 + $0x88] sm:$0xf]
      %v3362 = vld [vmem:[%s3337 + $0x90] sm:$0xf]
      %v3363 = vld [vmem:[%s3337 + $0x94] sm:$0xf]
      %v3364 = vld [vmem:[%s3337 + $0x9c] sm:$0xf]
      %v3365 = vld [vmem:[%s3337 + $0xa0] sm:$0xf]
      %v3366 = vld [vmem:[%s3337 + $0xa8] sm:$0xf]
      %v3367 = vld [vmem:[%s3337 + $0xac] sm:$0xf]
      %v3368 = vld [vmem:[%s3337 + $0xb4] sm:$0xf]
      %v3369 = vld [vmem:[%s3337 + $0xb8] sm:$0xf]
      %s3370 = scalar_lea.vmem %s1, 120
      %v3371 = vld [vmem:[%s3370] sm:$0xf]
      %v3372 = vld [vmem:[%s3370 + $0x4] sm:$0xf]
      %v3373 = vld [vmem:[%s3370 + $0x8] sm:$0xf]
      %v3374 = vld [vmem:[%s3370 + $0xc] sm:$0xf]
      %v3375 = vld [vmem:[%s3370 + $0x10] sm:$0x3]
      %v3408 = vunpack.c.l.b16 %v3338
      %v3409 = vunpack.c.l.b16 %v3339
      %v3410 = vunpack.c.l.b16 %v3340
      %v3411 = vunpack.c.l.b16 %v3341
      %v3412 = vunpack.c.l.b16 %v3342
      %v3413 = vunpack.c.l.b16 %v3343
      %v3414 = vunpack.c.l.b16 %v3344
      %v3415 = vunpack.c.l.b16 %v3345
      %v3416 = vunpack.c.l.b16 %v3346
      %v3417 = vunpack.c.l.b16 %v3347
      %v3418 = vunpack.c.l.b16 %v3348
      %v3419 = vunpack.c.l.b16 %v3349
      %v3420 = vunpack.c.l.b16 %v3350
      %v3421 = vunpack.c.l.b16 %v3351
      %v3422 = vunpack.c.l.b16 %v3352
      %v3423 = vunpack.c.l.b16 %v3353
      %v3424 = vunpack.c.l.b16 %v3354
      %v3425 = vunpack.c.l.b16 %v3355
      %v3426 = vunpack.c.l.b16 %v3356
      %v3427 = vunpack.c.l.b16 %v3357
      %v3428 = vunpack.c.l.b16 %v3358
      %v3429 = vunpack.c.l.b16 %v3359
      %v3430 = vunpack.c.l.b16 %v3360
      %v3431 = vunpack.c.l.b16 %v3361
      %v3432 = vunpack.c.l.b16 %v3362
      %v3433 = vunpack.c.l.b16 %v3363
      %v3434 = vunpack.c.l.b16 %v3364
      %v3435 = vunpack.c.l.b16 %v3365
      %v3436 = vunpack.c.l.b16 %v3366
      %v3437 = vunpack.c.l.b16 %v3367
      %v3438 = vunpack.c.l.b16 %v3368
      %v3439 = vunpack.c.l.b16 %v3369
      %v3440 = vpack.c.b16 %v3409, %v3408
      %v3441 = vpack.c.b16 %v3411, %v3410
      %v3442 = vpack.c.b16 %v3413, %v3412
      %v3443 = vpack.c.b16 %v3415, %v3414
      %v3444 = vpack.c.b16 %v3417, %v3416
      %v3445 = vpack.c.b16 %v3419, %v3418
      %v3446 = vpack.c.b16 %v3421, %v3420
      %v3447 = vpack.c.b16 %v3423, %v3422
      %v3448 = vpack.c.b16 %v3425, %v3424
      %v3449 = vpack.c.b16 %v3427, %v3426
      %v3450 = vpack.c.b16 %v3429, %v3428
      %v3451 = vpack.c.b16 %v3431, %v3430
      %v3452 = vpack.c.b16 %v3433, %v3432
      %v3453 = vpack.c.b16 %v3435, %v3434
      %v3454 = vpack.c.b16 %v3437, %v3436
      %v3455 = vpack.c.b16 %v3439, %v3438
      %v3461 = vunpack.c.l.b16 %v3371
      %v3462 = vunpack.c.l.b16 %v3372
      %v3463 = vunpack.c.l.b16 %v3373
      %v3464 = vunpack.c.l.b16 %v3374
      %v3465 = vunpack.c.l.b16 %v3375
      %v3466 = vpack.c.b16 %v3462, %v3461
      %v3467 = vpack.c.b16 %v3464, %v3463
      %v3468 = vpack.c.b16 %v3465, %v3465
      %v3472 = vsel %vm728, %v3440, 0
      %v3475 = vsel %vm728, %v3441, 0
      %v3478 = vsel %vm728, %v3442, 0
      %v3481 = vsel %vm728, %v3443, 0
      %v3484 = vsel %vm728, %v3444, 0
      %v3487 = vsel %vm728, %v3445, 0
      %v3490 = vsel %vm728, %v3446, 0
      %v3493 = vsel %vm728, %v3447, 0
      %v3496 = vsel %vm728, %v3448, 0
      %v3499 = vsel %vm728, %v3449, 0
      %v3502 = vsel %vm728, %v3450, 0
      %v3505 = vsel %vm728, %v3451, 0
      %v3508 = vsel %vm728, %v3452, 0
      %v3511 = vsel %vm728, %v3453, 0
      %v3514 = vsel %vm728, %v3454, 0
      %v3517 = vsel %vm728, %v3455, 0
      %v3520 = vsel %vm777, %v3468, 0
      %3522 = vmatprep.subr.bf16.mxu0 0
      %3523 = vmatpush1.bf16.msra.mxu0 %v3466
      %3524 = vmatprep.subr.bf16.mxu0 0
      %3525 = vmatpush1.bf16.msra.mxu0 %v3467
      %3526 = vmatprep.subr.bf16.mxu0 0
      %3527 = vmatpush1.bf16.msra.mxu0 %v3520
      %3528 = vmatprep.subr.bf16.mxu0 0
      %3529 = vmatpush1.bf16.msra.mxu0 0
      %3530 = vmatprep.subr.bf16.mxu0 0
      %3531 = vmatpush1.bf16.msra.mxu0 0
      %3532 = vmatprep.subr.bf16.mxu0 0
      %3533 = vmatpush1.bf16.msra.mxu0 0
      %3534 = vmatprep.subr.bf16.mxu0 0
      %3535 = vmatpush1.bf16.msra.mxu0 0
      %3536 = vmatprep.subr.bf16.mxu0 0
      %3537 = vmatpush1.bf16.msra.mxu0 0
      %3538 = vmatprep.subr.bf16.mxu0 0
      %3539 = vmatpush1.bf16.msra.mxu0 0
      %3540 = vmatprep.subr.bf16.mxu0 0
      %3541 = vmatpush1.bf16.msra.mxu0 0
      %3542 = vmatprep.subr.bf16.mxu0 0
      %3543 = vmatpush1.bf16.msra.mxu0 0
      %3544 = vmatprep.subr.bf16.mxu0 0
      %3545 = vmatpush1.bf16.msra.mxu0 0
      %3546 = vmatprep.subr.bf16.mxu0 0
      %3547 = vmatpush1.bf16.msra.mxu0 0
      %3548 = vmatprep.subr.bf16.mxu0 0
      %3549 = vmatpush1.bf16.msra.mxu0 0
      %3550 = vmatprep.subr.bf16.mxu0 0
      %3551 = vmatpush1.bf16.msra.mxu0 0
      %3552 = vmatprep.subr.bf16.mxu0 0
      %3553 = vmatpush1.bf16.msra.mxu0 0
      %3554 = vmatprep.mubr.bf16.mxu0 0
      %3555 = vmatmul.mubr.bf16.gmra.mrb[0].mxu0 %v3472
      %v3556 = vpop.f32.mrb[0].mxu0
      %v3557 = vadd.f32 0.0, %v3556
      %v3558 = vpop.f32.mrb[0].mxu0
      %v3559 = vpop.f32.mrb[0].mxu0
      %v3560 = vadd.f32 0.0, %v3559
      %v3561 = vpop.f32.mrb[0].mxu0
      %3562 = vmatprep.mubr.bf16.mxu0 0
      %3563 = vmatmul.mubr.bf16.gmra.mrb[0].mxu0 %v3475
      %v3564 = vpop.f32.mrb[0].mxu0
      %v3565 = vadd.f32 0.0, %v3564
      %v3566 = vpop.f32.mrb[0].mxu0
      %v3567 = vpop.f32.mrb[0].mxu0
      %v3568 = vadd.f32 0.0, %v3567
      %v3569 = vpop.f32.mrb[0].mxu0
      %3570 = vmatprep.mubr.bf16.mxu0 0
      %3571 = vmatmul.mubr.bf16.gmra.mrb[0].mxu0 %v3478
      %v3572 = vpop.f32.mrb[0].mxu0
      %v3573 = vadd.f32 0.0, %v3572
      %v3574 = vpop.f32.mrb[0].mxu0
      %v3575 = vpop.f32.mrb[0].mxu0
      %v3576 = vadd.f32 0.0, %v3575
      %v3577 = vpop.f32.mrb[0].mxu0
      %3578 = vmatprep.mubr.bf16.mxu0 0
      %3579 = vmatmul.mubr.bf16.gmra.mrb[0].mxu0 %v3481
      %v3580 = vpop.f32.mrb[0].mxu0
      %v3581 = vadd.f32 0.0, %v3580
      %v3582 = vpop.f32.mrb[0].mxu0
      %v3583 = vpop.f32.mrb[0].mxu0
      %v3584 = vadd.f32 0.0, %v3583
      %v3585 = vpop.f32.mrb[0].mxu0
      %3586 = vmatprep.mubr.bf16.mxu0 0
      %3587 = vmatmul.mubr.bf16.gmra.mrb[0].mxu0 %v3484
      %v3588 = vpop.f32.mrb[0].mxu0
      %v3589 = vadd.f32 0.0, %v3588
      %v3590 = vpop.f32.mrb[0].mxu0
      %v3591 = vpop.f32.mrb[0].mxu0
      %v3592 = vadd.f32 0.0, %v3591
      %v3593 = vpop.f32.mrb[0].mxu0
      %3594 = vmatprep.mubr.bf16.mxu0 0
      %3595 = vmatmul.mubr.bf16.gmra.mrb[0].mxu0 %v3487
      %v3596 = vpop.f32.mrb[0].mxu0
      %v3597 = vadd.f32 0.0, %v3596
      %v3598 = vpop.f32.mrb[0].mxu0
      %v3599 = vpop.f32.mrb[0].mxu0
      %v3600 = vadd.f32 0.0, %v3599
      %v3601 = vpop.f32.mrb[0].mxu0
      %3602 = vmatprep.mubr.bf16.mxu0 0
      %3603 = vmatmul.mubr.bf16.gmra.mrb[0].mxu0 %v3490
      %v3604 = vpop.f32.mrb[0].mxu0
      %v3605 = vadd.f32 0.0, %v3604
      %v3606 = vpop.f32.mrb[0].mxu0
      %v3607 = vpop.f32.mrb[0].mxu0
      %v3608 = vadd.f32 0.0, %v3607
      %v3609 = vpop.f32.mrb[0].mxu0
      %3610 = vmatprep.mubr.bf16.mxu0 0
      %3611 = vmatmul.mubr.bf16.gmra.mrb[0].mxu0 %v3493
      %v3612 = vpop.f32.mrb[0].mxu0
      %v3613 = vadd.f32 0.0, %v3612
      %v3614 = vpop.f32.mrb[0].mxu0
      %v3615 = vpop.f32.mrb[0].mxu0
      %v3616 = vadd.f32 0.0, %v3615
      %v3617 = vpop.f32.mrb[0].mxu0
      %3618 = vmatprep.mubr.bf16.mxu0 0
      %3619 = vmatmul.mubr.bf16.gmra.mrb[0].mxu0 %v3496
      %v3620 = vpop.f32.mrb[0].mxu0
      %v3621 = vadd.f32 0.0, %v3620
      %v3622 = vpop.f32.mrb[0].mxu0
      %v3623 = vpop.f32.mrb[0].mxu0
      %v3624 = vadd.f32 0.0, %v3623
      %v3625 = vpop.f32.mrb[0].mxu0
      %3626 = vmatprep.mubr.bf16.mxu0 0
      %3627 = vmatmul.mubr.bf16.gmra.mrb[0].mxu0 %v3499
      %v3628 = vpop.f32.mrb[0].mxu0
      %v3629 = vadd.f32 0.0, %v3628
      %v3630 = vpop.f32.mrb[0].mxu0
      %v3631 = vpop.f32.mrb[0].mxu0
      %v3632 = vadd.f32 0.0, %v3631
      %v3633 = vpop.f32.mrb[0].mxu0
      %3634 = vmatprep.mubr.bf16.mxu0 0
      %3635 = vmatmul.mubr.bf16.gmra.mrb[0].mxu0 %v3502
      %v3636 = vpop.f32.mrb[0].mxu0
      %v3637 = vadd.f32 0.0, %v3636
      %v3638 = vpop.f32.mrb[0].mxu0
      %v3639 = vpop.f32.mrb[0].mxu0
      %v3640 = vadd.f32 0.0, %v3639
      %v3641 = vpop.f32.mrb[0].mxu0
      %3642 = vmatprep.mubr.bf16.mxu0 0
      %3643 = vmatmul.mubr.bf16.gmra.mrb[0].mxu0 %v3505
      %v3644 = vpop.f32.mrb[0].mxu0
      %v3645 = vadd.f32 0.0, %v3644
      %v3646 = vpop.f32.mrb[0].mxu0
      %v3647 = vpop.f32.mrb[0].mxu0
      %v3648 = vadd.f32 0.0, %v3647
      %v3649 = vpop.f32.mrb[0].mxu0
      %3650 = vmatprep.mubr.bf16.mxu0 0
      %3651 = vmatmul.mubr.bf16.gmra.mrb[0].mxu0 %v3508
      %v3652 = vpop.f32.mrb[0].mxu0
      %v3653 = vadd.f32 0.0, %v3652
      %v3654 = vpop.f32.mrb[0].mxu0
      %v3655 = vpop.f32.mrb[0].mxu0
      %v3656 = vadd.f32 0.0, %v3655
      %v3657 = vpop.f32.mrb[0].mxu0
      %3658 = vmatprep.mubr.bf16.mxu0 0
      %3659 = vmatmul.mubr.bf16.gmra.mrb[0].mxu0 %v3511
      %v3660 = vpop.f32.mrb[0].mxu0
      %v3661 = vadd.f32 0.0, %v3660
      %v3662 = vpop.f32.mrb[0].mxu0
      %v3663 = vpop.f32.mrb[0].mxu0
      %v3664 = vadd.f32 0.0, %v3663
      %v3665 = vpop.f32.mrb[0].mxu0
      %3666 = vmatprep.mubr.bf16.mxu0 0
      %3667 = vmatmul.mubr.bf16.gmra.mrb[0].mxu0 %v3514
      %v3668 = vpop.f32.mrb[0].mxu0
      %v3669 = vadd.f32 0.0, %v3668
      %v3670 = vpop.f32.mrb[0].mxu0
      %v3671 = vpop.f32.mrb[0].mxu0
      %v3672 = vadd.f32 0.0, %v3671
      %v3673 = vpop.f32.mrb[0].mxu0
      %3674 = vmatprep.mubr.bf16.mxu0 0
      %3675 = vmatmul.mubr.bf16.gmra.mrb[0].mxu0 %v3517
      %v3676 = vpop.f32.mrb[0].mxu0
      %v3677 = vadd.f32 0.0, %v3676
      %v3678 = vpop.f32.mrb[0].mxu0
      %v3679 = vpop.f32.mrb[0].mxu0
      %v3680 = vadd.f32 0.0, %v3679
      %v3681 = vpop.f32.mrb[0].mxu0
      %3682 = vdwg.mxu0
      %v3683 = vadd.f32 %v3305, %v3557
      %v3684 = vadd.f32 %v3306, %v3560
      %v3685 = vadd.f32 %v3307, %v3565
      %v3686 = vadd.f32 %v3308, %v3568
      %v3687 = vadd.f32 %v3309, %v3573
      %v3688 = vadd.f32 %v3310, %v3576
      %v3689 = vadd.f32 %v3311, %v3581
      %v3690 = vadd.f32 %v3312, %v3584
      %v3691 = vadd.f32 %v3313, %v3589
      %v3692 = vadd.f32 %v3314, %v3592
      %v3693 = vadd.f32 %v3315, %v3597
      %v3694 = vadd.f32 %v3316, %v3600
      %v3695 = vadd.f32 %v3317, %v3605
      %v3696 = vadd.f32 %v3318, %v3608
      %v3697 = vadd.f32 %v3319, %v3613
      %v3698 = vadd.f32 %v3320, %v3616
      %v3699 = vadd.f32 %v3321, %v3621
      %v3700 = vadd.f32 %v3322, %v3624
      %v3701 = vadd.f32 %v3323, %v3629
      %v3702 = vadd.f32 %v3324, %v3632
      %v3703 = vadd.f32 %v3325, %v3637
      %v3704 = vadd.f32 %v3326, %v3640
      %v3705 = vadd.f32 %v3327, %v3645
      %v3706 = vadd.f32 %v3328, %v3648
      %v3707 = vadd.f32 %v3329, %v3653
      %v3708 = vadd.f32 %v3330, %v3656
      %v3709 = vadd.f32 %v3331, %v3661
      %v3710 = vadd.f32 %v3332, %v3664
      %v3711 = vadd.f32 %v3333, %v3669
      %v3712 = vadd.f32 %v3334, %v3672
      %v3713 = vadd.f32 %v3335, %v3677
      %v3714 = vadd.f32 %v3336, %v3680
      %v3715 = vld [vmem:[%s3337] sm:$0xf]
      %v3716 = vld [vmem:[%s3337 + $0x4] sm:$0xf]
      %v3717 = vld [vmem:[%s3337 + $0x8] sm:$0x1]
      %v3718 = vld [vmem:[%s3337 + $0xc] sm:$0xf]
      %v3719 = vld [vmem:[%s3337 + $0x10] sm:$0xf]
      %v3720 = vld [vmem:[%s3337 + $0x14] sm:$0x1]
      %v3721 = vld [vmem:[%s3337 + $0x18] sm:$0xf]
      %v3722 = vld [vmem:[%s3337 + $0x1c] sm:$0xf]
      %v3723 = vld [vmem:[%s3337 + $0x20] sm:$0x1]
      %v3724 = vld [vmem:[%s3337 + $0x24] sm:$0xf]
      %v3725 = vld [vmem:[%s3337 + $0x28] sm:$0xf]
      %v3726 = vld [vmem:[%s3337 + $0x2c] sm:$0x1]
      %v3727 = vld [vmem:[%s3337 + $0x30] sm:$0xf]
      %v3728 = vld [vmem:[%s3337 + $0x34] sm:$0xf]
      %v3729 = vld [vmem:[%s3337 + $0x38] sm:$0x1]
      %v3730 = vld [vmem:[%s3337 + $0x3c] sm:$0xf]
      %v3731 = vld [vmem:[%s3337 + $0x40] sm:$0xf]
      %v3732 = vld [vmem:[%s3337 + $0x44] sm:$0x1]
      %v3733 = vld [vmem:[%s3337 + $0x48] sm:$0xf]
      %v3734 = vld [vmem:[%s3337 + $0x4c] sm:$0xf]
      %v3735 = vld [vmem:[%s3337 + $0x50] sm:$0x1]
      %v3736 = vld [vmem:[%s3337 + $0x54] sm:$0xf]
      %v3737 = vld [vmem:[%s3337 + $0x58] sm:$0xf]
      %v3738 = vld [vmem:[%s3337 + $0x5c] sm:$0x1]
      %v3739 = vld [vmem:[%s3337 + $0x60] sm:$0xf]
      %v3740 = vld [vmem:[%s3337 + $0x64] sm:$0xf]
      %v3741 = vld [vmem:[%s3337 + $0x68] sm:$0x1]
      %v3742 = vld [vmem:[%s3337 + $0x6c] sm:$0xf]
      %v3743 = vld [vmem:[%s3337 + $0x70] sm:$0xf]
      %v3744 = vld [vmem:[%s3337 + $0x74] sm:$0x1]
      %v3745 = vld [vmem:[%s3337 + $0x78] sm:$0xf]
      %v3746 = vld [vmem:[%s3337 + $0x7c] sm:$0xf]
      %v3747 = vld [vmem:[%s3337 + $0x80] sm:$0x1]
      %v3748 = vld [vmem:[%s3337 + $0x84] sm:$0xf]
      %v3749 = vld [vmem:[%s3337 + $0x88] sm:$0xf]
      %v3750 = vld [vmem:[%s3337 + $0x8c] sm:$0x1]
      %v3751 = vld [vmem:[%s3337 + $0x90] sm:$0xf]
      %v3752 = vld [vmem:[%s3337 + $0x94] sm:$0xf]
      %v3753 = vld [vmem:[%s3337 + $0x98] sm:$0x1]
      %v3754 = vld [vmem:[%s3337 + $0x9c] sm:$0xf]
      %v3755 = vld [vmem:[%s3337 + $0xa0] sm:$0xf]
      %v3756 = vld [vmem:[%s3337 + $0xa4] sm:$0x1]
      %v3757 = vld [vmem:[%s3337 + $0xa8] sm:$0xf]
      %v3758 = vld [vmem:[%s3337 + $0xac] sm:$0xf]
      %v3759 = vld [vmem:[%s3337 + $0xb0] sm:$0x1]
      %v3760 = vld [vmem:[%s3337 + $0xb4] sm:$0xf]
      %v3761 = vld [vmem:[%s3337 + $0xb8] sm:$0xf]
      %v3762 = vld [vmem:[%s3337 + $0xbc] sm:$0x1]
      %v3764 = vshrl.u32 %v3715, 16
      %v3766 = vrot.slane %v3764, 4
      %v3767 = vshll.u32 %v3715, 16
      %v3769 = vrot.slane %v3767, 5
      %v3770 = vor.u32 %v3766, %v3769
      %v3771 = vrot.slane %v3770, 4
      %v3773 = vshll.u32 %v3716, 16
      %v3775 = vrot.slane %v3773, 5
      %v3776 = vsel %vm274, %v3771, %v3775
      %v3777 = vshrl.u32 %v3716, 16
      %v3779 = vrot.slane %v3777, 4
      %v3780 = vor.u32 %v3779, %v3775
      %v3781 = vrot.slane %v3780, 4
      %v3783 = vshll.u32 %v3717, 16
      %v3785 = vrot.slane %v3783, 5
      %v3786 = vsel %vm274, %v3781, %v3785
      %v3788 = vshrl.u32 %v3718, 16
      %v3790 = vrot.slane %v3788, 4
      %v3791 = vshll.u32 %v3718, 16
      %v3793 = vrot.slane %v3791, 5
      %v3794 = vor.u32 %v3790, %v3793
      %v3795 = vrot.slane %v3794, 4
      %v3797 = vshll.u32 %v3719, 16
      %v3799 = vrot.slane %v3797, 5
      %v3800 = vsel %vm274, %v3795, %v3799
      %v3801 = vshrl.u32 %v3719, 16
      %v3803 = vrot.slane %v3801, 4
      %v3804 = vor.u32 %v3803, %v3799
      %v3805 = vrot.slane %v3804, 4
      %v3807 = vshll.u32 %v3720, 16
      %v3809 = vrot.slane %v3807, 5
      %v3810 = vsel %vm274, %v3805, %v3809
      %v3812 = vshrl.u32 %v3721, 16
      %v3814 = vrot.slane %v3812, 4
      %v3815 = vshll.u32 %v3721, 16
      %v3817 = vrot.slane %v3815, 5
      %v3818 = vor.u32 %v3814, %v3817
      %v3819 = vrot.slane %v3818, 4
      %v3821 = vshll.u32 %v3722, 16
      %v3823 = vrot.slane %v3821, 5
      %v3824 = vsel %vm274, %v3819, %v3823
      %v3825 = vshrl.u32 %v3722, 16
      %v3827 = vrot.slane %v3825, 4
      %v3828 = vor.u32 %v3827, %v3823
      %v3829 = vrot.slane %v3828, 4
      %v3831 = vshll.u32 %v3723, 16
      %v3833 = vrot.slane %v3831, 5
      %v3834 = vsel %vm274, %v3829, %v3833
      %v3836 = vshrl.u32 %v3724, 16
      %v3838 = vrot.slane %v3836, 4
      %v3839 = vshll.u32 %v3724, 16
      %v3841 = vrot.slane %v3839, 5
      %v3842 = vor.u32 %v3838, %v3841
      %v3843 = vrot.slane %v3842, 4
      %v3845 = vshll.u32 %v3725, 16
      %v3847 = vrot.slane %v3845, 5
      %v3848 = vsel %vm274, %v3843, %v3847
      %v3849 = vshrl.u32 %v3725, 16
      %v3851 = vrot.slane %v3849, 4
      %v3852 = vor.u32 %v3851, %v3847
      %v3853 = vrot.slane %v3852, 4
      %v3855 = vshll.u32 %v3726, 16
      %v3857 = vrot.slane %v3855, 5
      %v3858 = vsel %vm274, %v3853, %v3857
      %v3860 = vshrl.u32 %v3727, 16
      %v3862 = vrot.slane %v3860, 4
      %v3863 = vshll.u32 %v3727, 16
      %v3865 = vrot.slane %v3863, 5
      %v3866 = vor.u32 %v3862, %v3865
      %v3867 = vrot.slane %v3866, 4
      %v3869 = vshll.u32 %v3728, 16
      %v3871 = vrot.slane %v3869, 5
      %v3872 = vsel %vm274, %v3867, %v3871
      %v3873 = vshrl.u32 %v3728, 16
      %v3875 = vrot.slane %v3873, 4
      %v3876 = vor.u32 %v3875, %v3871
      %v3877 = vrot.slane %v3876, 4
      %v3879 = vshll.u32 %v3729, 16
      %v3881 = vrot.slane %v3879, 5
      %v3882 = vsel %vm274, %v3877, %v3881
      %v3884 = vshrl.u32 %v3730, 16
      %v3886 = vrot.slane %v3884, 4
      %v3887 = vshll.u32 %v3730, 16
      %v3889 = vrot.slane %v3887, 5
      %v3890 = vor.u32 %v3886, %v3889
      %v3891 = vrot.slane %v3890, 4
      %v3893 = vshll.u32 %v3731, 16
      %v3895 = vrot.slane %v3893, 5
      %v3896 = vsel %vm274, %v3891, %v3895
      %v3897 = vshrl.u32 %v3731, 16
      %v3899 = vrot.slane %v3897, 4
      %v3900 = vor.u32 %v3899, %v3895
      %v3901 = vrot.slane %v3900, 4
      %v3903 = vshll.u32 %v3732, 16
      %v3905 = vrot.slane %v3903, 5
      %v3906 = vsel %vm274, %v3901, %v3905
      %v3908 = vshrl.u32 %v3733, 16
      %v3910 = vrot.slane %v3908, 4
      %v3911 = vshll.u32 %v3733, 16
      %v3913 = vrot.slane %v3911, 5
      %v3914 = vor.u32 %v3910, %v3913
      %v3915 = vrot.slane %v3914, 4
      %v3917 = vshll.u32 %v3734, 16
      %v3919 = vrot.slane %v3917, 5
      %v3920 = vsel %vm274, %v3915, %v3919
      %v3921 = vshrl.u32 %v3734, 16
      %v3923 = vrot.slane %v3921, 4
      %v3924 = vor.u32 %v3923, %v3919
      %v3925 = vrot.slane %v3924, 4
      %v3927 = vshll.u32 %v3735, 16
      %v3929 = vrot.slane %v3927, 5
      %v3930 = vsel %vm274, %v3925, %v3929
      %v3932 = vshrl.u32 %v3736, 16
      %v3934 = vrot.slane %v3932, 4
      %v3935 = vshll.u32 %v3736, 16
      %v3937 = vrot.slane %v3935, 5
      %v3938 = vor.u32 %v3934, %v3937
      %v3939 = vrot.slane %v3938, 4
      %v3941 = vshll.u32 %v3737, 16
      %v3943 = vrot.slane %v3941, 5
      %v3944 = vsel %vm274, %v3939, %v3943
      %v3945 = vshrl.u32 %v3737, 16
      %v3947 = vrot.slane %v3945, 4
      %v3948 = vor.u32 %v3947, %v3943
      %v3949 = vrot.slane %v3948, 4
      %v3951 = vshll.u32 %v3738, 16
      %v3953 = vrot.slane %v3951, 5
      %v3954 = vsel %vm274, %v3949, %v3953
      %v3956 = vshrl.u32 %v3739, 16
      %v3958 = vrot.slane %v3956, 4
      %v3959 = vshll.u32 %v3739, 16
      %v3961 = vrot.slane %v3959, 5
      %v3962 = vor.u32 %v3958, %v3961
      %v3963 = vrot.slane %v3962, 4
      %v3965 = vshll.u32 %v3740, 16
      %v3967 = vrot.slane %v3965, 5
      %v3968 = vsel %vm274, %v3963, %v3967
      %v3969 = vshrl.u32 %v3740, 16
      %v3971 = vrot.slane %v3969, 4
      %v3972 = vor.u32 %v3971, %v3967
      %v3973 = vrot.slane %v3972, 4
      %v3975 = vshll.u32 %v3741, 16
      %v3977 = vrot.slane %v3975, 5
      %v3978 = vsel %vm274, %v3973, %v3977
      %v3980 = vshrl.u32 %v3742, 16
      %v3982 = vrot.slane %v3980, 4
      %v3983 = vshll.u32 %v3742, 16
      %v3985 = vrot.slane %v3983, 5
      %v3986 = vor.u32 %v3982, %v3985
      %v3987 = vrot.slane %v3986, 4
      %v3989 = vshll.u32 %v3743, 16
      %v3991 = vrot.slane %v3989, 5
      %v3992 = vsel %vm274, %v3987, %v3991
      %v3993 = vshrl.u32 %v3743, 16
      %v3995 = vrot.slane %v3993, 4
      %v3996 = vor.u32 %v3995, %v3991
      %v3997 = vrot.slane %v3996, 4
      %v3999 = vshll.u32 %v3744, 16
      %v4001 = vrot.slane %v3999, 5
      %v4002 = vsel %vm274, %v3997, %v4001
      %v4004 = vshrl.u32 %v3745, 16
      %v4006 = vrot.slane %v4004, 4
      %v4007 = vshll.u32 %v3745, 16
      %v4009 = vrot.slane %v4007, 5
      %v4010 = vor.u32 %v4006, %v4009
      %v4011 = vrot.slane %v4010, 4
      %v4013 = vshll.u32 %v3746, 16
      %v4015 = vrot.slane %v4013, 5
      %v4016 = vsel %vm274, %v4011, %v4015
      %v4017 = vshrl.u32 %v3746, 16
      %v4019 = vrot.slane %v4017, 4
      %v4020 = vor.u32 %v4019, %v4015
      %v4021 = vrot.slane %v4020, 4
      %v4023 = vshll.u32 %v3747, 16
      %v4025 = vrot.slane %v4023, 5
      %v4026 = vsel %vm274, %v4021, %v4025
      %v4028 = vshrl.u32 %v3748, 16
      %v4030 = vrot.slane %v4028, 4
      %v4031 = vshll.u32 %v3748, 16
      %v4033 = vrot.slane %v4031, 5
      %v4034 = vor.u32 %v4030, %v4033
      %v4035 = vrot.slane %v4034, 4
      %v4037 = vshll.u32 %v3749, 16
      %v4039 = vrot.slane %v4037, 5
      %v4040 = vsel %vm274, %v4035, %v4039
      %v4041 = vshrl.u32 %v3749, 16
      %v4043 = vrot.slane %v4041, 4
      %v4044 = vor.u32 %v4043, %v4039
      %v4045 = vrot.slane %v4044, 4
      %v4047 = vshll.u32 %v3750, 16
      %v4049 = vrot.slane %v4047, 5
      %v4050 = vsel %vm274, %v4045, %v4049
      %v4052 = vshrl.u32 %v3751, 16
      %v4054 = vrot.slane %v4052, 4
      %v4055 = vshll.u32 %v3751, 16
      %v4057 = vrot.slane %v4055, 5
      %v4058 = vor.u32 %v4054, %v4057
      %v4059 = vrot.slane %v4058, 4
      %v4061 = vshll.u32 %v3752, 16
      %v4063 = vrot.slane %v4061, 5
      %v4064 = vsel %vm274, %v4059, %v4063
      %v4065 = vshrl.u32 %v3752, 16
      %v4067 = vrot.slane %v4065, 4
      %v4068 = vor.u32 %v4067, %v4063
      %v4069 = vrot.slane %v4068, 4
      %v4071 = vshll.u32 %v3753, 16
      %v4073 = vrot.slane %v4071, 5
      %v4074 = vsel %vm274, %v4069, %v4073
      %v4076 = vshrl.u32 %v3754, 16
      %v4078 = vrot.slane %v4076, 4
      %v4079 = vshll.u32 %v3754, 16
      %v4081 = vrot.slane %v4079, 5
      %v4082 = vor.u32 %v4078, %v4081
      %v4083 = vrot.slane %v4082, 4
      %v4085 = vshll.u32 %v3755, 16
      %v4087 = vrot.slane %v4085, 5
      %v4088 = vsel %vm274, %v4083, %v4087
      %v4089 = vshrl.u32 %v3755, 16
      %v4091 = vrot.slane %v4089, 4
      %v4092 = vor.u32 %v4091, %v4087
      %v4093 = vrot.slane %v4092, 4
      %v4095 = vshll.u32 %v3756, 16
      %v4097 = vrot.slane %v4095, 5
      %v4098 = vsel %vm274, %v4093, %v4097
      %v4100 = vshrl.u32 %v3757, 16
      %v4102 = vrot.slane %v4100, 4
      %v4103 = vshll.u32 %v3757, 16
      %v4105 = vrot.slane %v4103, 5
      %v4106 = vor.u32 %v4102, %v4105
      %v4107 = vrot.slane %v4106, 4
      %v4109 = vshll.u32 %v3758, 16
      %v4111 = vrot.slane %v4109, 5
      %v4112 = vsel %vm274, %v4107, %v4111
      %v4113 = vshrl.u32 %v3758, 16
      %v4115 = vrot.slane %v4113, 4
      %v4116 = vor.u32 %v4115, %v4111
      %v4117 = vrot.slane %v4116, 4
      %v4119 = vshll.u32 %v3759, 16
      %v4121 = vrot.slane %v4119, 5
      %v4122 = vsel %vm274, %v4117, %v4121
      %v4124 = vshrl.u32 %v3760, 16
      %v4126 = vrot.slane %v4124, 4
      %v4127 = vshll.u32 %v3760, 16
      %v4129 = vrot.slane %v4127, 5
      %v4130 = vor.u32 %v4126, %v4129
      %v4131 = vrot.slane %v4130, 4
      %v4133 = vshll.u32 %v3761, 16
      %v4135 = vrot.slane %v4133, 5
      %v4136 = vsel %vm274, %v4131, %v4135
      %v4137 = vshrl.u32 %v3761, 16
      %v4139 = vrot.slane %v4137, 4
      %v4140 = vor.u32 %v4139, %v4135
      %v4141 = vrot.slane %v4140, 4
      %v4143 = vshll.u32 %v3762, 16
      %v4145 = vrot.slane %v4143, 5
      %v4146 = vsel %vm274, %v4141, %v4145
      %s4147 = scalar_lea.vmem %s1, 140
      %v4148 = vld [vmem:[%s4147] sm:$0xf]
      %v4149 = vld [vmem:[%s4147 + $0x4] sm:$0xf]
      %v4150 = vld [vmem:[%s4147 + $0x8] sm:$0xf]
      %v4151 = vld [vmem:[%s4147 + $0xc] sm:$0xf]
      %v4152 = vld [vmem:[%s4147 + $0x10] sm:$0x3]
      %v4153 = vunpack.c.l.b16 %v3776
      %v4154 = vunpack.c.l.b16 %v3786
      %v4155 = vunpack.c.l.b16 %v3800
      %v4156 = vunpack.c.l.b16 %v3810
      %v4157 = vunpack.c.l.b16 %v3824
      %v4158 = vunpack.c.l.b16 %v3834
      %v4159 = vunpack.c.l.b16 %v3848
      %v4160 = vunpack.c.l.b16 %v3858
      %v4161 = vunpack.c.l.b16 %v3872
      %v4162 = vunpack.c.l.b16 %v3882
      %v4163 = vunpack.c.l.b16 %v3896
      %v4164 = vunpack.c.l.b16 %v3906
      %v4165 = vunpack.c.l.b16 %v3920
      %v4166 = vunpack.c.l.b16 %v3930
      %v4167 = vunpack.c.l.b16 %v3944
      %v4168 = vunpack.c.l.b16 %v3954
      %v4169 = vunpack.c.l.b16 %v3968
      %v4170 = vunpack.c.l.b16 %v3978
      %v4171 = vunpack.c.l.b16 %v3992
      %v4172 = vunpack.c.l.b16 %v4002
      %v4173 = vunpack.c.l.b16 %v4016
      %v4174 = vunpack.c.l.b16 %v4026
      %v4175 = vunpack.c.l.b16 %v4040
      %v4176 = vunpack.c.l.b16 %v4050
      %v4177 = vunpack.c.l.b16 %v4064
      %v4178 = vunpack.c.l.b16 %v4074
      %v4179 = vunpack.c.l.b16 %v4088
      %v4180 = vunpack.c.l.b16 %v4098
      %v4181 = vunpack.c.l.b16 %v4112
      %v4182 = vunpack.c.l.b16 %v4122
      %v4183 = vunpack.c.l.b16 %v4136
      %v4184 = vunpack.c.l.b16 %v4146
      %v4185 = vpack.c.b16 %v4154, %v4153
      %v4186 = vpack.c.b16 %v4156, %v4155
      %v4187 = vpack.c.b16 %v4158, %v4157
      %v4188 = vpack.c.b16 %v4160, %v4159
      %v4189 = vpack.c.b16 %v4162, %v4161
      %v4190 = vpack.c.b16 %v4164, %v4163
      %v4191 = vpack.c.b16 %v4166, %v4165
      %v4192 = vpack.c.b16 %v4168, %v4167
      %v4193 = vpack.c.b16 %v4170, %v4169
      %v4194 = vpack.c.b16 %v4172, %v4171
      %v4195 = vpack.c.b16 %v4174, %v4173
      %v4196 = vpack.c.b16 %v4176, %v4175
      %v4197 = vpack.c.b16 %v4178, %v4177
      %v4198 = vpack.c.b16 %v4180, %v4179
      %v4199 = vpack.c.b16 %v4182, %v4181
      %v4200 = vpack.c.b16 %v4184, %v4183
      %v4206 = vunpack.c.l.b16 %v4148
      %v4207 = vunpack.c.l.b16 %v4149
      %v4208 = vunpack.c.l.b16 %v4150
      %v4209 = vunpack.c.l.b16 %v4151
      %v4210 = vunpack.c.l.b16 %v4152
      %v4211 = vpack.c.b16 %v4207, %v4206
      %v4212 = vpack.c.b16 %v4209, %v4208
      %v4213 = vpack.c.b16 %v4210, %v4210
      %v4217 = vsel %vm728, %v4185, 0
      %v4220 = vsel %vm728, %v4186, 0
      %v4223 = vsel %vm728, %v4187, 0
      %v4226 = vsel %vm728, %v4188, 0
      %v4229 = vsel %vm728, %v4189, 0
      %v4232 = vsel %vm728, %v4190, 0
      %v4235 = vsel %vm728, %v4191, 0
      %v4238 = vsel %vm728, %v4192, 0
      %v4241 = vsel %vm728, %v4193, 0
      %v4244 = vsel %vm728, %v4194, 0
      %v4247 = vsel %vm728, %v4195, 0
      %v4250 = vsel %vm728, %v4196, 0
      %v4253 = vsel %vm728, %v4197, 0
      %v4256 = vsel %vm728, %v4198, 0
      %v4259 = vsel %vm728, %v4199, 0
      %v4262 = vsel %vm728, %v4200, 0
      %v4265 = vsel %vm777, %v4213, 0
      %4267 = vmatprep.subr.bf16.mxu0 0
      %4268 = vmatpush1.bf16.msra.mxu0 %v4211
      %4269 = vmatprep.subr.bf16.mxu0 0
      %4270 = vmatpush1.bf16.msra.mxu0 %v4212
      %4271 = vmatprep.subr.bf16.mxu0 0
      %4272 = vmatpush1.bf16.msra.mxu0 %v4265
      %4273 = vmatprep.subr.bf16.mxu0 0
      %4274 = vmatpush1.bf16.msra.mxu0 0
      %4275 = vmatprep.subr.bf16.mxu0 0
      %4276 = vmatpush1.bf16.msra.mxu0 0
      %4277 = vmatprep.subr.bf16.mxu0 0
      %4278 = vmatpush1.bf16.msra.mxu0 0
      %4279 = vmatprep.subr.bf16.mxu0 0
      %4280 = vmatpush1.bf16.msra.mxu0 0
      %4281 = vmatprep.subr.bf16.mxu0 0
      %4282 = vmatpush1.bf16.msra.mxu0 0
      %4283 = vmatprep.subr.bf16.mxu0 0
      %4284 = vmatpush1.bf16.msra.mxu0 0
      %4285 = vmatprep.subr.bf16.mxu0 0
      %4286 = vmatpush1.bf16.msra.mxu0 0
      %4287 = vmatprep.subr.bf16.mxu0 0
      %4288 = vmatpush1.bf16.msra.mxu0 0
      %4289 = vmatprep.subr.bf16.mxu0 0
      %4290 = vmatpush1.bf16.msra.mxu0 0
      %4291 = vmatprep.subr.bf16.mxu0 0
      %4292 = vmatpush1.bf16.msra.mxu0 0
      %4293 = vmatprep.subr.bf16.mxu0 0
      %4294 = vmatpush1.bf16.msra.mxu0 0
      %4295 = vmatprep.subr.bf16.mxu0 0
      %4296 = vmatpush1.bf16.msra.mxu0 0
      %4297 = vmatprep.subr.bf16.mxu0 0
      %4298 = vmatpush1.bf16.msra.mxu0 0
      %4299 = vmatprep.mubr.bf16.mxu0 0
      %4300 = vmatmul.mubr.bf16.gmra.mrb[0].mxu0 %v4217
      %v4301 = vpop.f32.mrb[0].mxu0
      %v4302 = vadd.f32 0.0, %v4301
      %v4303 = vpop.f32.mrb[0].mxu0
      %v4304 = vpop.f32.mrb[0].mxu0
      %v4305 = vadd.f32 0.0, %v4304
      %v4306 = vpop.f32.mrb[0].mxu0
      %4307 = vmatprep.mubr.bf16.mxu0 0
      %4308 = vmatmul.mubr.bf16.gmra.mrb[0].mxu0 %v4220
      %v4309 = vpop.f32.mrb[0].mxu0
      %v4310 = vadd.f32 0.0, %v4309
      %v4311 = vpop.f32.mrb[0].mxu0
      %v4312 = vpop.f32.mrb[0].mxu0
      %v4313 = vadd.f32 0.0, %v4312
      %v4314 = vpop.f32.mrb[0].mxu0
      %4315 = vmatprep.mubr.bf16.mxu0 0
      %4316 = vmatmul.mubr.bf16.gmra.mrb[0].mxu0 %v4223
      %v4317 = vpop.f32.mrb[0].mxu0
      %v4318 = vadd.f32 0.0, %v4317
      %v4319 = vpop.f32.mrb[0].mxu0
      %v4320 = vpop.f32.mrb[0].mxu0
      %v4321 = vadd.f32 0.0, %v4320
      %v4322 = vpop.f32.mrb[0].mxu0
      %4323 = vmatprep.mubr.bf16.mxu0 0
      %4324 = vmatmul.mubr.bf16.gmra.mrb[0].mxu0 %v4226
      %v4325 = vpop.f32.mrb[0].mxu0
      %v4326 = vadd.f32 0.0, %v4325
      %v4327 = vpop.f32.mrb[0].mxu0
      %v4328 = vpop.f32.mrb[0].mxu0
      %v4329 = vadd.f32 0.0, %v4328
      %v4330 = vpop.f32.mrb[0].mxu0
      %4331 = vmatprep.mubr.bf16.mxu0 0
      %4332 = vmatmul.mubr.bf16.gmra.mrb[0].mxu0 %v4229
      %v4333 = vpop.f32.mrb[0].mxu0
      %v4334 = vadd.f32 0.0, %v4333
      %v4335 = vpop.f32.mrb[0].mxu0
      %v4336 = vpop.f32.mrb[0].mxu0
      %v4337 = vadd.f32 0.0, %v4336
      %v4338 = vpop.f32.mrb[0].mxu0
      %4339 = vmatprep.mubr.bf16.mxu0 0
      %4340 = vmatmul.mubr.bf16.gmra.mrb[0].mxu0 %v4232
      %v4341 = vpop.f32.mrb[0].mxu0
      %v4342 = vadd.f32 0.0, %v4341
      %v4343 = vpop.f32.mrb[0].mxu0
      %v4344 = vpop.f32.mrb[0].mxu0
      %v4345 = vadd.f32 0.0, %v4344
      %v4346 = vpop.f32.mrb[0].mxu0
      %4347 = vmatprep.mubr.bf16.mxu0 0
      %4348 = vmatmul.mubr.bf16.gmra.mrb[0].mxu0 %v4235
      %v4349 = vpop.f32.mrb[0].mxu0
      %v4350 = vadd.f32 0.0, %v4349
      %v4351 = vpop.f32.mrb[0].mxu0
      %v4352 = vpop.f32.mrb[0].mxu0
      %v4353 = vadd.f32 0.0, %v4352
      %v4354 = vpop.f32.mrb[0].mxu0
      %4355 = vmatprep.mubr.bf16.mxu0 0
      %4356 = vmatmul.mubr.bf16.gmra.mrb[0].mxu0 %v4238
      %v4357 = vpop.f32.mrb[0].mxu0
      %v4358 = vadd.f32 0.0, %v4357
      %v4359 = vpop.f32.mrb[0].mxu0
      %v4360 = vpop.f32.mrb[0].mxu0
      %v4361 = vadd.f32 0.0, %v4360
      %v4362 = vpop.f32.mrb[0].mxu0
      %4363 = vmatprep.mubr.bf16.mxu0 0
      %4364 = vmatmul.mubr.bf16.gmra.mrb[0].mxu0 %v4241
      %v4365 = vpop.f32.mrb[0].mxu0
      %v4366 = vadd.f32 0.0, %v4365
      %v4367 = vpop.f32.mrb[0].mxu0
      %v4368 = vpop.f32.mrb[0].mxu0
      %v4369 = vadd.f32 0.0, %v4368
      %v4370 = vpop.f32.mrb[0].mxu0
      %4371 = vmatprep.mubr.bf16.mxu0 0
      %4372 = vmatmul.mubr.bf16.gmra.mrb[0].mxu0 %v4244
      %v4373 = vpop.f32.mrb[0].mxu0
      %v4374 = vadd.f32 0.0, %v4373
      %v4375 = vpop.f32.mrb[0].mxu0
      %v4376 = vpop.f32.mrb[0].mxu0
      %v4377 = vadd.f32 0.0, %v4376
      %v4378 = vpop.f32.mrb[0].mxu0
      %4379 = vmatprep.mubr.bf16.mxu0 0
      %4380 = vmatmul.mubr.bf16.gmra.mrb[0].mxu0 %v4247
      %v4381 = vpop.f32.mrb[0].mxu0
      %v4382 = vadd.f32 0.0, %v4381
      %v4383 = vpop.f32.mrb[0].mxu0
      %v4384 = vpop.f32.mrb[0].mxu0
      %v4385 = vadd.f32 0.0, %v4384
      %v4386 = vpop.f32.mrb[0].mxu0
      %4387 = vmatprep.mubr.bf16.mxu0 0
      %4388 = vmatmul.mubr.bf16.gmra.mrb[0].mxu0 %v4250
      %v4389 = vpop.f32.mrb[0].mxu0
      %v4390 = vadd.f32 0.0, %v4389
      %v4391 = vpop.f32.mrb[0].mxu0
      %v4392 = vpop.f32.mrb[0].mxu0
      %v4393 = vadd.f32 0.0, %v4392
      %v4394 = vpop.f32.mrb[0].mxu0
      %4395 = vmatprep.mubr.bf16.mxu0 0
      %4396 = vmatmul.mubr.bf16.gmra.mrb[0].mxu0 %v4253
      %v4397 = vpop.f32.mrb[0].mxu0
      %v4398 = vadd.f32 0.0, %v4397
      %v4399 = vpop.f32.mrb[0].mxu0
      %v4400 = vpop.f32.mrb[0].mxu0
      %v4401 = vadd.f32 0.0, %v4400
      %v4402 = vpop.f32.mrb[0].mxu0
      %4403 = vmatprep.mubr.bf16.mxu0 0
      %4404 = vmatmul.mubr.bf16.gmra.mrb[0].mxu0 %v4256
      %v4405 = vpop.f32.mrb[0].mxu0
      %v4406 = vadd.f32 0.0, %v4405
      %v4407 = vpop.f32.mrb[0].mxu0
      %v4408 = vpop.f32.mrb[0].mxu0
      %v4409 = vadd.f32 0.0, %v4408
      %v4410 = vpop.f32.mrb[0].mxu0
      %4411 = vmatprep.mubr.bf16.mxu0 0
      %4412 = vmatmul.mubr.bf16.gmra.mrb[0].mxu0 %v4259
      %v4413 = vpop.f32.mrb[0].mxu0
      %v4414 = vadd.f32 0.0, %v4413
      %v4415 = vpop.f32.mrb[0].mxu0
      %v4416 = vpop.f32.mrb[0].mxu0
      %v4417 = vadd.f32 0.0, %v4416
      %v4418 = vpop.f32.mrb[0].mxu0
      %4419 = vmatprep.mubr.bf16.mxu0 0
      %4420 = vmatmul.mubr.bf16.gmra.mrb[0].mxu0 %v4262
      %v4421 = vpop.f32.mrb[0].mxu0
      %v4422 = vadd.f32 0.0, %v4421
      %v4423 = vpop.f32.mrb[0].mxu0
      %v4424 = vpop.f32.mrb[0].mxu0
      %v4425 = vadd.f32 0.0, %v4424
      %v4426 = vpop.f32.mrb[0].mxu0
      %4427 = vdwg.mxu0
      %v4428 = vadd.f32 %v3683, %v4302
      %v4429 = vadd.f32 %v3684, %v4305
      %v4430 = vadd.f32 %v3685, %v4310
      %v4431 = vadd.f32 %v3686, %v4313
      %v4432 = vadd.f32 %v3687, %v4318
      %v4433 = vadd.f32 %v3688, %v4321
      %v4434 = vadd.f32 %v3689, %v4326
      %v4435 = vadd.f32 %v3690, %v4329
      %v4436 = vadd.f32 %v3691, %v4334
      %v4437 = vadd.f32 %v3692, %v4337
      %v4438 = vadd.f32 %v3693, %v4342
      %v4439 = vadd.f32 %v3694, %v4345
      %v4440 = vadd.f32 %v3695, %v4350
      %v4441 = vadd.f32 %v3696, %v4353
      %v4442 = vadd.f32 %v3697, %v4358
      %v4443 = vadd.f32 %v3698, %v4361
      %v4444 = vadd.f32 %v3699, %v4366
      %v4445 = vadd.f32 %v3700, %v4369
      %v4446 = vadd.f32 %v3701, %v4374
      %v4447 = vadd.f32 %v3702, %v4377
      %v4448 = vadd.f32 %v3703, %v4382
      %v4449 = vadd.f32 %v3704, %v4385
      %v4450 = vadd.f32 %v3705, %v4390
      %v4451 = vadd.f32 %v3706, %v4393
      %v4452 = vadd.f32 %v3707, %v4398
      %v4453 = vadd.f32 %v3708, %v4401
      %v4454 = vadd.f32 %v3709, %v4406
      %v4455 = vadd.f32 %v3710, %v4409
      %v4456 = vadd.f32 %v3711, %v4414
      %v4457 = vadd.f32 %v3712, %v4417
      %v4458 = vadd.f32 %v3713, %v4422
      %v4459 = vadd.f32 %v3714, %v4425
      %v4460 = vld [vmem:[%s3337] sm:$0xe]
      %v4461 = vld [vmem:[%s3337 + $0xc] sm:$0xe]
      %v4462 = vld [vmem:[%s3337 + $0x18] sm:$0xe]
      %v4463 = vld [vmem:[%s3337 + $0x24] sm:$0xe]
      %v4464 = vld [vmem:[%s3337 + $0x30] sm:$0xe]
      %v4465 = vld [vmem:[%s3337 + $0x3c] sm:$0xe]
      %v4466 = vld [vmem:[%s3337 + $0x48] sm:$0xe]
      %v4467 = vld [vmem:[%s3337 + $0x54] sm:$0xe]
      %v4468 = vld [vmem:[%s3337 + $0x60] sm:$0xe]
      %v4469 = vld [vmem:[%s3337 + $0x6c] sm:$0xe]
      %v4470 = vld [vmem:[%s3337 + $0x78] sm:$0xe]
      %v4471 = vld [vmem:[%s3337 + $0x84] sm:$0xe]
      %v4472 = vld [vmem:[%s3337 + $0x90] sm:$0xe]
      %v4473 = vld [vmem:[%s3337 + $0x9c] sm:$0xe]
      %v4474 = vld [vmem:[%s3337 + $0xa8] sm:$0xe]
      %v4475 = vld [vmem:[%s3337 + $0xb4] sm:$0xe]
      %v4524 = vrot.slane %v4460, 5
      %v4525 = vrot.slane %v4524, 4
      %v4526 = vrot.slane %v3716, 5
      %v4527 = vsel %vm1299, %v4525, %v4526
      %v4528 = vrot.slane %v4526, 4
      %v4529 = vrot.slane %v3717, 5
      %v4530 = vsel %vm1299, %v4528, %v4529
      %v4531 = vrot.slane %v4461, 5
      %v4532 = vrot.slane %v4531, 4
      %v4533 = vrot.slane %v3719, 5
      %v4534 = vsel %vm1299, %v4532, %v4533
      %v4535 = vrot.slane %v4533, 4
      %v4536 = vrot.slane %v3720, 5
      %v4537 = vsel %vm1299, %v4535, %v4536
      %v4538 = vrot.slane %v4462, 5
      %v4539 = vrot.slane %v4538, 4
      %v4540 = vrot.slane %v3722, 5
      %v4541 = vsel %vm1299, %v4539, %v4540
      %v4542 = vrot.slane %v4540, 4
      %v4543 = vrot.slane %v3723, 5
      %v4544 = vsel %vm1299, %v4542, %v4543
      %v4545 = vrot.slane %v4463, 5
      %v4546 = vrot.slane %v4545, 4
      %v4547 = vrot.slane %v3725, 5
      %v4548 = vsel %vm1299, %v4546, %v4547
      %v4549 = vrot.slane %v4547, 4
      %v4550 = vrot.slane %v3726, 5
      %v4551 = vsel %vm1299, %v4549, %v4550
      %v4552 = vrot.slane %v4464, 5
      %v4553 = vrot.slane %v4552, 4
      %v4554 = vrot.slane %v3728, 5
      %v4555 = vsel %vm1299, %v4553, %v4554
      %v4556 = vrot.slane %v4554, 4
      %v4557 = vrot.slane %v3729, 5
      %v4558 = vsel %vm1299, %v4556, %v4557
      %v4559 = vrot.slane %v4465, 5
      %v4560 = vrot.slane %v4559, 4
      %v4561 = vrot.slane %v3731, 5
      %v4562 = vsel %vm1299, %v4560, %v4561
      %v4563 = vrot.slane %v4561, 4
      %v4564 = vrot.slane %v3732, 5
      %v4565 = vsel %vm1299, %v4563, %v4564
      %v4566 = vrot.slane %v4466, 5
      %v4567 = vrot.slane %v4566, 4
      %v4568 = vrot.slane %v3734, 5
      %v4569 = vsel %vm1299, %v4567, %v4568
      %v4570 = vrot.slane %v4568, 4
      %v4571 = vrot.slane %v3735, 5
      %v4572 = vsel %vm1299, %v4570, %v4571
      %v4573 = vrot.slane %v4467, 5
      %v4574 = vrot.slane %v4573, 4
      %v4575 = vrot.slane %v3737, 5
      %v4576 = vsel %vm1299, %v4574, %v4575
      %v4577 = vrot.slane %v4575, 4
      %v4578 = vrot.slane %v3738, 5
      %v4579 = vsel %vm1299, %v4577, %v4578
      %v4580 = vrot.slane %v4468, 5
      %v4581 = vrot.slane %v4580, 4
      %v4582 = vrot.slane %v3740, 5
      %v4583 = vsel %vm1299, %v4581, %v4582
      %v4584 = vrot.slane %v4582, 4
      %v4585 = vrot.slane %v3741, 5
      %v4586 = vsel %vm1299, %v4584, %v4585
      %v4587 = vrot.slane %v4469, 5
      %v4588 = vrot.slane %v4587, 4
      %v4589 = vrot.slane %v3743, 5
      %v4590 = vsel %vm1299, %v4588, %v4589
      %v4591 = vrot.slane %v4589, 4
      %v4592 = vrot.slane %v3744, 5
      %v4593 = vsel %vm1299, %v4591, %v4592
      %v4594 = vrot.slane %v4470, 5
      %v4595 = vrot.slane %v4594, 4
      %v4596 = vrot.slane %v3746, 5
      %v4597 = vsel %vm1299, %v4595, %v4596
      %v4598 = vrot.slane %v4596, 4
      %v4599 = vrot.slane %v3747, 5
      %v4600 = vsel %vm1299, %v4598, %v4599
      %v4601 = vrot.slane %v4471, 5
      %v4602 = vrot.slane %v4601, 4
      %v4603 = vrot.slane %v3749, 5
      %v4604 = vsel %vm1299, %v4602, %v4603
      %v4605 = vrot.slane %v4603, 4
      %v4606 = vrot.slane %v3750, 5
      %v4607 = vsel %vm1299, %v4605, %v4606
      %v4608 = vrot.slane %v4472, 5
      %v4609 = vrot.slane %v4608, 4
      %v4610 = vrot.slane %v3752, 5
      %v4611 = vsel %vm1299, %v4609, %v4610
      %v4612 = vrot.slane %v4610, 4
      %v4613 = vrot.slane %v3753, 5
      %v4614 = vsel %vm1299, %v4612, %v4613
      %v4615 = vrot.slane %v4473, 5
      %v4616 = vrot.slane %v4615, 4
      %v4617 = vrot.slane %v3755, 5
      %v4618 = vsel %vm1299, %v4616, %v4617
      %v4619 = vrot.slane %v4617, 4
      %v4620 = vrot.slane %v3756, 5
      %v4621 = vsel %vm1299, %v4619, %v4620
      %v4622 = vrot.slane %v4474, 5
      %v4623 = vrot.slane %v4622, 4
      %v4624 = vrot.slane %v3758, 5
      %v4625 = vsel %vm1299, %v4623, %v4624
      %v4626 = vrot.slane %v4624, 4
      %v4627 = vrot.slane %v3759, 5
      %v4628 = vsel %vm1299, %v4626, %v4627
      %v4629 = vrot.slane %v4475, 5
      %v4630 = vrot.slane %v4629, 4
      %v4631 = vrot.slane %v3761, 5
      %v4632 = vsel %vm1299, %v4630, %v4631
      %v4633 = vrot.slane %v4631, 4
      %v4634 = vrot.slane %v3762, 5
      %v4635 = vsel %vm1299, %v4633, %v4634
      %s4636 = scalar_lea.vmem %s1, 160
      %v4637 = vld [vmem:[%s4636] sm:$0xf]
      %v4638 = vld [vmem:[%s4636 + $0x4] sm:$0xf]
      %v4639 = vld [vmem:[%s4636 + $0x8] sm:$0xf]
      %v4640 = vld [vmem:[%s4636 + $0xc] sm:$0xf]
      %v4641 = vld [vmem:[%s4636 + $0x10] sm:$0x3]
      %v4642 = vunpack.c.l.b16 %v4527
      %v4643 = vunpack.c.l.b16 %v4530
      %v4644 = vunpack.c.l.b16 %v4534
      %v4645 = vunpack.c.l.b16 %v4537
      %v4646 = vunpack.c.l.b16 %v4541
      %v4647 = vunpack.c.l.b16 %v4544
      %v4648 = vunpack.c.l.b16 %v4548
      %v4649 = vunpack.c.l.b16 %v4551
      %v4650 = vunpack.c.l.b16 %v4555
      %v4651 = vunpack.c.l.b16 %v4558
      %v4652 = vunpack.c.l.b16 %v4562
      %v4653 = vunpack.c.l.b16 %v4565
      %v4654 = vunpack.c.l.b16 %v4569
      %v4655 = vunpack.c.l.b16 %v4572
      %v4656 = vunpack.c.l.b16 %v4576
      %v4657 = vunpack.c.l.b16 %v4579
      %v4658 = vunpack.c.l.b16 %v4583
      %v4659 = vunpack.c.l.b16 %v4586
      %v4660 = vunpack.c.l.b16 %v4590
      %v4661 = vunpack.c.l.b16 %v4593
      %v4662 = vunpack.c.l.b16 %v4597
      %v4663 = vunpack.c.l.b16 %v4600
      %v4664 = vunpack.c.l.b16 %v4604
      %v4665 = vunpack.c.l.b16 %v4607
      %v4666 = vunpack.c.l.b16 %v4611
      %v4667 = vunpack.c.l.b16 %v4614
      %v4668 = vunpack.c.l.b16 %v4618
      %v4669 = vunpack.c.l.b16 %v4621
      %v4670 = vunpack.c.l.b16 %v4625
      %v4671 = vunpack.c.l.b16 %v4628
      %v4672 = vunpack.c.l.b16 %v4632
      %v4673 = vunpack.c.l.b16 %v4635
      %v4674 = vpack.c.b16 %v4643, %v4642
      %v4675 = vpack.c.b16 %v4645, %v4644
      %v4676 = vpack.c.b16 %v4647, %v4646
      %v4677 = vpack.c.b16 %v4649, %v4648
      %v4678 = vpack.c.b16 %v4651, %v4650
      %v4679 = vpack.c.b16 %v4653, %v4652
      %v4680 = vpack.c.b16 %v4655, %v4654
      %v4681 = vpack.c.b16 %v4657, %v4656
      %v4682 = vpack.c.b16 %v4659, %v4658
      %v4683 = vpack.c.b16 %v4661, %v4660
      %v4684 = vpack.c.b16 %v4663, %v4662
      %v4685 = vpack.c.b16 %v4665, %v4664
      %v4686 = vpack.c.b16 %v4667, %v4666
      %v4687 = vpack.c.b16 %v4669, %v4668
      %v4688 = vpack.c.b16 %v4671, %v4670
      %v4689 = vpack.c.b16 %v4673, %v4672
      %v4695 = vunpack.c.l.b16 %v4637
      %v4696 = vunpack.c.l.b16 %v4638
      %v4697 = vunpack.c.l.b16 %v4639
      %v4698 = vunpack.c.l.b16 %v4640
      %v4699 = vunpack.c.l.b16 %v4641
      %v4700 = vpack.c.b16 %v4696, %v4695
      %v4701 = vpack.c.b16 %v4698, %v4697
      %v4702 = vpack.c.b16 %v4699, %v4699
      %v4706 = vsel %vm728, %v4674, 0
      %v4709 = vsel %vm728, %v4675, 0
      %v4712 = vsel %vm728, %v4676, 0
      %v4715 = vsel %vm728, %v4677, 0
      %v4718 = vsel %vm728, %v4678, 0
      %v4721 = vsel %vm728, %v4679, 0
      %v4724 = vsel %vm728, %v4680, 0
      %v4727 = vsel %vm728, %v4681, 0
      %v4730 = vsel %vm728, %v4682, 0
      %v4733 = vsel %vm728, %v4683, 0
      %v4736 = vsel %vm728, %v4684, 0
      %v4739 = vsel %vm728, %v4685, 0
      %v4742 = vsel %vm728, %v4686, 0
      %v4745 = vsel %vm728, %v4687, 0
      %v4748 = vsel %vm728, %v4688, 0
      %v4751 = vsel %vm728, %v4689, 0
      %v4754 = vsel %vm777, %v4702, 0
      %4756 = vmatprep.subr.bf16.mxu0 0
      %4757 = vmatpush1.bf16.msra.mxu0 %v4700
      %4758 = vmatprep.subr.bf16.mxu0 0
      %4759 = vmatpush1.bf16.msra.mxu0 %v4701
      %4760 = vmatprep.subr.bf16.mxu0 0
      %4761 = vmatpush1.bf16.msra.mxu0 %v4754
      %4762 = vmatprep.subr.bf16.mxu0 0
      %4763 = vmatpush1.bf16.msra.mxu0 0
      %4764 = vmatprep.subr.bf16.mxu0 0
      %4765 = vmatpush1.bf16.msra.mxu0 0
      %4766 = vmatprep.subr.bf16.mxu0 0
      %4767 = vmatpush1.bf16.msra.mxu0 0
      %4768 = vmatprep.subr.bf16.mxu0 0
      %4769 = vmatpush1.bf16.msra.mxu0 0
      %4770 = vmatprep.subr.bf16.mxu0 0
      %4771 = vmatpush1.bf16.msra.mxu0 0
      %4772 = vmatprep.subr.bf16.mxu0 0
      %4773 = vmatpush1.bf16.msra.mxu0 0
      %4774 = vmatprep.subr.bf16.mxu0 0
      %4775 = vmatpush1.bf16.msra.mxu0 0
      %4776 = vmatprep.subr.bf16.mxu0 0
      %4777 = vmatpush1.bf16.msra.mxu0 0
      %4778 = vmatprep.subr.bf16.mxu0 0
      %4779 = vmatpush1.bf16.msra.mxu0 0
      %4780 = vmatprep.subr.bf16.mxu0 0
      %4781 = vmatpush1.bf16.msra.mxu0 0
      %4782 = vmatprep.subr.bf16.mxu0 0
      %4783 = vmatpush1.bf16.msra.mxu0 0
      %4784 = vmatprep.subr.bf16.mxu0 0
      %4785 = vmatpush1.bf16.msra.mxu0 0
      %4786 = vmatprep.subr.bf16.mxu0 0
      %4787 = vmatpush1.bf16.msra.mxu0 0
      %4788 = vmatprep.mubr.bf16.mxu0 0
      %4789 = vmatmul.mubr.bf16.gmra.mrb[0].mxu0 %v4706
      %v4790 = vpop.f32.mrb[0].mxu0
      %v4791 = vadd.f32 0.0, %v4790
      %v4792 = vpop.f32.mrb[0].mxu0
      %v4793 = vpop.f32.mrb[0].mxu0
      %v4794 = vadd.f32 0.0, %v4793
      %v4795 = vpop.f32.mrb[0].mxu0
      %4796 = vmatprep.mubr.bf16.mxu0 0
      %4797 = vmatmul.mubr.bf16.gmra.mrb[0].mxu0 %v4709
      %v4798 = vpop.f32.mrb[0].mxu0
      %v4799 = vadd.f32 0.0, %v4798
      %v4800 = vpop.f32.mrb[0].mxu0
      %v4801 = vpop.f32.mrb[0].mxu0
      %v4802 = vadd.f32 0.0, %v4801
      %v4803 = vpop.f32.mrb[0].mxu0
      %4804 = vmatprep.mubr.bf16.mxu0 0
      %4805 = vmatmul.mubr.bf16.gmra.mrb[0].mxu0 %v4712
      %v4806 = vpop.f32.mrb[0].mxu0
      %v4807 = vadd.f32 0.0, %v4806
      %v4808 = vpop.f32.mrb[0].mxu0
      %v4809 = vpop.f32.mrb[0].mxu0
      %v4810 = vadd.f32 0.0, %v4809
      %v4811 = vpop.f32.mrb[0].mxu0
      %4812 = vmatprep.mubr.bf16.mxu0 0
      %4813 = vmatmul.mubr.bf16.gmra.mrb[0].mxu0 %v4715
      %v4814 = vpop.f32.mrb[0].mxu0
      %v4815 = vadd.f32 0.0, %v4814
      %v4816 = vpop.f32.mrb[0].mxu0
      %v4817 = vpop.f32.mrb[0].mxu0
      %v4818 = vadd.f32 0.0, %v4817
      %v4819 = vpop.f32.mrb[0].mxu0
      %4820 = vmatprep.mubr.bf16.mxu0 0
      %4821 = vmatmul.mubr.bf16.gmra.mrb[0].mxu0 %v4718
      %v4822 = vpop.f32.mrb[0].mxu0
      %v4823 = vadd.f32 0.0, %v4822
      %v4824 = vpop.f32.mrb[0].mxu0
      %v4825 = vpop.f32.mrb[0].mxu0
      %v4826 = vadd.f32 0.0, %v4825
      %v4827 = vpop.f32.mrb[0].mxu0
      %4828 = vmatprep.mubr.bf16.mxu0 0
      %4829 = vmatmul.mubr.bf16.gmra.mrb[0].mxu0 %v4721
      %v4830 = vpop.f32.mrb[0].mxu0
      %v4831 = vadd.f32 0.0, %v4830
      %v4832 = vpop.f32.mrb[0].mxu0
      %v4833 = vpop.f32.mrb[0].mxu0
      %v4834 = vadd.f32 0.0, %v4833
      %v4835 = vpop.f32.mrb[0].mxu0
      %4836 = vmatprep.mubr.bf16.mxu0 0
      %4837 = vmatmul.mubr.bf16.gmra.mrb[0].mxu0 %v4724
      %v4838 = vpop.f32.mrb[0].mxu0
      %v4839 = vadd.f32 0.0, %v4838
      %v4840 = vpop.f32.mrb[0].mxu0
      %v4841 = vpop.f32.mrb[0].mxu0
      %v4842 = vadd.f32 0.0, %v4841
      %v4843 = vpop.f32.mrb[0].mxu0
      %4844 = vmatprep.mubr.bf16.mxu0 0
      %4845 = vmatmul.mubr.bf16.gmra.mrb[0].mxu0 %v4727
      %v4846 = vpop.f32.mrb[0].mxu0
      %v4847 = vadd.f32 0.0, %v4846
      %v4848 = vpop.f32.mrb[0].mxu0
      %v4849 = vpop.f32.mrb[0].mxu0
      %v4850 = vadd.f32 0.0, %v4849
      %v4851 = vpop.f32.mrb[0].mxu0
      %4852 = vmatprep.mubr.bf16.mxu0 0
      %4853 = vmatmul.mubr.bf16.gmra.mrb[0].mxu0 %v4730
      %v4854 = vpop.f32.mrb[0].mxu0
      %v4855 = vadd.f32 0.0, %v4854
      %v4856 = vpop.f32.mrb[0].mxu0
      %v4857 = vpop.f32.mrb[0].mxu0
      %v4858 = vadd.f32 0.0, %v4857
      %v4859 = vpop.f32.mrb[0].mxu0
      %4860 = vmatprep.mubr.bf16.mxu0 0
      %4861 = vmatmul.mubr.bf16.gmra.mrb[0].mxu0 %v4733
      %v4862 = vpop.f32.mrb[0].mxu0
      %v4863 = vadd.f32 0.0, %v4862
      %v4864 = vpop.f32.mrb[0].mxu0
      %v4865 = vpop.f32.mrb[0].mxu0
      %v4866 = vadd.f32 0.0, %v4865
      %v4867 = vpop.f32.mrb[0].mxu0
      %4868 = vmatprep.mubr.bf16.mxu0 0
      %4869 = vmatmul.mubr.bf16.gmra.mrb[0].mxu0 %v4736
      %v4870 = vpop.f32.mrb[0].mxu0
      %v4871 = vadd.f32 0.0, %v4870
      %v4872 = vpop.f32.mrb[0].mxu0
      %v4873 = vpop.f32.mrb[0].mxu0
      %v4874 = vadd.f32 0.0, %v4873
      %v4875 = vpop.f32.mrb[0].mxu0
      %4876 = vmatprep.mubr.bf16.mxu0 0
      %4877 = vmatmul.mubr.bf16.gmra.mrb[0].mxu0 %v4739
      %v4878 = vpop.f32.mrb[0].mxu0
      %v4879 = vadd.f32 0.0, %v4878
      %v4880 = vpop.f32.mrb[0].mxu0
      %v4881 = vpop.f32.mrb[0].mxu0
      %v4882 = vadd.f32 0.0, %v4881
      %v4883 = vpop.f32.mrb[0].mxu0
      %4884 = vmatprep.mubr.bf16.mxu0 0
      %4885 = vmatmul.mubr.bf16.gmra.mrb[0].mxu0 %v4742
      %v4886 = vpop.f32.mrb[0].mxu0
      %v4887 = vadd.f32 0.0, %v4886
      %v4888 = vpop.f32.mrb[0].mxu0
      %v4889 = vpop.f32.mrb[0].mxu0
      %v4890 = vadd.f32 0.0, %v4889
      %v4891 = vpop.f32.mrb[0].mxu0
      %4892 = vmatprep.mubr.bf16.mxu0 0
      %4893 = vmatmul.mubr.bf16.gmra.mrb[0].mxu0 %v4745
      %v4894 = vpop.f32.mrb[0].mxu0
      %v4895 = vadd.f32 0.0, %v4894
      %v4896 = vpop.f32.mrb[0].mxu0
      %v4897 = vpop.f32.mrb[0].mxu0
      %v4898 = vadd.f32 0.0, %v4897
      %v4899 = vpop.f32.mrb[0].mxu0
      %4900 = vmatprep.mubr.bf16.mxu0 0
      %4901 = vmatmul.mubr.bf16.gmra.mrb[0].mxu0 %v4748
      %v4902 = vpop.f32.mrb[0].mxu0
      %v4903 = vadd.f32 0.0, %v4902
      %v4904 = vpop.f32.mrb[0].mxu0
      %v4905 = vpop.f32.mrb[0].mxu0
      %v4906 = vadd.f32 0.0, %v4905
      %v4907 = vpop.f32.mrb[0].mxu0
      %4908 = vmatprep.mubr.bf16.mxu0 0
      %4909 = vmatmul.mubr.bf16.gmra.mrb[0].mxu0 %v4751
      %v4910 = vpop.f32.mrb[0].mxu0
      %v4911 = vadd.f32 0.0, %v4910
      %v4912 = vpop.f32.mrb[0].mxu0
      %v4913 = vpop.f32.mrb[0].mxu0
      %v4914 = vadd.f32 0.0, %v4913
      %v4915 = vpop.f32.mrb[0].mxu0
      %4916 = vdwg.mxu0
      %v4917 = vadd.f32 %v4428, %v4791
      %v4918 = vadd.f32 %v4429, %v4794
      %v4919 = vadd.f32 %v4430, %v4799
      %v4920 = vadd.f32 %v4431, %v4802
      %v4921 = vadd.f32 %v4432, %v4807
      %v4922 = vadd.f32 %v4433, %v4810
      %v4923 = vadd.f32 %v4434, %v4815
      %v4924 = vadd.f32 %v4435, %v4818
      %v4925 = vadd.f32 %v4436, %v4823
      %v4926 = vadd.f32 %v4437, %v4826
      %v4927 = vadd.f32 %v4438, %v4831
      %v4928 = vadd.f32 %v4439, %v4834
      %v4929 = vadd.f32 %v4440, %v4839
      %v4930 = vadd.f32 %v4441, %v4842
      %v4931 = vadd.f32 %v4442, %v4847
      %v4932 = vadd.f32 %v4443, %v4850
      %v4933 = vadd.f32 %v4444, %v4855
      %v4934 = vadd.f32 %v4445, %v4858
      %v4935 = vadd.f32 %v4446, %v4863
      %v4936 = vadd.f32 %v4447, %v4866
      %v4937 = vadd.f32 %v4448, %v4871
      %v4938 = vadd.f32 %v4449, %v4874
      %v4939 = vadd.f32 %v4450, %v4879
      %v4940 = vadd.f32 %v4451, %v4882
      %v4941 = vadd.f32 %v4452, %v4887
      %v4942 = vadd.f32 %v4453, %v4890
      %v4943 = vadd.f32 %v4454, %v4895
      %v4944 = vadd.f32 %v4455, %v4898
      %v4945 = vadd.f32 %v4456, %v4903
      %v4946 = vadd.f32 %v4457, %v4906
      %v4947 = vadd.f32 %v4458, %v4911
      %v4948 = vadd.f32 %v4459, %v4914
      %v4949 = vld [vmem:[%s2] sm:$0x1]
      %v4951 = vlaneseq
      %v4952 = vshrl.u32 %v4951, 7
      %v4953 = vsub.s32 0, %v4952
      %v4954 = vrot.slane %v4949, %v4953
      %v4956 = vadd.f32 %v4917, %v4954
      %v4957 = vadd.f32 %v4918, %v4954
      %v4958 = vadd.f32 %v4919, %v4954
      %v4959 = vadd.f32 %v4920, %v4954
      %v4960 = vadd.f32 %v4921, %v4954
      %v4961 = vadd.f32 %v4922, %v4954
      %v4962 = vadd.f32 %v4923, %v4954
      %v4963 = vadd.f32 %v4924, %v4954
      %v4964 = vadd.f32 %v4925, %v4954
      %v4965 = vadd.f32 %v4926, %v4954
      %v4966 = vadd.f32 %v4927, %v4954
      %v4967 = vadd.f32 %v4928, %v4954
      %v4968 = vadd.f32 %v4929, %v4954
      %v4969 = vadd.f32 %v4930, %v4954
      %v4970 = vadd.f32 %v4931, %v4954
      %v4971 = vadd.f32 %v4932, %v4954
      %v4972 = vadd.f32 %v4933, %v4954
      %v4973 = vadd.f32 %v4934, %v4954
      %v4974 = vadd.f32 %v4935, %v4954
      %v4975 = vadd.f32 %v4936, %v4954
      %v4976 = vadd.f32 %v4937, %v4954
      %v4977 = vadd.f32 %v4938, %v4954
      %v4978 = vadd.f32 %v4939, %v4954
      %v4979 = vadd.f32 %v4940, %v4954
      %v4980 = vadd.f32 %v4941, %v4954
      %v4981 = vadd.f32 %v4942, %v4954
      %v4982 = vadd.f32 %v4943, %v4954
      %v4983 = vadd.f32 %v4944, %v4954
      %v4984 = vadd.f32 %v4945, %v4954
      %v4985 = vadd.f32 %v4946, %v4954
      %v4986 = vadd.f32 %v4947, %v4954
      %v4987 = vadd.f32 %v4948, %v4954
      %v4988 = vtanh.pop %v4956
      %v4989 = vtanh.pop %v4957
      %v4990 = vtanh.pop %v4958
      %v4991 = vtanh.pop %v4959
      %v4992 = vtanh.pop %v4960
      %v4993 = vtanh.pop %v4961
      %v4994 = vtanh.pop %v4962
      %v4995 = vtanh.pop %v4963
      %v4996 = vtanh.pop %v4964
      %v4997 = vtanh.pop %v4965
      %v4998 = vtanh.pop %v4966
      %v4999 = vtanh.pop %v4967
      %v5000 = vtanh.pop %v4968
      %v5001 = vtanh.pop %v4969
      %v5002 = vtanh.pop %v4970
      %v5003 = vtanh.pop %v4971
      %v5004 = vtanh.pop %v4972
      %v5005 = vtanh.pop %v4973
      %v5006 = vtanh.pop %v4974
      %v5007 = vtanh.pop %v4975
      %v5008 = vtanh.pop %v4976
      %v5009 = vtanh.pop %v4977
      %v5010 = vtanh.pop %v4978
      %v5011 = vtanh.pop %v4979
      %v5012 = vtanh.pop %v4980
      %v5013 = vtanh.pop %v4981
      %v5014 = vtanh.pop %v4982
      %v5015 = vtanh.pop %v4983
      %v5016 = vtanh.pop %v4984
      %v5017 = vtanh.pop %v4985
      %v5018 = vtanh.pop %v4986
      %v5019 = vtanh.pop %v4987
      %v5020 = vxor.u32 %v4956, 2147483648
      %v5021 = vxor.u32 %v4957, 2147483648
      %v5022 = vxor.u32 %v4958, 2147483648
      %v5023 = vxor.u32 %v4959, 2147483648
      %v5024 = vxor.u32 %v4960, 2147483648
      %v5025 = vxor.u32 %v4961, 2147483648
      %v5026 = vxor.u32 %v4962, 2147483648
      %v5027 = vxor.u32 %v4963, 2147483648
      %v5028 = vxor.u32 %v4964, 2147483648
      %v5029 = vxor.u32 %v4965, 2147483648
      %v5030 = vxor.u32 %v4966, 2147483648
      %v5031 = vxor.u32 %v4967, 2147483648
      %v5032 = vxor.u32 %v4968, 2147483648
      %v5033 = vxor.u32 %v4969, 2147483648
      %v5034 = vxor.u32 %v4970, 2147483648
      %v5035 = vxor.u32 %v4971, 2147483648
      %v5036 = vxor.u32 %v4972, 2147483648
      %v5037 = vxor.u32 %v4973, 2147483648
      %v5038 = vxor.u32 %v4974, 2147483648
      %v5039 = vxor.u32 %v4975, 2147483648
      %v5040 = vxor.u32 %v4976, 2147483648
      %v5041 = vxor.u32 %v4977, 2147483648
      %v5042 = vxor.u32 %v4978, 2147483648
      %v5043 = vxor.u32 %v4979, 2147483648
      %v5044 = vxor.u32 %v4980, 2147483648
      %v5045 = vxor.u32 %v4981, 2147483648
      %v5046 = vxor.u32 %v4982, 2147483648
      %v5047 = vxor.u32 %v4983, 2147483648
      %v5048 = vxor.u32 %v4984, 2147483648
      %v5049 = vxor.u32 %v4985, 2147483648
      %v5050 = vxor.u32 %v4986, 2147483648
      %v5051 = vxor.u32 %v4987, 2147483648
      %v5052 = vmul.f32 %v5020, 1.442695
      %v5053 = vpow.pop %v5052
      %v5054 = vmul.f32 %v5021, 1.442695
      %v5055 = vpow.pop %v5054
      %v5056 = vmul.f32 %v5022, 1.442695
      %v5057 = vpow.pop %v5056
      %v5058 = vmul.f32 %v5023, 1.442695
      %v5059 = vpow.pop %v5058
      %v5060 = vmul.f32 %v5024, 1.442695
      %v5061 = vpow.pop %v5060
      %v5062 = vmul.f32 %v5025, 1.442695
      %v5063 = vpow.pop %v5062
      %v5064 = vmul.f32 %v5026, 1.442695
      %v5065 = vpow.pop %v5064
      %v5066 = vmul.f32 %v5027, 1.442695
      %v5067 = vpow.pop %v5066
      %v5068 = vmul.f32 %v5028, 1.442695
      %v5069 = vpow.pop %v5068
      %v5070 = vmul.f32 %v5029, 1.442695
      %v5071 = vpow.pop %v5070
      %v5072 = vmul.f32 %v5030, 1.442695
      %v5073 = vpow.pop %v5072
      %v5074 = vmul.f32 %v5031, 1.442695
      %v5075 = vpow.pop %v5074
      %v5076 = vmul.f32 %v5032, 1.442695
      %v5077 = vpow.pop %v5076
      %v5078 = vmul.f32 %v5033, 1.442695
      %v5079 = vpow.pop %v5078
      %v5080 = vmul.f32 %v5034, 1.442695
      %v5081 = vpow.pop %v5080
      %v5082 = vmul.f32 %v5035, 1.442695
      %v5083 = vpow.pop %v5082
      %v5084 = vmul.f32 %v5036, 1.442695
      %v5085 = vpow.pop %v5084
      %v5086 = vmul.f32 %v5037, 1.442695
      %v5087 = vpow.pop %v5086
      %v5088 = vmul.f32 %v5038, 1.442695
      %v5089 = vpow.pop %v5088
      %v5090 = vmul.f32 %v5039, 1.442695
      %v5091 = vpow.pop %v5090
      %v5092 = vmul.f32 %v5040, 1.442695
      %v5093 = vpow.pop %v5092
      %v5094 = vmul.f32 %v5041, 1.442695
      %v5095 = vpow.pop %v5094
      %v5096 = vmul.f32 %v5042, 1.442695
      %v5097 = vpow.pop %v5096
      %v5098 = vmul.f32 %v5043, 1.442695
      %v5099 = vpow.pop %v5098
      %v5100 = vmul.f32 %v5044, 1.442695
      %v5101 = vpow.pop %v5100
      %v5102 = vmul.f32 %v5045, 1.442695
      %v5103 = vpow.pop %v5102
      %v5104 = vmul.f32 %v5046, 1.442695
      %v5105 = vpow.pop %v5104
      %v5106 = vmul.f32 %v5047, 1.442695
      %v5107 = vpow.pop %v5106
      %v5108 = vmul.f32 %v5048, 1.442695
      %v5109 = vpow.pop %v5108
      %v5110 = vmul.f32 %v5049, 1.442695
      %v5111 = vpow.pop %v5110
      %v5112 = vmul.f32 %v5050, 1.442695
      %v5113 = vpow.pop %v5112
      %v5114 = vmul.f32 %v5051, 1.442695
      %v5115 = vpow.pop %v5114
      %v5116 = vadd.f32 %v5053, 1.0
      %v5117 = vadd.f32 %v5055, 1.0
      %v5118 = vadd.f32 %v5057, 1.0
      %v5119 = vadd.f32 %v5059, 1.0
      %v5120 = vadd.f32 %v5061, 1.0
      %v5121 = vadd.f32 %v5063, 1.0
      %v5122 = vadd.f32 %v5065, 1.0
      %v5123 = vadd.f32 %v5067, 1.0
      %v5124 = vadd.f32 %v5069, 1.0
      %v5125 = vadd.f32 %v5071, 1.0
      %v5126 = vadd.f32 %v5073, 1.0
      %v5127 = vadd.f32 %v5075, 1.0
      %v5128 = vadd.f32 %v5077, 1.0
      %v5129 = vadd.f32 %v5079, 1.0
      %v5130 = vadd.f32 %v5081, 1.0
      %v5131 = vadd.f32 %v5083, 1.0
      %v5132 = vadd.f32 %v5085, 1.0
      %v5133 = vadd.f32 %v5087, 1.0
      %v5134 = vadd.f32 %v5089, 1.0
      %v5135 = vadd.f32 %v5091, 1.0
      %v5136 = vadd.f32 %v5093, 1.0
      %v5137 = vadd.f32 %v5095, 1.0
      %v5138 = vadd.f32 %v5097, 1.0
      %v5139 = vadd.f32 %v5099, 1.0
      %v5140 = vadd.f32 %v5101, 1.0
      %v5141 = vadd.f32 %v5103, 1.0
      %v5142 = vadd.f32 %v5105, 1.0
      %v5143 = vadd.f32 %v5107, 1.0
      %v5144 = vadd.f32 %v5109, 1.0
      %v5145 = vadd.f32 %v5111, 1.0
      %v5146 = vadd.f32 %v5113, 1.0
      %v5147 = vadd.f32 %v5115, 1.0
      %v5148 = vrcp.pop %v5116
      %v5149 = vmul.f32 1.0, %v5148
      %v5150 = vrcp.pop %v5117
      %v5151 = vmul.f32 1.0, %v5150
      %v5152 = vrcp.pop %v5118
      %v5153 = vmul.f32 1.0, %v5152
      %v5154 = vrcp.pop %v5119
      %v5155 = vmul.f32 1.0, %v5154
      %v5156 = vrcp.pop %v5120
      %v5157 = vmul.f32 1.0, %v5156
      %v5158 = vrcp.pop %v5121
      %v5159 = vmul.f32 1.0, %v5158
      %v5160 = vrcp.pop %v5122
      %v5161 = vmul.f32 1.0, %v5160
      %v5162 = vrcp.pop %v5123
      %v5163 = vmul.f32 1.0, %v5162
      %v5164 = vrcp.pop %v5124
      %v5165 = vmul.f32 1.0, %v5164
      %v5166 = vrcp.pop %v5125
      %v5167 = vmul.f32 1.0, %v5166
      %v5168 = vrcp.pop %v5126
      %v5169 = vmul.f32 1.0, %v5168
      %v5170 = vrcp.pop %v5127
      %v5171 = vmul.f32 1.0, %v5170
      %v5172 = vrcp.pop %v5128
      %v5173 = vmul.f32 1.0, %v5172
      %v5174 = vrcp.pop %v5129
      %v5175 = vmul.f32 1.0, %v5174
      %v5176 = vrcp.pop %v5130
      %v5177 = vmul.f32 1.0, %v5176
      %v5178 = vrcp.pop %v5131
      %v5179 = vmul.f32 1.0, %v5178
      %v5180 = vrcp.pop %v5132
      %v5181 = vmul.f32 1.0, %v5180
      %v5182 = vrcp.pop %v5133
      %v5183 = vmul.f32 1.0, %v5182
      %v5184 = vrcp.pop %v5134
      %v5185 = vmul.f32 1.0, %v5184
      %v5186 = vrcp.pop %v5135
      %v5187 = vmul.f32 1.0, %v5186
      %v5188 = vrcp.pop %v5136
      %v5189 = vmul.f32 1.0, %v5188
      %v5190 = vrcp.pop %v5137
      %v5191 = vmul.f32 1.0, %v5190
      %v5192 = vrcp.pop %v5138
      %v5193 = vmul.f32 1.0, %v5192
      %v5194 = vrcp.pop %v5139
      %v5195 = vmul.f32 1.0, %v5194
      %v5196 = vrcp.pop %v5140
      %v5197 = vmul.f32 1.0, %v5196
      %v5198 = vrcp.pop %v5141
      %v5199 = vmul.f32 1.0, %v5198
      %v5200 = vrcp.pop %v5142
      %v5201 = vmul.f32 1.0, %v5200
      %v5202 = vrcp.pop %v5143
      %v5203 = vmul.f32 1.0, %v5202
      %v5204 = vrcp.pop %v5144
      %v5205 = vmul.f32 1.0, %v5204
      %v5206 = vrcp.pop %v5145
      %v5207 = vmul.f32 1.0, %v5206
      %v5208 = vrcp.pop %v5146
      %v5209 = vmul.f32 1.0, %v5208
      %v5210 = vrcp.pop %v5147
      %v5211 = vmul.f32 1.0, %v5210
      %v5212 = vld [vmem:[%s212] sm:$0xff]
      %v5213 = vld [vmem:[%s212 + $0x8] sm:$0xff]
      %v5214 = vld [vmem:[%s212 + $0x10] sm:$0xff]
      %v5215 = vld [vmem:[%s212 + $0x18] sm:$0xff]
      %v5216 = vld [vmem:[%s212 + $0x20] sm:$0xff]
      %v5217 = vld [vmem:[%s212 + $0x28] sm:$0xff]
      %v5218 = vld [vmem:[%s212 + $0x30] sm:$0xff]
      %v5219 = vld [vmem:[%s212 + $0x38] sm:$0xff]
      %v5220 = vld [vmem:[%s212 + $0x40] sm:$0xff]
      %v5221 = vld [vmem:[%s212 + $0x48] sm:$0xff]
      %v5222 = vld [vmem:[%s212 + $0x50] sm:$0xff]
      %v5223 = vld [vmem:[%s212 + $0x58] sm:$0xff]
      %v5224 = vld [vmem:[%s212 + $0x60] sm:$0xff]
      %v5225 = vld [vmem:[%s212 + $0x68] sm:$0xff]
      %v5226 = vld [vmem:[%s212 + $0x70] sm:$0xff]
      %v5227 = vld [vmem:[%s212 + $0x78] sm:$0xff]
      %v5228 = vld [vmem:[%s212 + $0x80] sm:$0xff]
      %v5229 = vld [vmem:[%s212 + $0x88] sm:$0xff]
      %v5230 = vld [vmem:[%s212 + $0x90] sm:$0xff]
      %v5231 = vld [vmem:[%s212 + $0x98] sm:$0xff]
      %v5232 = vld [vmem:[%s212 + $0xa0] sm:$0xff]
      %v5233 = vld [vmem:[%s212 + $0xa8] sm:$0xff]
      %v5234 = vld [vmem:[%s212 + $0xb0] sm:$0xff]
      %v5235 = vld [vmem:[%s212 + $0xb8] sm:$0xff]
      %v5236 = vld [vmem:[%s212 + $0xc0] sm:$0xff]
      %v5237 = vld [vmem:[%s212 + $0xc8] sm:$0xff]
      %v5238 = vld [vmem:[%s212 + $0xd0] sm:$0xff]
      %v5239 = vld [vmem:[%s212 + $0xd8] sm:$0xff]
      %v5240 = vld [vmem:[%s212 + $0xe0] sm:$0xff]
      %v5241 = vld [vmem:[%s212 + $0xe8] sm:$0xff]
      %v5242 = vld [vmem:[%s212 + $0xf0] sm:$0xff]
      %v5243 = vld [vmem:[%s212 + $0xf8] sm:$0xff]
      %5276 = vrot.lane.b32.xlu0 %v5212, 64
      %v5277 = vpop.permute.xlu0 %5276
      %5278 = vrot.lane.b32.xlu0 %v5213, 64
      %v5279 = vpop.permute.xlu0 %5278
      %5280 = vrot.lane.b32.xlu0 %v5214, 64
      %v5281 = vpop.permute.xlu0 %5280
      %5282 = vrot.lane.b32.xlu0 %v5215, 64
      %v5283 = vpop.permute.xlu0 %5282
      %5284 = vrot.lane.b32.xlu0 %v5216, 64
      %v5285 = vpop.permute.xlu0 %5284
      %5286 = vrot.lane.b32.xlu0 %v5217, 64
      %v5287 = vpop.permute.xlu0 %5286
      %5288 = vrot.lane.b32.xlu0 %v5218, 64
      %v5289 = vpop.permute.xlu0 %5288
      %5290 = vrot.lane.b32.xlu0 %v5219, 64
      %v5291 = vpop.permute.xlu0 %5290
      %5292 = vrot.lane.b32.xlu0 %v5220, 64
      %v5293 = vpop.permute.xlu0 %5292
      %5294 = vrot.lane.b32.xlu0 %v5221, 64
      %v5295 = vpop.permute.xlu0 %5294
      %5296 = vrot.lane.b32.xlu0 %v5222, 64
      %v5297 = vpop.permute.xlu0 %5296
      %5298 = vrot.lane.b32.xlu0 %v5223, 64
      %v5299 = vpop.permute.xlu0 %5298
      %5300 = vrot.lane.b32.xlu0 %v5224, 64
      %v5301 = vpop.permute.xlu0 %5300
      %5302 = vrot.lane.b32.xlu0 %v5225, 64
      %v5303 = vpop.permute.xlu0 %5302
      %5304 = vrot.lane.b32.xlu0 %v5226, 64
      %v5305 = vpop.permute.xlu0 %5304
      %5306 = vrot.lane.b32.xlu0 %v5227, 64
      %v5307 = vpop.permute.xlu0 %5306
      %5308 = vrot.lane.b32.xlu0 %v5228, 64
      %v5309 = vpop.permute.xlu0 %5308
      %5310 = vrot.lane.b32.xlu0 %v5229, 64
      %v5311 = vpop.permute.xlu0 %5310
      %5312 = vrot.lane.b32.xlu0 %v5230, 64
      %v5313 = vpop.permute.xlu0 %5312
      %5314 = vrot.lane.b32.xlu0 %v5231, 64
      %v5315 = vpop.permute.xlu0 %5314
      %5316 = vrot.lane.b32.xlu0 %v5232, 64
      %v5317 = vpop.permute.xlu0 %5316
      %5318 = vrot.lane.b32.xlu0 %v5233, 64
      %v5319 = vpop.permute.xlu0 %5318
      %5320 = vrot.lane.b32.xlu0 %v5234, 64
      %v5321 = vpop.permute.xlu0 %5320
      %5322 = vrot.lane.b32.xlu0 %v5235, 64
      %v5323 = vpop.permute.xlu0 %5322
      %5324 = vrot.lane.b32.xlu0 %v5236, 64
      %v5325 = vpop.permute.xlu0 %5324
      %5326 = vrot.lane.b32.xlu0 %v5237, 64
      %v5327 = vpop.permute.xlu0 %5326
      %5328 = vrot.lane.b32.xlu0 %v5238, 64
      %v5329 = vpop.permute.xlu0 %5328
      %5330 = vrot.lane.b32.xlu0 %v5239, 64
      %v5331 = vpop.permute.xlu0 %5330
      %5332 = vrot.lane.b32.xlu0 %v5240, 64
      %v5333 = vpop.permute.xlu0 %5332
      %5334 = vrot.lane.b32.xlu0 %v5241, 64
      %v5335 = vpop.permute.xlu0 %5334
      %5336 = vrot.lane.b32.xlu0 %v5242, 64
      %v5337 = vpop.permute.xlu0 %5336
      %5338 = vrot.lane.b32.xlu0 %v5243, 64
      %v5339 = vpop.permute.xlu0 %5338
      %v5372 = vmul.f32 %v5149, %v5277
      %v5373 = vmul.f32 %v5151, %v5279
      %v5374 = vmul.f32 %v5153, %v5281
      %v5375 = vmul.f32 %v5155, %v5283
      %v5376 = vmul.f32 %v5157, %v5285
      %v5377 = vmul.f32 %v5159, %v5287
      %v5378 = vmul.f32 %v5161, %v5289
      %v5379 = vmul.f32 %v5163, %v5291
      %v5380 = vmul.f32 %v5165, %v5293
      %v5381 = vmul.f32 %v5167, %v5295
      %v5382 = vmul.f32 %v5169, %v5297
      %v5383 = vmul.f32 %v5171, %v5299
      %v5384 = vmul.f32 %v5173, %v5301
      %v5385 = vmul.f32 %v5175, %v5303
      %v5386 = vmul.f32 %v5177, %v5305
      %v5387 = vmul.f32 %v5179, %v5307
      %v5388 = vmul.f32 %v5181, %v5309
      %v5389 = vmul.f32 %v5183, %v5311
      %v5390 = vmul.f32 %v5185, %v5313
      %v5391 = vmul.f32 %v5187, %v5315
      %v5392 = vmul.f32 %v5189, %v5317
      %v5393 = vmul.f32 %v5191, %v5319
      %v5394 = vmul.f32 %v5193, %v5321
      %v5395 = vmul.f32 %v5195, %v5323
      %v5396 = vmul.f32 %v5197, %v5325
      %v5397 = vmul.f32 %v5199, %v5327
      %v5398 = vmul.f32 %v5201, %v5329
      %v5399 = vmul.f32 %v5203, %v5331
      %v5400 = vmul.f32 %v5205, %v5333
      %v5401 = vmul.f32 %v5207, %v5335
      %v5402 = vmul.f32 %v5209, %v5337
      %v5403 = vmul.f32 %v5211, %v5339
      %5436 = vrot.lane.b32.xlu0 %v4988, 32
      %v5437 = vpop.permute.xlu0 %5436
      %5438 = vrot.lane.b32.xlu0 %v4989, 32
      %v5439 = vpop.permute.xlu0 %5438
      %5440 = vrot.lane.b32.xlu0 %v4990, 32
      %v5441 = vpop.permute.xlu0 %5440
      %5442 = vrot.lane.b32.xlu0 %v4991, 32
      %v5443 = vpop.permute.xlu0 %5442
      %5444 = vrot.lane.b32.xlu0 %v4992, 32
      %v5445 = vpop.permute.xlu0 %5444
      %5446 = vrot.lane.b32.xlu0 %v4993, 32
      %v5447 = vpop.permute.xlu0 %5446
      %5448 = vrot.lane.b32.xlu0 %v4994, 32
      %v5449 = vpop.permute.xlu0 %5448
      %5450 = vrot.lane.b32.xlu0 %v4995, 32
      %v5451 = vpop.permute.xlu0 %5450
      %5452 = vrot.lane.b32.xlu0 %v4996, 32
      %v5453 = vpop.permute.xlu0 %5452
      %5454 = vrot.lane.b32.xlu0 %v4997, 32
      %v5455 = vpop.permute.xlu0 %5454
      %5456 = vrot.lane.b32.xlu0 %v4998, 32
      %v5457 = vpop.permute.xlu0 %5456
      %5458 = vrot.lane.b32.xlu0 %v4999, 32
      %v5459 = vpop.permute.xlu0 %5458
      %5460 = vrot.lane.b32.xlu0 %v5000, 32
      %v5461 = vpop.permute.xlu0 %5460
      %5462 = vrot.lane.b32.xlu0 %v5001, 32
      %v5463 = vpop.permute.xlu0 %5462
      %5464 = vrot.lane.b32.xlu0 %v5002, 32
      %v5465 = vpop.permute.xlu0 %5464
      %5466 = vrot.lane.b32.xlu0 %v5003, 32
      %v5467 = vpop.permute.xlu0 %5466
      %5468 = vrot.lane.b32.xlu0 %v5004, 32
      %v5469 = vpop.permute.xlu0 %5468
      %5470 = vrot.lane.b32.xlu0 %v5005, 32
      %v5471 = vpop.permute.xlu0 %5470
      %5472 = vrot.lane.b32.xlu0 %v5006, 32
      %v5473 = vpop.permute.xlu0 %5472
      %5474 = vrot.lane.b32.xlu0 %v5007, 32
      %v5475 = vpop.permute.xlu0 %5474
      %5476 = vrot.lane.b32.xlu0 %v5008, 32
      %v5477 = vpop.permute.xlu0 %5476
      %5478 = vrot.lane.b32.xlu0 %v5009, 32
      %v5479 = vpop.permute.xlu0 %5478
      %5480 = vrot.lane.b32.xlu0 %v5010, 32
      %v5481 = vpop.permute.xlu0 %5480
      %5482 = vrot.lane.b32.xlu0 %v5011, 32
      %v5483 = vpop.permute.xlu0 %5482
      %5484 = vrot.lane.b32.xlu0 %v5012, 32
      %v5485 = vpop.permute.xlu0 %5484
      %5486 = vrot.lane.b32.xlu0 %v5013, 32
      %v5487 = vpop.permute.xlu0 %5486
      %5488 = vrot.lane.b32.xlu0 %v5014, 32
      %v5489 = vpop.permute.xlu0 %5488
      %5490 = vrot.lane.b32.xlu0 %v5015, 32
      %v5491 = vpop.permute.xlu0 %5490
      %5492 = vrot.lane.b32.xlu0 %v5016, 32
      %v5493 = vpop.permute.xlu0 %5492
      %5494 = vrot.lane.b32.xlu0 %v5017, 32
      %v5495 = vpop.permute.xlu0 %5494
      %5496 = vrot.lane.b32.xlu0 %v5018, 32
      %v5497 = vpop.permute.xlu0 %5496
      %5498 = vrot.lane.b32.xlu0 %v5019, 32
      %v5499 = vpop.permute.xlu0 %5498
      %v5532 = vmul.f32 %v5149, %v5437
      %v5533 = vmul.f32 %v5151, %v5439
      %v5534 = vmul.f32 %v5153, %v5441
      %v5535 = vmul.f32 %v5155, %v5443
      %v5536 = vmul.f32 %v5157, %v5445
      %v5537 = vmul.f32 %v5159, %v5447
      %v5538 = vmul.f32 %v5161, %v5449
      %v5539 = vmul.f32 %v5163, %v5451
      %v5540 = vmul.f32 %v5165, %v5453
      %v5541 = vmul.f32 %v5167, %v5455
      %v5542 = vmul.f32 %v5169, %v5457
      %v5543 = vmul.f32 %v5171, %v5459
      %v5544 = vmul.f32 %v5173, %v5461
      %v5545 = vmul.f32 %v5175, %v5463
      %v5546 = vmul.f32 %v5177, %v5465
      %v5547 = vmul.f32 %v5179, %v5467
      %v5548 = vmul.f32 %v5181, %v5469
      %v5549 = vmul.f32 %v5183, %v5471
      %v5550 = vmul.f32 %v5185, %v5473
      %v5551 = vmul.f32 %v5187, %v5475
      %v5552 = vmul.f32 %v5189, %v5477
      %v5553 = vmul.f32 %v5191, %v5479
      %v5554 = vmul.f32 %v5193, %v5481
      %v5555 = vmul.f32 %v5195, %v5483
      %v5556 = vmul.f32 %v5197, %v5485
      %v5557 = vmul.f32 %v5199, %v5487
      %v5558 = vmul.f32 %v5201, %v5489
      %v5559 = vmul.f32 %v5203, %v5491
      %v5560 = vmul.f32 %v5205, %v5493
      %v5561 = vmul.f32 %v5207, %v5495
      %v5562 = vmul.f32 %v5209, %v5497
      %v5563 = vmul.f32 %v5211, %v5499
      %5596 = vrot.lane.b32.xlu0 %v5532, 32
      %v5597 = vpop.permute.xlu0 %5596
      %5598 = vrot.lane.b32.xlu0 %v5533, 32
      %v5599 = vpop.permute.xlu0 %5598
      %5600 = vrot.lane.b32.xlu0 %v5534, 32
      %v5601 = vpop.permute.xlu0 %5600
      %5602 = vrot.lane.b32.xlu0 %v5535, 32
      %v5603 = vpop.permute.xlu0 %5602
      %5604 = vrot.lane.b32.xlu0 %v5536, 32
      %v5605 = vpop.permute.xlu0 %5604
      %5606 = vrot.lane.b32.xlu0 %v5537, 32
      %v5607 = vpop.permute.xlu0 %5606
      %5608 = vrot.lane.b32.xlu0 %v5538, 32
      %v5609 = vpop.permute.xlu0 %5608
      %5610 = vrot.lane.b32.xlu0 %v5539, 32
      %v5611 = vpop.permute.xlu0 %5610
      %5612 = vrot.lane.b32.xlu0 %v5540, 32
      %v5613 = vpop.permute.xlu0 %5612
      %5614 = vrot.lane.b32.xlu0 %v5541, 32
      %v5615 = vpop.permute.xlu0 %5614
      %5616 = vrot.lane.b32.xlu0 %v5542, 32
      %v5617 = vpop.permute.xlu0 %5616
      %5618 = vrot.lane.b32.xlu0 %v5543, 32
      %v5619 = vpop.permute.xlu0 %5618
      %5620 = vrot.lane.b32.xlu0 %v5544, 32
      %v5621 = vpop.permute.xlu0 %5620
      %5622 = vrot.lane.b32.xlu0 %v5545, 32
      %v5623 = vpop.permute.xlu0 %5622
      %5624 = vrot.lane.b32.xlu0 %v5546, 32
      %v5625 = vpop.permute.xlu0 %5624
      %5626 = vrot.lane.b32.xlu0 %v5547, 32
      %v5627 = vpop.permute.xlu0 %5626
      %5628 = vrot.lane.b32.xlu0 %v5548, 32
      %v5629 = vpop.permute.xlu0 %5628
      %5630 = vrot.lane.b32.xlu0 %v5549, 32
      %v5631 = vpop.permute.xlu0 %5630
      %5632 = vrot.lane.b32.xlu0 %v5550, 32
      %v5633 = vpop.permute.xlu0 %5632
      %5634 = vrot.lane.b32.xlu0 %v5551, 32
      %v5635 = vpop.permute.xlu0 %5634
      %5636 = vrot.lane.b32.xlu0 %v5552, 32
      %v5637 = vpop.permute.xlu0 %5636
      %5638 = vrot.lane.b32.xlu0 %v5553, 32
      %v5639 = vpop.permute.xlu0 %5638
      %5640 = vrot.lane.b32.xlu0 %v5554, 32
      %v5641 = vpop.permute.xlu0 %5640
      %5642 = vrot.lane.b32.xlu0 %v5555, 32
      %v5643 = vpop.permute.xlu0 %5642
      %5644 = vrot.lane.b32.xlu0 %v5556, 32
      %v5645 = vpop.permute.xlu0 %5644
      %5646 = vrot.lane.b32.xlu0 %v5557, 32
      %v5647 = vpop.permute.xlu0 %5646
      %5648 = vrot.lane.b32.xlu0 %v5558, 32
      %v5649 = vpop.permute.xlu0 %5648
      %5650 = vrot.lane.b32.xlu0 %v5559, 32
      %v5651 = vpop.permute.xlu0 %5650
      %5652 = vrot.lane.b32.xlu0 %v5560, 32
      %v5653 = vpop.permute.xlu0 %5652
      %5654 = vrot.lane.b32.xlu0 %v5561, 32
      %v5655 = vpop.permute.xlu0 %5654
      %5656 = vrot.lane.b32.xlu0 %v5562, 32
      %v5657 = vpop.permute.xlu0 %5656
      %5658 = vrot.lane.b32.xlu0 %v5563, 32
      %v5659 = vpop.permute.xlu0 %5658
      %v5692 = vadd.f32 %v5372, %v5597
      %v5693 = vadd.f32 %v5373, %v5599
      %v5694 = vadd.f32 %v5374, %v5601
      %v5695 = vadd.f32 %v5375, %v5603
      %v5696 = vadd.f32 %v5376, %v5605
      %v5697 = vadd.f32 %v5377, %v5607
      %v5698 = vadd.f32 %v5378, %v5609
      %v5699 = vadd.f32 %v5379, %v5611
      %v5700 = vadd.f32 %v5380, %v5613
      %v5701 = vadd.f32 %v5381, %v5615
      %v5702 = vadd.f32 %v5382, %v5617
      %v5703 = vadd.f32 %v5383, %v5619
      %v5704 = vadd.f32 %v5384, %v5621
      %v5705 = vadd.f32 %v5385, %v5623
      %v5706 = vadd.f32 %v5386, %v5625
      %v5707 = vadd.f32 %v5387, %v5627
      %v5708 = vadd.f32 %v5388, %v5629
      %v5709 = vadd.f32 %v5389, %v5631
      %v5710 = vadd.f32 %v5390, %v5633
      %v5711 = vadd.f32 %v5391, %v5635
      %v5712 = vadd.f32 %v5392, %v5637
      %v5713 = vadd.f32 %v5393, %v5639
      %v5714 = vadd.f32 %v5394, %v5641
      %v5715 = vadd.f32 %v5395, %v5643
      %v5716 = vadd.f32 %v5396, %v5645
      %v5717 = vadd.f32 %v5397, %v5647
      %v5718 = vadd.f32 %v5398, %v5649
      %v5719 = vadd.f32 %v5399, %v5651
      %v5720 = vadd.f32 %v5400, %v5653
      %v5721 = vadd.f32 %v5401, %v5655
      %v5722 = vadd.f32 %v5402, %v5657
      %v5723 = vadd.f32 %v5403, %v5659
      %v5724 = vtanh.pop %v5692
      %v5725 = vtanh.pop %v5693
      %v5726 = vtanh.pop %v5694
      %v5727 = vtanh.pop %v5695
      %v5728 = vtanh.pop %v5696
      %v5729 = vtanh.pop %v5697
      %v5730 = vtanh.pop %v5698
      %v5731 = vtanh.pop %v5699
      %v5732 = vtanh.pop %v5700
      %v5733 = vtanh.pop %v5701
      %v5734 = vtanh.pop %v5702
      %v5735 = vtanh.pop %v5703
      %v5736 = vtanh.pop %v5704
      %v5737 = vtanh.pop %v5705
      %v5738 = vtanh.pop %v5706
      %v5739 = vtanh.pop %v5707
      %v5740 = vtanh.pop %v5708
      %v5741 = vtanh.pop %v5709
      %v5742 = vtanh.pop %v5710
      %v5743 = vtanh.pop %v5711
      %v5744 = vtanh.pop %v5712
      %v5745 = vtanh.pop %v5713
      %v5746 = vtanh.pop %v5714
      %v5747 = vtanh.pop %v5715
      %v5748 = vtanh.pop %v5716
      %v5749 = vtanh.pop %v5717
      %v5750 = vtanh.pop %v5718
      %v5751 = vtanh.pop %v5719
      %v5752 = vtanh.pop %v5720
      %v5753 = vtanh.pop %v5721
      %v5754 = vtanh.pop %v5722
      %v5755 = vtanh.pop %v5723
      %5788 = vrot.lane.b32.xlu0 %v5724, 32
      %v5789 = vpop.permute.xlu0 %5788
      %5790 = vrot.lane.b32.xlu0 %v5725, 32
      %v5791 = vpop.permute.xlu0 %5790
      %5792 = vrot.lane.b32.xlu0 %v5726, 32
      %v5793 = vpop.permute.xlu0 %5792
      %5794 = vrot.lane.b32.xlu0 %v5727, 32
      %v5795 = vpop.permute.xlu0 %5794
      %5796 = vrot.lane.b32.xlu0 %v5728, 32
      %v5797 = vpop.permute.xlu0 %5796
      %5798 = vrot.lane.b32.xlu0 %v5729, 32
      %v5799 = vpop.permute.xlu0 %5798
      %5800 = vrot.lane.b32.xlu0 %v5730, 32
      %v5801 = vpop.permute.xlu0 %5800
      %5802 = vrot.lane.b32.xlu0 %v5731, 32
      %v5803 = vpop.permute.xlu0 %5802
      %5804 = vrot.lane.b32.xlu0 %v5732, 32
      %v5805 = vpop.permute.xlu0 %5804
      %5806 = vrot.lane.b32.xlu0 %v5733, 32
      %v5807 = vpop.permute.xlu0 %5806
      %5808 = vrot.lane.b32.xlu0 %v5734, 32
      %v5809 = vpop.permute.xlu0 %5808
      %5810 = vrot.lane.b32.xlu0 %v5735, 32
      %v5811 = vpop.permute.xlu0 %5810
      %5812 = vrot.lane.b32.xlu0 %v5736, 32
      %v5813 = vpop.permute.xlu0 %5812
      %5814 = vrot.lane.b32.xlu0 %v5737, 32
      %v5815 = vpop.permute.xlu0 %5814
      %5816 = vrot.lane.b32.xlu0 %v5738, 32
      %v5817 = vpop.permute.xlu0 %5816
      %5818 = vrot.lane.b32.xlu0 %v5739, 32
      %v5819 = vpop.permute.xlu0 %5818
      %5820 = vrot.lane.b32.xlu0 %v5740, 32
      %v5821 = vpop.permute.xlu0 %5820
      %5822 = vrot.lane.b32.xlu0 %v5741, 32
      %v5823 = vpop.permute.xlu0 %5822
      %5824 = vrot.lane.b32.xlu0 %v5742, 32
      %v5825 = vpop.permute.xlu0 %5824
      %5826 = vrot.lane.b32.xlu0 %v5743, 32
      %v5827 = vpop.permute.xlu0 %5826
      %5828 = vrot.lane.b32.xlu0 %v5744, 32
      %v5829 = vpop.permute.xlu0 %5828
      %5830 = vrot.lane.b32.xlu0 %v5745, 32
      %v5831 = vpop.permute.xlu0 %5830
      %5832 = vrot.lane.b32.xlu0 %v5746, 32
      %v5833 = vpop.permute.xlu0 %5832
      %5834 = vrot.lane.b32.xlu0 %v5747, 32
      %v5835 = vpop.permute.xlu0 %5834
      %5836 = vrot.lane.b32.xlu0 %v5748, 32
      %v5837 = vpop.permute.xlu0 %5836
      %5838 = vrot.lane.b32.xlu0 %v5749, 32
      %v5839 = vpop.permute.xlu0 %5838
      %5840 = vrot.lane.b32.xlu0 %v5750, 32
      %v5841 = vpop.permute.xlu0 %5840
      %5842 = vrot.lane.b32.xlu0 %v5751, 32
      %v5843 = vpop.permute.xlu0 %5842
      %5844 = vrot.lane.b32.xlu0 %v5752, 32
      %v5845 = vpop.permute.xlu0 %5844
      %5846 = vrot.lane.b32.xlu0 %v5753, 32
      %v5847 = vpop.permute.xlu0 %5846
      %5848 = vrot.lane.b32.xlu0 %v5754, 32
      %v5849 = vpop.permute.xlu0 %5848
      %5850 = vrot.lane.b32.xlu0 %v5755, 32
      %v5851 = vpop.permute.xlu0 %5850
      %v5884 = vmul.f32 %v5149, %v5789
      %v5885 = vmul.f32 %v5151, %v5791
      %v5886 = vmul.f32 %v5153, %v5793
      %v5887 = vmul.f32 %v5155, %v5795
      %v5888 = vmul.f32 %v5157, %v5797
      %v5889 = vmul.f32 %v5159, %v5799
      %v5890 = vmul.f32 %v5161, %v5801
      %v5891 = vmul.f32 %v5163, %v5803
      %v5892 = vmul.f32 %v5165, %v5805
      %v5893 = vmul.f32 %v5167, %v5807
      %v5894 = vmul.f32 %v5169, %v5809
      %v5895 = vmul.f32 %v5171, %v5811
      %v5896 = vmul.f32 %v5173, %v5813
      %v5897 = vmul.f32 %v5175, %v5815
      %v5898 = vmul.f32 %v5177, %v5817
      %v5899 = vmul.f32 %v5179, %v5819
      %v5900 = vmul.f32 %v5181, %v5821
      %v5901 = vmul.f32 %v5183, %v5823
      %v5902 = vmul.f32 %v5185, %v5825
      %v5903 = vmul.f32 %v5187, %v5827
      %v5904 = vmul.f32 %v5189, %v5829
      %v5905 = vmul.f32 %v5191, %v5831
      %v5906 = vmul.f32 %v5193, %v5833
      %v5907 = vmul.f32 %v5195, %v5835
      %v5908 = vmul.f32 %v5197, %v5837
      %v5909 = vmul.f32 %v5199, %v5839
      %v5910 = vmul.f32 %v5201, %v5841
      %v5911 = vmul.f32 %v5203, %v5843
      %v5912 = vmul.f32 %v5205, %v5845
      %v5913 = vmul.f32 %v5207, %v5847
      %v5914 = vmul.f32 %v5209, %v5849
      %v5915 = vmul.f32 %v5211, %v5851
      %5948 = vrot.lane.b32.xlu0 %v5884, 32
      %v5949 = vpop.permute.xlu0 %5948
      %5950 = vrot.lane.b32.xlu0 %v5885, 32
      %v5951 = vpop.permute.xlu0 %5950
      %5952 = vrot.lane.b32.xlu0 %v5886, 32
      %v5953 = vpop.permute.xlu0 %5952
      %5954 = vrot.lane.b32.xlu0 %v5887, 32
      %v5955 = vpop.permute.xlu0 %5954
      %5956 = vrot.lane.b32.xlu0 %v5888, 32
      %v5957 = vpop.permute.xlu0 %5956
      %5958 = vrot.lane.b32.xlu0 %v5889, 32
      %v5959 = vpop.permute.xlu0 %5958
      %5960 = vrot.lane.b32.xlu0 %v5890, 32
      %v5961 = vpop.permute.xlu0 %5960
      %5962 = vrot.lane.b32.xlu0 %v5891, 32
      %v5963 = vpop.permute.xlu0 %5962
      %5964 = vrot.lane.b32.xlu0 %v5892, 32
      %v5965 = vpop.permute.xlu0 %5964
      %5966 = vrot.lane.b32.xlu0 %v5893, 32
      %v5967 = vpop.permute.xlu0 %5966
      %5968 = vrot.lane.b32.xlu0 %v5894, 32
      %v5969 = vpop.permute.xlu0 %5968
      %5970 = vrot.lane.b32.xlu0 %v5895, 32
      %v5971 = vpop.permute.xlu0 %5970
      %5972 = vrot.lane.b32.xlu0 %v5896, 32
      %v5973 = vpop.permute.xlu0 %5972
      %5974 = vrot.lane.b32.xlu0 %v5897, 32
      %v5975 = vpop.permute.xlu0 %5974
      %5976 = vrot.lane.b32.xlu0 %v5898, 32
      %v5977 = vpop.permute.xlu0 %5976
      %5978 = vrot.lane.b32.xlu0 %v5899, 32
      %v5979 = vpop.permute.xlu0 %5978
      %5980 = vrot.lane.b32.xlu0 %v5900, 32
      %v5981 = vpop.permute.xlu0 %5980
      %5982 = vrot.lane.b32.xlu0 %v5901, 32
      %v5983 = vpop.permute.xlu0 %5982
      %5984 = vrot.lane.b32.xlu0 %v5902, 32
      %v5985 = vpop.permute.xlu0 %5984
      %5986 = vrot.lane.b32.xlu0 %v5903, 32
      %v5987 = vpop.permute.xlu0 %5986
      %5988 = vrot.lane.b32.xlu0 %v5904, 32
      %v5989 = vpop.permute.xlu0 %5988
      %5990 = vrot.lane.b32.xlu0 %v5905, 32
      %v5991 = vpop.permute.xlu0 %5990
      %5992 = vrot.lane.b32.xlu0 %v5906, 32
      %v5993 = vpop.permute.xlu0 %5992
      %5994 = vrot.lane.b32.xlu0 %v5907, 32
      %v5995 = vpop.permute.xlu0 %5994
      %5996 = vrot.lane.b32.xlu0 %v5908, 32
      %v5997 = vpop.permute.xlu0 %5996
      %5998 = vrot.lane.b32.xlu0 %v5909, 32
      %v5999 = vpop.permute.xlu0 %5998
      %6000 = vrot.lane.b32.xlu0 %v5910, 32
      %v6001 = vpop.permute.xlu0 %6000
      %6002 = vrot.lane.b32.xlu0 %v5911, 32
      %v6003 = vpop.permute.xlu0 %6002
      %6004 = vrot.lane.b32.xlu0 %v5912, 32
      %v6005 = vpop.permute.xlu0 %6004
      %6006 = vrot.lane.b32.xlu0 %v5913, 32
      %v6007 = vpop.permute.xlu0 %6006
      %6008 = vrot.lane.b32.xlu0 %v5914, 32
      %v6009 = vpop.permute.xlu0 %6008
      %6010 = vrot.lane.b32.xlu0 %v5915, 32
      %v6011 = vpop.permute.xlu0 %6010
      %6076 = vrot.lane.b32.xlu0 %v5692, 96
      %v6077 = vpop.permute.xlu0 %6076
      %6078 = vrot.lane.b32.xlu0 %v5693, 96
      %v6079 = vpop.permute.xlu0 %6078
      %6080 = vrot.lane.b32.xlu0 %v5694, 96
      %v6081 = vpop.permute.xlu0 %6080
      %6082 = vrot.lane.b32.xlu0 %v5695, 96
      %v6083 = vpop.permute.xlu0 %6082
      %6084 = vrot.lane.b32.xlu0 %v5696, 96
      %v6085 = vpop.permute.xlu0 %6084
      %6086 = vrot.lane.b32.xlu0 %v5697, 96
      %v6087 = vpop.permute.xlu0 %6086
      %6088 = vrot.lane.b32.xlu0 %v5698, 96
      %v6089 = vpop.permute.xlu0 %6088
      %6090 = vrot.lane.b32.xlu0 %v5699, 96
      %v6091 = vpop.permute.xlu0 %6090
      %6092 = vrot.lane.b32.xlu0 %v5700, 96
      %v6093 = vpop.permute.xlu0 %6092
      %6094 = vrot.lane.b32.xlu0 %v5701, 96
      %v6095 = vpop.permute.xlu0 %6094
      %6096 = vrot.lane.b32.xlu0 %v5702, 96
      %v6097 = vpop.permute.xlu0 %6096
      %6098 = vrot.lane.b32.xlu0 %v5703, 96
      %v6099 = vpop.permute.xlu0 %6098
      %6100 = vrot.lane.b32.xlu0 %v5704, 96
      %v6101 = vpop.permute.xlu0 %6100
      %6102 = vrot.lane.b32.xlu0 %v5705, 96
      %v6103 = vpop.permute.xlu0 %6102
      %6104 = vrot.lane.b32.xlu0 %v5706, 96
      %v6105 = vpop.permute.xlu0 %6104
      %6106 = vrot.lane.b32.xlu0 %v5707, 96
      %v6107 = vpop.permute.xlu0 %6106
      %6108 = vrot.lane.b32.xlu0 %v5708, 96
      %v6109 = vpop.permute.xlu0 %6108
      %6110 = vrot.lane.b32.xlu0 %v5709, 96
      %v6111 = vpop.permute.xlu0 %6110
      %6112 = vrot.lane.b32.xlu0 %v5710, 96
      %v6113 = vpop.permute.xlu0 %6112
      %6114 = vrot.lane.b32.xlu0 %v5711, 96
      %v6115 = vpop.permute.xlu0 %6114
      %6116 = vrot.lane.b32.xlu0 %v5712, 96
      %v6117 = vpop.permute.xlu0 %6116
      %6118 = vrot.lane.b32.xlu0 %v5713, 96
      %v6119 = vpop.permute.xlu0 %6118
      %6120 = vrot.lane.b32.xlu0 %v5714, 96
      %v6121 = vpop.permute.xlu0 %6120
      %6122 = vrot.lane.b32.xlu0 %v5715, 96
      %v6123 = vpop.permute.xlu0 %6122
      %6124 = vrot.lane.b32.xlu0 %v5716, 96
      %v6125 = vpop.permute.xlu0 %6124
      %6126 = vrot.lane.b32.xlu0 %v5717, 96
      %v6127 = vpop.permute.xlu0 %6126
      %6128 = vrot.lane.b32.xlu0 %v5718, 96
      %v6129 = vpop.permute.xlu0 %6128
      %6130 = vrot.lane.b32.xlu0 %v5719, 96
      %v6131 = vpop.permute.xlu0 %6130
      %6132 = vrot.lane.b32.xlu0 %v5720, 96
      %v6133 = vpop.permute.xlu0 %6132
      %6134 = vrot.lane.b32.xlu0 %v5721, 96
      %v6135 = vpop.permute.xlu0 %6134
      %6136 = vrot.lane.b32.xlu0 %v5722, 96
      %v6137 = vpop.permute.xlu0 %6136
      %6138 = vrot.lane.b32.xlu0 %v5723, 96
      %v6139 = vpop.permute.xlu0 %6138
      %vm6172 = vcmask 261120
      %v6173 = vsel %vm6172, %v5949, %v6077
      %v6174 = vsel %vm6172, %v5951, %v6079
      %v6175 = vsel %vm6172, %v5953, %v6081
      %v6176 = vsel %vm6172, %v5955, %v6083
      %v6177 = vsel %vm6172, %v5957, %v6085
      %v6178 = vsel %vm6172, %v5959, %v6087
      %v6179 = vsel %vm6172, %v5961, %v6089
      %v6180 = vsel %vm6172, %v5963, %v6091
      %v6181 = vsel %vm6172, %v5965, %v6093
      %v6182 = vsel %vm6172, %v5967, %v6095
      %v6183 = vsel %vm6172, %v5969, %v6097
      %v6184 = vsel %vm6172, %v5971, %v6099
      %v6185 = vsel %vm6172, %v5973, %v6101
      %v6186 = vsel %vm6172, %v5975, %v6103
      %v6187 = vsel %vm6172, %v5977, %v6105
      %v6188 = vsel %vm6172, %v5979, %v6107
      %v6189 = vsel %vm6172, %v5981, %v6109
      %v6190 = vsel %vm6172, %v5983, %v6111
      %v6191 = vsel %vm6172, %v5985, %v6113
      %v6192 = vsel %vm6172, %v5987, %v6115
      %v6193 = vsel %vm6172, %v5989, %v6117
      %v6194 = vsel %vm6172, %v5991, %v6119
      %v6195 = vsel %vm6172, %v5993, %v6121
      %v6196 = vsel %vm6172, %v5995, %v6123
      %v6197 = vsel %vm6172, %v5997, %v6125
      %v6198 = vsel %vm6172, %v5999, %v6127
      %v6199 = vsel %vm6172, %v6001, %v6129
      %v6200 = vsel %vm6172, %v6003, %v6131
      %v6201 = vsel %vm6172, %v6005, %v6133
      %v6202 = vsel %vm6172, %v6007, %v6135
      %v6203 = vsel %vm6172, %v6009, %v6137
      %v6204 = vsel %vm6172, %v6011, %v6139
      %vm6205 = vcmask 523264
      %6206 = vst.msk [vmem:[%s217] sm:$0xff] %vm6205, %v6173
      %6207 = vst.msk [vmem:[%s217 + $0x8] sm:$0xff] %vm6205, %v6174
      %6208 = vst.msk [vmem:[%s217 + $0x10] sm:$0xff] %vm6205, %v6175
      %6209 = vst.msk [vmem:[%s217 + $0x18] sm:$0xff] %vm6205, %v6176
      %6210 = vst.msk [vmem:[%s217 + $0x20] sm:$0xff] %vm6205, %v6177
      %6211 = vst.msk [vmem:[%s217 + $0x28] sm:$0xff] %vm6205, %v6178
      %6212 = vst.msk [vmem:[%s217 + $0x30] sm:$0xff] %vm6205, %v6179
      %6213 = vst.msk [vmem:[%s217 + $0x38] sm:$0xff] %vm6205, %v6180
      %6214 = vst.msk [vmem:[%s217 + $0x40] sm:$0xff] %vm6205, %v6181
      %6215 = vst.msk [vmem:[%s217 + $0x48] sm:$0xff] %vm6205, %v6182
      %6216 = vst.msk [vmem:[%s217 + $0x50] sm:$0xff] %vm6205, %v6183
      %6217 = vst.msk [vmem:[%s217 + $0x58] sm:$0xff] %vm6205, %v6184
      %6218 = vst.msk [vmem:[%s217 + $0x60] sm:$0xff] %vm6205, %v6185
      %6219 = vst.msk [vmem:[%s217 + $0x68] sm:$0xff] %vm6205, %v6186
      %6220 = vst.msk [vmem:[%s217 + $0x70] sm:$0xff] %vm6205, %v6187
      %6221 = vst.msk [vmem:[%s217 + $0x78] sm:$0xff] %vm6205, %v6188
      %6222 = vst.msk [vmem:[%s217 + $0x80] sm:$0xff] %vm6205, %v6189
      %6223 = vst.msk [vmem:[%s217 + $0x88] sm:$0xff] %vm6205, %v6190
      %6224 = vst.msk [vmem:[%s217 + $0x90] sm:$0xff] %vm6205, %v6191
      %6225 = vst.msk [vmem:[%s217 + $0x98] sm:$0xff] %vm6205, %v6192
      %6226 = vst.msk [vmem:[%s217 + $0xa0] sm:$0xff] %vm6205, %v6193
      %6227 = vst.msk [vmem:[%s217 + $0xa8] sm:$0xff] %vm6205, %v6194
      %6228 = vst.msk [vmem:[%s217 + $0xb0] sm:$0xff] %vm6205, %v6195
      %6229 = vst.msk [vmem:[%s217 + $0xb8] sm:$0xff] %vm6205, %v6196
      %6230 = vst.msk [vmem:[%s217 + $0xc0] sm:$0xff] %vm6205, %v6197
      %6231 = vst.msk [vmem:[%s217 + $0xc8] sm:$0xff] %vm6205, %v6198
      %6232 = vst.msk [vmem:[%s217 + $0xd0] sm:$0xff] %vm6205, %v6199
      %6233 = vst.msk [vmem:[%s217 + $0xd8] sm:$0xff] %vm6205, %v6200
      %6234 = vst.msk [vmem:[%s217 + $0xe0] sm:$0xff] %vm6205, %v6201
      %6235 = vst.msk [vmem:[%s217 + $0xe8] sm:$0xff] %vm6205, %v6202
      %6236 = vst.msk [vmem:[%s217 + $0xf0] sm:$0xff] %vm6205, %v6203
      %6237 = vst.msk [vmem:[%s217 + $0xf8] sm:$0xff] %vm6205, %v6204
      %p6238 = scmp.lt.s32.totalorder %s15, 1
      %s6239 = scalar_select %p6238, %s15, 1
      %s6240 = smul.addr %s6239, 32
      %s6241 = smul.addr %s6240, 8
      %s6242 = scalar_lea.vmem %s4, %s6241
      // Predicated region
      $region37: #{convlstm_cell_forward.1} parent=35 // pred_check
        %p6243 = pneg %p127
      $region38: #{convlstm_cell_forward.1} parent=35 // pred_check_branch
        %6245 = sbr.rel (%p6243) target = $region40
      $region39: #{convlstm_cell_forward.1} parent=35 // pred_region
        _
      $region40: #{convlstm_cell_forward.1} parent=35 // pred_fallthru
        _
    $region36: #{convlstm_cell_forward.1} parent=5 // pred_fallthru
      _
    %p6246 = scmp.le.s32.totalorder 2, %s10
    // Predicated region
    $region41: #{convlstm_cell_forward.1} parent=5 // pred_check
      %p6247 = pneg %p6246
    $region42: #{convlstm_cell_forward.1} parent=5 // pred_check_branch
      %6249 = sbr.rel (%p6247) target = $region44
    $region43: #{convlstm_cell_forward.1} parent=5 // pred_region
      %s6250 = ssub.s32 %s10, 2
      // Predicated region
      $region45: #{convlstm_cell_forward.1} parent=43 // pred_check
        %p6251 = pneg %p133
      $region46: #{convlstm_cell_forward.1} parent=43 // pred_check_branch
        %6253 = sbr.rel (%p6251) target = $region48
      $region47: #{convlstm_cell_forward.1} parent=43 // pred_region
        %p6254 = scmp.lt.s32.totalorder %s16, 1
        %s6255 = scalar_select %p6254, %s16, 1
        %s6256 = smul.addr %s6255, 32
        %s6257 = smul.addr %s6256, 8
        %s6258 = scalar_lea.vmem %s4, %s6257
      $region48: #{convlstm_cell_forward.1} parent=43 // pred_fallthru
        _
    $region44: #{convlstm_cell_forward.1} parent=5 // pred_fallthru
      _
  $region6: #{convlstm_cell_forward.1} parent=0 // loop_footer
    %s14 = sadd.s32 1, %s10
  $region7: #{convlstm_cell_forward.1} parent=0 // loop_footer_branch
    %9 = sbr.rel target = $region3
  $region8: #{convlstm_cell_forward.1} parent=0 // loop_exit
    _

</llo_original>
